<compile_context>
chip_gen: v7x
topology: tpu7x:2x2x1
jax: 0.10.0
libtpu: 0.0.40
codegen_flags: <defaults>
</compile_context>

<pallas_src>
import jax
import jax.numpy as jnp
import numpy as np
from jax.experimental import pallas as pl
from jax.experimental.pallas import tpu as pltpu


# ----------------------------------------------------------------------------
# Kernel: per grid step = (batch element i, output-row tile t)
# ----------------------------------------------------------------------------
def decoder_kernel(c_ref, rwk_ref, xl_ref, w2_ref, w3u_ref, w3v_ref, w3b_ref,
                   w34_ref, b3a_ref, b3b_ref, b34_ref, seg_ref, x_ref):
    md = w2_ref.dtype  # MXU operand dtype (bf16 in production)

    # Width half of the bilinear upsample for this row tile: one MXU matmul.
    # c rows are (out_row, in_col) of the already height-interpolated conv1
    # branch; rwk = kron(I_row_tile, Rw).  Result is (row_tile*w, 256) directly
    # in output-pixel order, so no relayout is needed downstream.
    u = jnp.dot(rwk_ref[...], c_ref[0], preferred_element_type=jnp.float32)

    # conv2 (1x1, BN folded into the weight; its bias is folded into b3a).
    v = jnp.dot(xl_ref[0], w2_ref[...], preferred_element_type=jnp.float32)

    # conv3[0] over the never-materialized concat([u, v]): the 304-deep
    # contraction is split into a 256-deep and a 48-deep matmul and summed.
    t3 = (jnp.dot(u.astype(md), w3u_ref[...], preferred_element_type=jnp.float32)
          + jnp.dot(v.astype(md), w3v_ref[...], preferred_element_type=jnp.float32)
          + b3a_ref[...])

    t3m = t3.astype(md)
    # conv3[1] (+BN) -> x ; fused conv3[1]+conv4 -> seg.  Both depend only on
    # t3, so they are independent MXU issues (better result-path overlap).
    x3 = jnp.dot(t3m, w3b_ref[...], preferred_element_type=jnp.float32) + b3b_ref[...]
    sg = jnp.dot(t3m, w34_ref[...], preferred_element_type=jnp.float32) + b34_ref[...]

    x_ref[0] = x3.astype(x_ref.dtype)
    seg_ref[0] = sg.astype(seg_ref.dtype)       # 128 lanes -> unmasked stores


# ----------------------------------------------------------------------------
# Host-side helpers
# ----------------------------------------------------------------------------
def bilinear_matrix(out_size, in_size):
    """1-D interpolation matrix matching F.interpolate(mode='bilinear',
    align_corners=True) along one axis.  Rows sum to 1."""
    m = np.zeros((out_size, in_size), np.float32)
    if out_size == 1 or in_size == 1:
        m[:, 0] = 1.0
        return m
    scale = (in_size - 1) / (out_size - 1)
    for i in range(out_size):
        src = i * scale
        i0 = min(int(np.floor(src)), in_size - 1)
        i1 = min(i0 + 1, in_size - 1)
        frac = src - i0
        m[i, i0] += 1.0 - frac
        m[i, i1] += frac
    return m


def fold_bn(gamma, beta, mean, var, eps=1e-5):
    scale = gamma / jnp.sqrt(var + eps)
    return scale, beta - mean * scale


def bn_params(key, c):
    k1, k2, k3, k4 = jax.random.split(key, 4)
    gamma = 1.0 + 0.1 * jax.random.normal(k1, (c,), jnp.float32)
    beta = 0.1 * jax.random.normal(k2, (c,), jnp.float32)
    mean = 0.1 * jax.random.normal(k3, (c,), jnp.float32)
    var = 1.0 + 0.1 * jax.random.uniform(k4, (c,), jnp.float32)
    return gamma, beta, mean, var


def prepare_decoder_params(w1, bn1, w2, bn2, w3a, bn3a, w3b, bn3b, w4, b4,
                           *, op_dtype=jnp.bfloat16, class_pad=128):
    """Fold BN (inference), split the concat weight, pad classes to 128,
    fuse conv3[1]+conv4, and fold conv1/conv2 biases into conv3[0]'s bias."""
    s1, bb1 = fold_bn(*bn1)
    s2, bb2 = fold_bn(*bn2)
    s3a, bb3a = fold_bn(*bn3a)
    s3b, bb3b = fold_bn(*bn3b)

    w1f = w1 * s1[None, :]
    w2f = w2 * s2[None, :]
    w3af = w3a * s3a[None, :]
    w3bf = w3b * s3b[None, :]

    p1 = w1.shape[1]                         # 256
    w3u, w3v = w3af[:p1], w3af[p1:]

    k = w4.shape[1]
    kp = ((k + class_pad - 1) // class_pad) * class_pad
    w4p = jnp.zeros((w4.shape[0], kp), w4.dtype).at[:, :k].set(w4)
    b4p = jnp.zeros((kp,), b4.dtype).at[:k].set(b4)

    # Fuse conv3[1](+BN) with conv4:  seg = t3 @ (W3b'@W4p) + (b3b@W4p + b4p)
    w34 = w3bf @ w4p
    b34 = bb3b @ w4p + b4p

    # Bilinear(align_corners=True) rows sum to 1, so the conv1/conv2 BN biases
    # pass through the upsample/concat and fold into conv3[0]'s bias.
    b3ac = bb1 @ w3u + bb2 @ w3v + bb3a

    return dict(
        num_classes=k,
        w1=w1f,                                            # used wrapper-side (f32)
        w2=w2f.astype(op_dtype),
        w3u=w3u.astype(op_dtype), w3v=w3v.astype(op_dtype),
        w3b=w3bf.astype(op_dtype), w34=w34.astype(op_dtype),
        b3a=b3ac.reshape(1, -1).astype(jnp.float32),
        b3b=bb3b.reshape(1, -1).astype(jnp.float32),
        b34=b34.reshape(1, -1).astype(jnp.float32),
    )


# ----------------------------------------------------------------------------
# Wrapper
# ----------------------------------------------------------------------------
def decoder_forward(xt, xl, P, *, row_tile=None):
    """xt: (n, ht, wt, in_plane1) NHWC low-res branch; xl: (n, h, w, in_plane2)."""
    n, ht, wt, _ = xt.shape
    n2, h, w, c2 = xl.shape
    assert n == n2
    co = P['w3u'].shape[1]      # 256
    kp = P['w34'].shape[1]      # padded class count (128)
    k = P['num_classes']
    md = P['w2'].dtype

    if row_tile is None:        # aim for M = row_tile*w >= 256 and row_tile | h
        divs = [d for d in range(1, h + 1) if h % d == 0]
        cand = [d for d in divs if d * w >= 256]
        row_tile = cand[0] if cand else h
    assert h % row_tile == 0, "output height must be divisible by row_tile"
    n_tiles = h // row_tile
    m = row_tile * w            # output pixels per tile (MXU M)
    kw = row_tile * wt          # contraction depth of the in-kernel width interp

    # ---- host-side (XLA) prep on the tiny low-resolution tensor --------------
    # conv1 (1x1, BN folded, bias deferred) + HEIGHT half of the bilinear interp.
    rh = jnp.asarray(bilinear_matrix(h, ht))                    # (h, ht)
    rw = bilinear_matrix(w, wt)                                 # (w, wt) numpy
    a1 = jnp.einsum('npqc,cd->npqd', xt, P['w1'])               # (n, ht, wt, 256)
    c = jnp.einsum('ip,npqd->niqd', rh, a1)                     # (n, h, wt, 256)
    c = c.reshape(n, h * wt, co).astype(md)                     # rows = (out_row, in_col)

    # WIDTH half of the interp as a small constant matmul operand (per tile).
    # kron(I_row_tile, Rw) redoes a factor-row_tile of ideal separable work but
    # needs no in-kernel relayouts and is a tiny resident constant.
    rwk = jnp.asarray(np.kron(np.eye(row_tile, dtype=np.float32), rw)).astype(md)

    xl_f = xl.reshape(n, h * w, c2).astype(md)

    const = lambda a: pl.BlockSpec(a.shape, lambda i, t: (0,) * a.ndim)

    grid_spec = pltpu.PrefetchScalarGridSpec(
        num_scalar_prefetch=0,
        grid=(n, n_tiles),
        in_specs=[
            pl.BlockSpec((1, kw, co), lambda i, t: (i, t, 0)),   # conv1 branch (height-interp'd)
            const(rwk),                                          # width-interp matrix
            pl.BlockSpec((1, m, c2), lambda i, t: (i, t, 0)),    # skip branch xl
            const(P['w2']), const(P['w3u']), const(P['w3v']),
            const(P['w3b']), const(P['w34']),
            const(P['b3a']), const(P['b3b']), const(P['b34']),
        ],
        out_specs=[
            pl.BlockSpec((1, m, kp), lambda i, t: (i, t, 0)),    # seg (padded classes)
            pl.BlockSpec((1, m, co), lambda i, t: (i, t, 0)),    # x  (conv3 output)
        ],
    )

    # VMEM budget derived from actual block sizes (double-buffered) + slack.
    blocks = [((1, kw, co), md), (rwk.shape, md), ((1, m, c2), md),
              (P['w2'].shape, md), (P['w3u'].shape, md), (P['w3v'].shape, md),
              (P['w3b'].shape, md), (P['w34'].shape, md),
              (P['b3a'].shape, jnp.float32), (P['b3b'].shape, jnp.float32),
              (P['b34'].shape, jnp.float32),
              ((1, m, kp), jnp.float32), ((1, m, co), jnp.float32)]
    est = sum(2 * int(np.prod(s)) * jnp.dtype(d).itemsize for s, d in blocks)
    vmem_limit = int(min(100 * 2**20, max(32 * 2**20, 3 * est)))

    seg_p, x_p = pl.pallas_call(
        decoder_kernel,
        out_shape=(jax.ShapeDtypeStruct((n, h * w, kp), jnp.float32),
                   jax.ShapeDtypeStruct((n, h * w, co), jnp.float32)),
        grid_spec=grid_spec,
        compiler_params=pltpu.CompilerParams(
            dimension_semantics=("parallel", "parallel"),
            vmem_limit_bytes=vmem_limit),
    )(c, rwk, xl_f, P['w2'], P['w3u'], P['w3v'], P['w3b'], P['w34'],
      P['b3a'], P['b3b'], P['b34'])

    seg = seg_p[:, :, :k].reshape(n, h, w, k)
    x = x_p.reshape(n, h, w, co)
    return seg, x


# ----------------------------------------------------------------------------
# Plain-JAX reference (independent: real concat, unfused convs, f32 HIGHEST)
# ----------------------------------------------------------------------------
def decoder_reference(xt, xl, rh, rw, w1f, b1, w2f, b2, w3af, b3a, w3bf, b3b, w4, b4):
    hp = jax.lax.Precision.HIGHEST
    a = jnp.einsum('npqc,cd->npqd', xt, w1f, precision=hp) + b1
    u = jnp.einsum('ip,npqd->niqd', rh, a, precision=hp)          # height interp
    u = jnp.einsum('jq,niqd->nijd', rw, u, precision=hp)          # width interp
    v = jnp.einsum('nhwc,cd->nhwd', xl, w2f, precision=hp) + b2
    cat = jnp.concatenate([u, v], axis=-1)
    t3 = jnp.einsum('nhwc,cd->nhwd', cat, w3af, precision=hp) + b3a
    x3 = jnp.einsum('nhwc,cd->nhwd', t3, w3bf, precision=hp) + b3b
    seg = jnp.einsum('nhwc,cd->nhwd', x3, w4, precision=hp) + b4
    return seg, x3


# ----------------------------------------------------------------------------
# Demo / correctness check
# ----------------------------------------------------------------------------
if __name__ == "__main__":
    N = 2
    in_plane1, in_plane2, num_classes = 32, 16, 8
    ht, wt = 16, 16            # low-res (xt) spatial size
    h, w = 32, 32              # high-res (xl) spatial size
    ROW_TILE = 8               # 8 * 32 = 256 output pixels per tile (fills 256-wide MXU)

    key = jax.random.PRNGKey(0)
    ks = jax.random.split(key, 12)

    # NHWC activations (the PyTorch module is NCHW; layout handled by the caller).
    xt = jax.random.normal(ks[0], (N, ht, wt, in_plane1), jnp.float32)
    xl = jax.random.normal(ks[1], (N, h, w, in_plane2), jnp.float32)

    # 1x1 conv weights as (Cin, Cout) matrices (bias=False except conv4).
    w1 = 0.1 * jax.random.normal(ks[2], (in_plane1, 256), jnp.float32)
    w2 = 0.1 * jax.random.normal(ks[3], (in_plane2, 48), jnp.float32)
    w3a = 0.1 * jax.random.normal(ks[4], (304, 256), jnp.float32)
    w3b = 0.1 * jax.random.normal(ks[5], (256, 256), jnp.float32)
    w4 = 0.1 * jax.random.normal(ks[6], (256, num_classes), jnp.float32)
    b4 = 0.1 * jax.random.normal(ks[7], (num_classes,), jnp.float32)

    # Inference-mode BatchNorm parameters (the module has Conv+BN only, no ReLU).
    bn1 = bn_params(ks[8], 256)
    bn2 = bn_params(ks[9], 48)
    bn3a = bn_params(ks[10], 256)
    bn3b = bn_params(ks[11], 256)

    P = prepare_decoder_params(w1, bn1, w2, bn2, w3a, bn3a, w3b, bn3b, w4, b4,
                               op_dtype=jnp.bfloat16)

    seg, xfeat = decoder_forward(xt, xl, P, row_tile=ROW_TILE)
    seg = jax.block_until_ready(seg)
    xfeat = jax.block_until_ready(xfeat)

    # Reference: folded-BN weights but otherwise the straightforward graph.
    s1, c1b = fold_bn(*bn1)
    s2, c2b = fold_bn(*bn2)
    s3a, c3ab = fold_bn(*bn3a)
    s3b, c3bb = fold_bn(*bn3b)
    rh = jnp.asarray(bilinear_matrix(h, ht))
    rw = jnp.asarray(bilinear_matrix(w, wt))
    seg_ref, x_ref = decoder_reference(
        xt, xl, rh, rw,
        w1 * s1[None, :], c1b, w2 * s2[None, :], c2b,
        w3a * s3a[None, :], c3ab, w3b * s3b[None, :], c3bb, w4, b4)
    seg_ref = jax.block_until_ready(seg_ref)
    x_ref = jax.block_until_ready(x_ref)

    # bf16 MXU operands, f32 accumulation -> loose-but-meaningful tolerance.
    np.testing.assert_allclose(np.asarray(seg), np.asarray(seg_ref),
                               rtol=0.05, atol=0.05)
    np.testing.assert_allclose(np.asarray(xfeat), np.asarray(x_ref),
                               rtol=0.05, atol=0.05)

    print("KERNEL_OK")
</pallas_src>

<mosaic_0001>
module attributes {stable_mosaic.version = 11 : i64} {
  func.func @decoder_kernel(%arg0: i32, %arg1: i32, %arg2: memref<1x128x256xbf16, #tpu.memory_space<vmem>>, %arg3: memref<256x128xbf16, #tpu.memory_space<vmem>>, %arg4: memref<1x256x16xbf16, #tpu.memory_space<vmem>>, %arg5: memref<16x48xbf16, #tpu.memory_space<vmem>>, %arg6: memref<256x256xbf16, #tpu.memory_space<vmem>>, %arg7: memref<48x256xbf16, #tpu.memory_space<vmem>>, %arg8: memref<256x256xbf16, #tpu.memory_space<vmem>>, %arg9: memref<256x128xbf16, #tpu.memory_space<vmem>>, %arg10: memref<1x256xf32, #tpu.memory_space<vmem>>, %arg11: memref<1x256xf32, #tpu.memory_space<vmem>>, %arg12: memref<1x128xf32, #tpu.memory_space<vmem>>, %arg13: memref<1x256x128xf32, #tpu.memory_space<vmem>>, %arg14: memref<1x256x256xf32, #tpu.memory_space<vmem>>) attributes {dimension_semantics = [#tpu.dimension_semantics<parallel>, #tpu.dimension_semantics<parallel>], iteration_bounds = array<i64: 2, 4>, scalar_prefetch = 0 : i64, scratch_operands = 0 : i64, tpu.core_type = #tpu.core_type<tc>, window_params = [{transform_indices = @transform_0, window_bounds = array<i64: 1, 128, 256>}, {pipeline_mode = #tpu.pipeline_mode<synchronous>, transform_indices = @transform_1, window_bounds = array<i64: 256, 128>}, {transform_indices = @transform_2, window_bounds = array<i64: 1, 256, 16>}, {pipeline_mode = #tpu.pipeline_mode<synchronous>, transform_indices = @transform_3, window_bounds = array<i64: 16, 48>}, {pipeline_mode = #tpu.pipeline_mode<synchronous>, transform_indices = @transform_4, window_bounds = array<i64: 256, 256>}, {pipeline_mode = #tpu.pipeline_mode<synchronous>, transform_indices = @transform_5, window_bounds = array<i64: 48, 256>}, {pipeline_mode = #tpu.pipeline_mode<synchronous>, transform_indices = @transform_6, window_bounds = array<i64: 256, 256>}, {pipeline_mode = #tpu.pipeline_mode<synchronous>, transform_indices = @transform_7, window_bounds = array<i64: 256, 128>}, {pipeline_mode = #tpu.pipeline_mode<synchronous>, transform_indices = @transform_8, window_bounds = array<i64: 1, 256>}, {pipeline_mode = #tpu.pipeline_mode<synchronous>, transform_indices = @transform_9, window_bounds = array<i64: 1, 256>}, {pipeline_mode = #tpu.pipeline_mode<synchronous>, transform_indices = @transform_10, window_bounds = array<i64: 1, 128>}, {transform_indices = @transform_11, window_bounds = array<i64: 1, 256, 128>}, {transform_indices = @transform_12, window_bounds = array<i64: 1, 256, 256>}]} {
    %c0 = arith.constant 0 : index
    %c0_0 = arith.constant 0 : index
    %0 = vector.load %arg3[%c0, %c0_0] : memref<256x128xbf16, #tpu.memory_space<vmem>>, vector<256x128xbf16>
    %c0_1 = arith.constant 0 : index
    %c0_2 = arith.constant 0 : index
    %c0_3 = arith.constant 0 : index
    %1 = vector.load %arg2[%c0_1, %c0_2, %c0_3] : memref<1x128x256xbf16, #tpu.memory_space<vmem>>, vector<1x128x256xbf16>
    %2 = vector.shape_cast %1 : vector<1x128x256xbf16> to vector<128x256xbf16>
    %cst = arith.constant dense<0.000000e+00> : vector<256x256xf32>
    %3 = tpu.matmul %0, %2, %cst {dimension_numbers = #tpu.dot_dimension_numbers<[1], [0], [0], [1], [0, 0, 1, 1], [], []>} : vector<256x128xbf16>, vector<128x256xbf16>, vector<256x256xf32> -> vector<256x256xf32>
    %c0_4 = arith.constant 0 : index
    %c0_5 = arith.constant 0 : index
    %c0_6 = arith.constant 0 : index
    %4 = vector.load %arg4[%c0_4, %c0_5, %c0_6] : memref<1x256x16xbf16, #tpu.memory_space<vmem>>, vector<1x256x16xbf16>
    %5 = vector.shape_cast %4 : vector<1x256x16xbf16> to vector<256x16xbf16>
    %c0_7 = arith.constant 0 : index
    %c0_8 = arith.constant 0 : index
    %6 = vector.load %arg5[%c0_7, %c0_8] : memref<16x48xbf16, #tpu.memory_space<vmem>>, vector<16x48xbf16>
    %cst_9 = arith.constant dense<0.000000e+00> : vector<256x48xf32>
    %7 = tpu.matmul %5, %6, %cst_9 {dimension_numbers = #tpu.dot_dimension_numbers<[1], [0], [0], [1], [0, 0, 1, 1], [], []>} : vector<256x16xbf16>, vector<16x48xbf16>, vector<256x48xf32> -> vector<256x48xf32>
    %8 = arith.truncf %3 : vector<256x256xf32> to vector<256x256xbf16>
    %c0_10 = arith.constant 0 : index
    %c0_11 = arith.constant 0 : index
    %9 = vector.load %arg6[%c0_10, %c0_11] : memref<256x256xbf16, #tpu.memory_space<vmem>>, vector<256x256xbf16>
    %cst_12 = arith.constant dense<0.000000e+00> : vector<256x256xf32>
    %10 = tpu.matmul %8, %9, %cst_12 {dimension_numbers = #tpu.dot_dimension_numbers<[1], [0], [0], [1], [0, 0, 1, 1], [], []>} : vector<256x256xbf16>, vector<256x256xbf16>, vector<256x256xf32> -> vector<256x256xf32>
    %11 = arith.truncf %7 : vector<256x48xf32> to vector<256x48xbf16>
    %c0_13 = arith.constant 0 : index
    %c0_14 = arith.constant 0 : index
    %12 = vector.load %arg7[%c0_13, %c0_14] : memref<48x256xbf16, #tpu.memory_space<vmem>>, vector<48x256xbf16>
    %cst_15 = arith.constant dense<0.000000e+00> : vector<256x256xf32>
    %13 = tpu.matmul %11, %12, %cst_15 {dimension_numbers = #tpu.dot_dimension_numbers<[1], [0], [0], [1], [0, 0, 1, 1], [], []>} : vector<256x48xbf16>, vector<48x256xbf16>, vector<256x256xf32> -> vector<256x256xf32>
    %14 = arith.addf %10, %13 : vector<256x256xf32>
    %c0_16 = arith.constant 0 : index
    %c0_17 = arith.constant 0 : index
    %15 = vector.load %arg10[%c0_16, %c0_17] : memref<1x256xf32, #tpu.memory_space<vmem>>, vector<1x256xf32>
    %16 = vector.broadcast %15 : vector<1x256xf32> to vector<256x256xf32>
    %17 = arith.addf %14, %16 : vector<256x256xf32>
    %18 = arith.truncf %17 : vector<256x256xf32> to vector<256x256xbf16>
    %c0_18 = arith.constant 0 : index
    %c0_19 = arith.constant 0 : index
    %19 = vector.load %arg8[%c0_18, %c0_19] : memref<256x256xbf16, #tpu.memory_space<vmem>>, vector<256x256xbf16>
    %cst_20 = arith.constant dense<0.000000e+00> : vector<256x256xf32>
    %20 = tpu.matmul %18, %19, %cst_20 {dimension_numbers = #tpu.dot_dimension_numbers<[1], [0], [0], [1], [0, 0, 1, 1], [], []>} : vector<256x256xbf16>, vector<256x256xbf16>, vector<256x256xf32> -> vector<256x256xf32>
    %c0_21 = arith.constant 0 : index
    %c0_22 = arith.constant 0 : index
    %21 = vector.load %arg11[%c0_21, %c0_22] : memref<1x256xf32, #tpu.memory_space<vmem>>, vector<1x256xf32>
    %22 = vector.broadcast %21 : vector<1x256xf32> to vector<256x256xf32>
    %23 = arith.addf %20, %22 : vector<256x256xf32>
    %c0_23 = arith.constant 0 : index
    %c0_24 = arith.constant 0 : index
    %24 = vector.load %arg9[%c0_23, %c0_24] : memref<256x128xbf16, #tpu.memory_space<vmem>>, vector<256x128xbf16>
    %cst_25 = arith.constant dense<0.000000e+00> : vector<256x128xf32>
    %25 = tpu.matmul %18, %24, %cst_25 {dimension_numbers = #tpu.dot_dimension_numbers<[1], [0], [0], [1], [0, 0, 1, 1], [], []>} : vector<256x256xbf16>, vector<256x128xbf16>, vector<256x128xf32> -> vector<256x128xf32>
    %c0_26 = arith.constant 0 : index
    %c0_27 = arith.constant 0 : index
    %26 = vector.load %arg12[%c0_26, %c0_27] : memref<1x128xf32, #tpu.memory_space<vmem>>, vector<1x128xf32>
    %27 = vector.broadcast %26 : vector<1x128xf32> to vector<256x128xf32>
    %28 = arith.addf %25, %27 : vector<256x128xf32>
    %c0_28 = arith.constant 0 : index
    %c0_29 = arith.constant 0 : index
    %c0_30 = arith.constant 0 : index
    %29 = vector.load %arg14[%c0_28, %c0_29, %c0_30] : memref<1x256x256xf32, #tpu.memory_space<vmem>>, vector<1x256x256xf32>
    %30 = vector.shape_cast %29 : vector<1x256x256xf32> to vector<256x256xf32>
    %31 = vector.shape_cast %23 : vector<256x256xf32> to vector<1x256x256xf32>
    tpu.vector_store %arg14[%c0_28, %c0_29, %c0_30], %31 {strides = array<i32>} : memref<1x256x256xf32, #tpu.memory_space<vmem>>, vector<1x256x256xf32>,
    %c0_31 = arith.constant 0 : index
    %c0_32 = arith.constant 0 : index
    %c0_33 = arith.constant 0 : index
    %32 = vector.load %arg13[%c0_31, %c0_32, %c0_33] : memref<1x256x128xf32, #tpu.memory_space<vmem>>, vector<1x256x128xf32>
    %33 = vector.shape_cast %32 : vector<1x256x128xf32> to vector<256x128xf32>
    %34 = vector.shape_cast %28 : vector<256x128xf32> to vector<1x256x128xf32>
    tpu.vector_store %arg13[%c0_31, %c0_32, %c0_33], %34 {strides = array<i32>} : memref<1x256x128xf32, #tpu.memory_space<vmem>>, vector<1x256x128xf32>,
    return
  }
  func.func @transform_0(%arg0: i32, %arg1: i32) -> (i32, i32, i32) {
    %c0_i32 = arith.constant 0 : i32
    %c0_i32_0 = arith.constant 0 : i32
    return %arg0, %arg1, %c0_i32 : i32, i32, i32
  }
  func.func @transform_1(%arg0: i32, %arg1: i32) -> (i32, i32) {
    %c0_i32 = arith.constant 0 : i32
    %c0_i32_0 = arith.constant 0 : i32
    %c0_i32_1 = arith.constant 0 : i32
    return %c0_i32, %c0_i32_0 : i32, i32
  }
  func.func @transform_2(%arg0: i32, %arg1: i32) -> (i32, i32, i32) {
    %c0_i32 = arith.constant 0 : i32
    %c0_i32_0 = arith.constant 0 : i32
    return %arg0, %arg1, %c0_i32 : i32, i32, i32
  }
  func.func @transform_3(%arg0: i32, %arg1: i32) -> (i32, i32) {
    %c0_i32 = arith.constant 0 : i32
    %c0_i32_0 = arith.constant 0 : i32
    %c0_i32_1 = arith.constant 0 : i32
    return %c0_i32, %c0_i32_0 : i32, i32
  }
  func.func @transform_4(%arg0: i32, %arg1: i32) -> (i32, i32) {
    %c0_i32 = arith.constant 0 : i32
    %c0_i32_0 = arith.constant 0 : i32
    %c0_i32_1 = arith.constant 0 : i32
    return %c0_i32, %c0_i32_0 : i32, i32
  }
  func.func @transform_5(%arg0: i32, %arg1: i32) -> (i32, i32) {
    %c0_i32 = arith.constant 0 : i32
    %c0_i32_0 = arith.constant 0 : i32
    %c0_i32_1 = arith.constant 0 : i32
    return %c0_i32, %c0_i32_0 : i32, i32
  }
  func.func @transform_6(%arg0: i32, %arg1: i32) -> (i32, i32) {
    %c0_i32 = arith.constant 0 : i32
    %c0_i32_0 = arith.constant 0 : i32
    %c0_i32_1 = arith.constant 0 : i32
    return %c0_i32, %c0_i32_0 : i32, i32
  }
  func.func @transform_7(%arg0: i32, %arg1: i32) -> (i32, i32) {
    %c0_i32 = arith.constant 0 : i32
    %c0_i32_0 = arith.constant 0 : i32
    %c0_i32_1 = arith.constant 0 : i32
    return %c0_i32, %c0_i32_0 : i32, i32
  }
  func.func @transform_8(%arg0: i32, %arg1: i32) -> (i32, i32) {
    %c0_i32 = arith.constant 0 : i32
    %c0_i32_0 = arith.constant 0 : i32
    %c0_i32_1 = arith.constant 0 : i32
    return %c0_i32, %c0_i32_0 : i32, i32
  }
  func.func @transform_9(%arg0: i32, %arg1: i32) -> (i32, i32) {
    %c0_i32 = arith.constant 0 : i32
    %c0_i32_0 = arith.constant 0 : i32
    %c0_i32_1 = arith.constant 0 : i32
    return %c0_i32, %c0_i32_0 : i32, i32
  }
  func.func @transform_10(%arg0: i32, %arg1: i32) -> (i32, i32) {
    %c0_i32 = arith.constant 0 : i32
    %c0_i32_0 = arith.constant 0 : i32
    %c0_i32_1 = arith.constant 0 : i32
    return %c0_i32, %c0_i32_0 : i32, i32
  }
  func.func @transform_11(%arg0: i32, %arg1: i32) -> (i32, i32, i32) {
    %c0_i32 = arith.constant 0 : i32
    %c0_i32_0 = arith.constant 0 : i32
    return %arg0, %arg1, %c0_i32 : i32, i32, i32
  }
  func.func @transform_12(%arg0: i32, %arg1: i32) -> (i32, i32, i32) {
    %c0_i32 = arith.constant 0 : i32
    %c0_i32_0 = arith.constant 0 : i32
    return %arg0, %arg1, %c0_i32 : i32, i32, i32
  }
}

</mosaic_0001>

<llo_original>
// kernel: tpu_custom_call.1
$region0: #{tpu_custom_call.1}
  #allocation0 [shape = 'u32[]', space=smem, size = 0x4, offset = 0x4, fixed_abs, tag = 'smem constant byte address 0x4 - core index']
  #allocation1 [shape = 'u32[144,128]{1,0:T(1,128)}', space=vmem, size = 0x12000, scoped, tag = 'internal scratch']
  %s0 = inlined_call_operand.hbm [shape: bf16[2,512,256], index: 0, kind: input, shape index: {}]
  %s1 = inlined_call_operand.hbm [shape: bf16[256,128], index: 1, kind: input, shape index: {}]
  %s2 = inlined_call_operand.vmem [shape: bf16[2,1024,16], index: 2, kind: input, shape index: {}]
  %s3 = inlined_call_operand.hbm [shape: bf16[16,48], index: 3, kind: input, shape index: {}]
  %s4 = inlined_call_operand.hbm [shape: bf16[256,256], index: 4, kind: input, shape index: {}]
  %s5 = inlined_call_operand.hbm [shape: bf16[48,256], index: 5, kind: input, shape index: {}]
  %s6 = inlined_call_operand.hbm [shape: bf16[256,256], index: 6, kind: input, shape index: {}]
  %s7 = inlined_call_operand.hbm [shape: bf16[256,128], index: 7, kind: input, shape index: {}]
  %s8 = inlined_call_operand.hbm [shape: f32[1,256], index: 8, kind: input, shape index: {}]
  %s9 = inlined_call_operand.hbm [shape: f32[1,256], index: 9, kind: input, shape index: {}]
  %s10 = inlined_call_operand.hbm [shape: f32[1,128], index: 10, kind: input, shape index: {}]
  %s11 = inlined_call_operand.hbm [shape: f32[2,1024,128], index: 11, kind: output, shape index: {0}]
  %s12 = inlined_call_operand.hbm [shape: f32[2,1024,256], index: 12, kind: output, shape index: {1}]
  %13 = xla_tuple %s11, %s12
  %s14 = sld [smem:[#allocation0]]
  $region125: #{tpu_custom_call.1} parent=0
    _
  %s16 = ssub.s32 1, %s14
  %s17 = scalar_select 0, %s16, %s14
  $region1: #{tpu_custom_call.1} parent=0
    #allocation2 [shape = 'u8[131072]{0}', space=vmem, size = 0x20000, scoped, tag = 'input window, operand 0']
    #allocation3 [shape = 's32[2]{0}', space=sflag, size = 0x8, scoped, tag = 'scoped memory for tpu_custom_call.1']
    #allocation4 [shape = 's32[2]{0}', space=sflag, size = 0x8, scoped, tag = 'scoped memory for tpu_custom_call.1']
    #allocation5 [shape = 'u8[65536]{0}', space=vmem, size = 0x10000, scoped, tag = 'input window, operand 1, single buffered']
    #allocation6 [shape = 's32[1]{0}', space=sflag, size = 0x4, scoped, tag = 'scoped memory for tpu_custom_call.1']
    #allocation7 [shape = 'u8[4096]{0}', space=vmem, size = 0x1000, scoped, tag = 'input window, operand 3, single buffered']
    #allocation8 [shape = 'u8[131072]{0}', space=vmem, size = 0x20000, scoped, tag = 'input window, operand 4, single buffered']
    #allocation9 [shape = 's32[1]{0}', space=sflag, size = 0x4, scoped, tag = 'scoped memory for tpu_custom_call.1']
    #allocation10 [shape = 'u8[24576]{0}', space=vmem, size = 0x6000, scoped, tag = 'input window, operand 5, single buffered']
    #allocation11 [shape = 'u8[131072]{0}', space=vmem, size = 0x20000, scoped, tag = 'input window, operand 6, single buffered']
    #allocation12 [shape = 's32[1]{0}', space=sflag, size = 0x4, scoped, tag = 'scoped memory for tpu_custom_call.1']
    #allocation13 [shape = 'u8[65536]{0}', space=vmem, size = 0x10000, scoped, tag = 'input window, operand 7, single buffered']
    #allocation14 [shape = 'u8[1024]{0}', space=vmem, size = 0x400, scoped, tag = 'input window, operand 8, single buffered']
    #allocation15 [shape = 's32[1]{0}', space=sflag, size = 0x4, scoped, tag = 'scoped memory for tpu_custom_call.1']
    #allocation16 [shape = 'u8[1024]{0}', space=vmem, size = 0x400, scoped, tag = 'input window, operand 9, single buffered']
    #allocation17 [shape = 'u8[512]{0}', space=vmem, size = 0x400, scoped, tag = 'input window, operand 10, single buffered']
    #allocation18 [shape = 's32[1]{0}', space=sflag, size = 0x4, scoped, tag = 'scoped memory for tpu_custom_call.1']
    #allocation19 [shape = 'u8[262144]{0}', space=vmem, size = 0x40000, scoped, tag = 'output window, operand 0']
    #allocation20 [shape = 'u8[524288]{0}', space=vmem, size = 0x80000, scoped, tag = 'output window, operand 1']
    #allocation21 [shape = 's32[2]{0}', space=sflag, size = 0x8, scoped, tag = 'scoped memory for tpu_custom_call.1']
    %18 = vsyncpa [#allocation3], 0
    %s19 = scalar_lea.sflag [#allocation3], 1
    %20 = vsyncpa %s19, 0
    %21 = vsyncpa [#allocation6], 0
    %22 = vsyncpa [#allocation9], 0
    %23 = vsyncpa [#allocation12], 0
    %24 = vsyncpa [#allocation15], 0
    %25 = vsyncpa [#allocation18], 0
    %26 = vsyncpa [#allocation4], 0
    %s27 = scalar_lea.sflag [#allocation4], 1
    %28 = vsyncpa %s27, 0
    %29 = vsyncpa [#allocation21], 0
    %s30 = scalar_lea.sflag [#allocation21], 1
    %31 = vsyncpa %s30, 0
    loop: start=0, step=1, limit=10
    $region2: #{tpu_custom_call.1} parent=1 // loop_pre_header
      _
    $region3: #{tpu_custom_call.1} parent=1 // loop_header
      %s33 = sphi 0, %s37
      %p34 = scmp.ge.s32.totalorder %s33, 10
      %s40 = sphi 0, %s52
      %s41 = sphi 0, %s48
      %s42 = sphi 0, %s40
      %s43 = sphi 0, %s41
      %s44 = sphi 0, %s42
      %s45 = sphi 0, %s43
      %s57 = sphi 0, %s59
      %s60 = sphi 0, %s57
      %s61 = sphi 0, %s60
      %s77 = sphi 0, %s61
      %s81 = sphi 0, %s81
      %s83 = sphi 0, %s81
      %s84 = sphi 0, %s83
      %s98 = sphi 0, %s84
      %s106 = sphi 0, %s108
      %s109 = sphi 0, %s106
      %s110 = sphi 0, %s109
      %s126 = sphi 0, %s110
      %s130 = sphi 0, %s130
      %s132 = sphi 0, %s130
      %s133 = sphi 0, %s132
      %s147 = sphi 0, %s133
      %s151 = sphi 0, %s151
      %s153 = sphi 0, %s151
      %s154 = sphi 0, %s153
      %s168 = sphi 0, %s154
      %s172 = sphi 0, %s172
      %s174 = sphi 0, %s172
      %s175 = sphi 0, %s174
      %s189 = sphi 0, %s175
      %s193 = sphi 0, %s193
      %s195 = sphi 0, %s193
      %s196 = sphi 0, %s195
      %s210 = sphi 0, %s196
      %s214 = sphi 0, %s214
      %s216 = sphi 0, %s214
      %s217 = sphi 0, %s216
      %s231 = sphi 0, %s217
      %s235 = sphi 0, %s235
      %s237 = sphi 0, %s235
      %s238 = sphi 0, %s237
      %s252 = sphi 0, %s238
      %s256 = sphi 0, %s256
      %s258 = sphi 0, %s256
      %s259 = sphi 0, %s258
      %s273 = sphi 0, %s259
      %s277 = sphi 0, %s277
      %s279 = sphi 0, %s277
      %s280 = sphi 0, %s279
      %s294 = sphi 0, %s280
      %s302 = sphi 0, %s304
      %s305 = sphi 0, %s302
      %s306 = sphi 0, %s305
      %s322 = sphi 0, %s306
      %s330 = sphi 0, %s332
      %s333 = sphi 0, %s330
      %s334 = sphi 0, %s333
      %s350 = sphi 0, %s334
    $region4: #{tpu_custom_call.1} parent=1 // loop_header_branch
      %36 = sbr.rel (%p34) target = $region8
    $region5: #{tpu_custom_call.1} parent=1 // loop_body
      %s38 = ssub.s32 %s33, 1
      %s39 = ssub.s32 %s33, 2
      %s46 = sadd.s32 1, %s41
      %p47 = scmp.ge.s32.totalorder %s46, 4
      %s48 = scalar_select %p47, 0, %s46
      %s49 = sadd.s32 1, %s40
      %s50 = scalar_select %p47, %s49, %s40
      %p51 = scmp.ge.s32.totalorder %s50, 2
      %s52 = scalar_select %p51, 0, %s50
      %s53 = ssub.s32 %s40, %s52
      %s54 = ssub.s32 %s41, %s48
      %s55 = sor.u32 %s53, %s54
      %p56 = scmp.eq.s32.totalorder %s55, 0
      %s58 = sadd.s32 %s57, 1
      %s59 = scalar_select %p56, %s57, %s58
      %p62 = pneg %p56
      %p63 = scmp.eq.s32.totalorder %s33, 7
      %p64 = por %p62, %p63
      %p65 = scmp.ne.s32.totalorder %s57, %s60
      %p66 = scmp.eq.s32.totalorder %s33, 0
      %p67 = por %p65, %p66
      %p68 = scmp.ne.s32.totalorder %s57, %s60
      %p69 = scmp.eq.s32.totalorder %s38, 7
      %p70 = por %p68, %p69
      %p71 = scmp.ne.s32.totalorder %s60, %s61
      %p72 = scmp.eq.s32.totalorder %s38, 0
      %p73 = por %p71, %p72
      %p74 = scmp.ne.s32.totalorder %s60, %s61
      %p75 = scmp.eq.s32.totalorder %s39, 7
      %p76 = por %p74, %p75
      %p78 = scmp.ne.s32.totalorder %s61, %s77
      %p79 = scmp.eq.s32.totalorder %s39, 0
      %p80 = por %p78, %p79
      %s82 = sadd.s32 %s81, 1
      %p85 = scmp.eq.s32.totalorder %s33, 7
      %p86 = scmp.ne.s32.totalorder %s81, %s83
      %p87 = scmp.eq.s32.totalorder %s33, 0
      %p88 = por %p86, %p87
      %p89 = scmp.ne.s32.totalorder %s81, %s83
      %p90 = scmp.eq.s32.totalorder %s38, 7
      %p91 = por %p89, %p90
      %p92 = scmp.ne.s32.totalorder %s83, %s84
      %p93 = scmp.eq.s32.totalorder %s38, 0
      %p94 = por %p92, %p93
      %p95 = scmp.ne.s32.totalorder %s83, %s84
      %p96 = scmp.eq.s32.totalorder %s39, 7
      %p97 = por %p95, %p96
      %p99 = scmp.ne.s32.totalorder %s84, %s98
      %p100 = scmp.eq.s32.totalorder %s39, 0
      %p101 = por %p99, %p100
      %s102 = ssub.s32 %s40, %s52
      %s103 = ssub.s32 %s41, %s48
      %s104 = sor.u32 %s102, %s103
      %p105 = scmp.eq.s32.totalorder %s104, 0
      %s107 = sadd.s32 %s106, 1
      %s108 = scalar_select %p105, %s106, %s107
      %p111 = pneg %p105
      %p112 = scmp.eq.s32.totalorder %s33, 7
      %p113 = por %p111, %p112
      %p114 = scmp.ne.s32.totalorder %s106, %s109
      %p115 = scmp.eq.s32.totalorder %s33, 0
      %p116 = por %p114, %p115
      %p117 = scmp.ne.s32.totalorder %s106, %s109
      %p118 = scmp.eq.s32.totalorder %s38, 7
      %p119 = por %p117, %p118
      %p120 = scmp.ne.s32.totalorder %s109, %s110
      %p121 = scmp.eq.s32.totalorder %s38, 0
      %p122 = por %p120, %p121
      %p123 = scmp.ne.s32.totalorder %s109, %s110
      %p124 = scmp.eq.s32.totalorder %s39, 7
      %p125 = por %p123, %p124
      %p127 = scmp.ne.s32.totalorder %s110, %s126
      %p128 = scmp.eq.s32.totalorder %s39, 0
      %p129 = por %p127, %p128
      %s131 = sadd.s32 %s130, 1
      %p134 = scmp.eq.s32.totalorder %s33, 7
      %p135 = scmp.ne.s32.totalorder %s130, %s132
      %p136 = scmp.eq.s32.totalorder %s33, 0
      %p137 = por %p135, %p136
      %p138 = scmp.ne.s32.totalorder %s130, %s132
      %p139 = scmp.eq.s32.totalorder %s38, 7
      %p140 = por %p138, %p139
      %p141 = scmp.ne.s32.totalorder %s132, %s133
      %p142 = scmp.eq.s32.totalorder %s38, 0
      %p143 = por %p141, %p142
      %p144 = scmp.ne.s32.totalorder %s132, %s133
      %p145 = scmp.eq.s32.totalorder %s39, 7
      %p146 = por %p144, %p145
      %p148 = scmp.ne.s32.totalorder %s133, %s147
      %p149 = scmp.eq.s32.totalorder %s39, 0
      %p150 = por %p148, %p149
      %s152 = sadd.s32 %s151, 1
      %p155 = scmp.eq.s32.totalorder %s33, 7
      %p156 = scmp.ne.s32.totalorder %s151, %s153
      %p157 = scmp.eq.s32.totalorder %s33, 0
      %p158 = por %p156, %p157
      %p159 = scmp.ne.s32.totalorder %s151, %s153
      %p160 = scmp.eq.s32.totalorder %s38, 7
      %p161 = por %p159, %p160
      %p162 = scmp.ne.s32.totalorder %s153, %s154
      %p163 = scmp.eq.s32.totalorder %s38, 0
      %p164 = por %p162, %p163
      %p165 = scmp.ne.s32.totalorder %s153, %s154
      %p166 = scmp.eq.s32.totalorder %s39, 7
      %p167 = por %p165, %p166
      %p169 = scmp.ne.s32.totalorder %s154, %s168
      %p170 = scmp.eq.s32.totalorder %s39, 0
      %p171 = por %p169, %p170
      %s173 = sadd.s32 %s172, 1
      %p176 = scmp.eq.s32.totalorder %s33, 7
      %p177 = scmp.ne.s32.totalorder %s172, %s174
      %p178 = scmp.eq.s32.totalorder %s33, 0
      %p179 = por %p177, %p178
      %p180 = scmp.ne.s32.totalorder %s172, %s174
      %p181 = scmp.eq.s32.totalorder %s38, 7
      %p182 = por %p180, %p181
      %p183 = scmp.ne.s32.totalorder %s174, %s175
      %p184 = scmp.eq.s32.totalorder %s38, 0
      %p185 = por %p183, %p184
      %p186 = scmp.ne.s32.totalorder %s174, %s175
      %p187 = scmp.eq.s32.totalorder %s39, 7
      %p188 = por %p186, %p187
      %p190 = scmp.ne.s32.totalorder %s175, %s189
      %p191 = scmp.eq.s32.totalorder %s39, 0
      %p192 = por %p190, %p191
      %s194 = sadd.s32 %s193, 1
      %p197 = scmp.eq.s32.totalorder %s33, 7
      %p198 = scmp.ne.s32.totalorder %s193, %s195
      %p199 = scmp.eq.s32.totalorder %s33, 0
      %p200 = por %p198, %p199
      %p201 = scmp.ne.s32.totalorder %s193, %s195
      %p202 = scmp.eq.s32.totalorder %s38, 7
      %p203 = por %p201, %p202
      %p204 = scmp.ne.s32.totalorder %s195, %s196
      %p205 = scmp.eq.s32.totalorder %s38, 0
      %p206 = por %p204, %p205
      %p207 = scmp.ne.s32.totalorder %s195, %s196
      %p208 = scmp.eq.s32.totalorder %s39, 7
      %p209 = por %p207, %p208
      %p211 = scmp.ne.s32.totalorder %s196, %s210
      %p212 = scmp.eq.s32.totalorder %s39, 0
      %p213 = por %p211, %p212
      %s215 = sadd.s32 %s214, 1
      %p218 = scmp.eq.s32.totalorder %s33, 7
      %p219 = scmp.ne.s32.totalorder %s214, %s216
      %p220 = scmp.eq.s32.totalorder %s33, 0
      %p221 = por %p219, %p220
      %p222 = scmp.ne.s32.totalorder %s214, %s216
      %p223 = scmp.eq.s32.totalorder %s38, 7
      %p224 = por %p222, %p223
      %p225 = scmp.ne.s32.totalorder %s216, %s217
      %p226 = scmp.eq.s32.totalorder %s38, 0
      %p227 = por %p225, %p226
      %p228 = scmp.ne.s32.totalorder %s216, %s217
      %p229 = scmp.eq.s32.totalorder %s39, 7
      %p230 = por %p228, %p229
      %p232 = scmp.ne.s32.totalorder %s217, %s231
      %p233 = scmp.eq.s32.totalorder %s39, 0
      %p234 = por %p232, %p233
      %s236 = sadd.s32 %s235, 1
      %p239 = scmp.eq.s32.totalorder %s33, 7
      %p240 = scmp.ne.s32.totalorder %s235, %s237
      %p241 = scmp.eq.s32.totalorder %s33, 0
      %p242 = por %p240, %p241
      %p243 = scmp.ne.s32.totalorder %s235, %s237
      %p244 = scmp.eq.s32.totalorder %s38, 7
      %p245 = por %p243, %p244
      %p246 = scmp.ne.s32.totalorder %s237, %s238
      %p247 = scmp.eq.s32.totalorder %s38, 0
      %p248 = por %p246, %p247
      %p249 = scmp.ne.s32.totalorder %s237, %s238
      %p250 = scmp.eq.s32.totalorder %s39, 7
      %p251 = por %p249, %p250
      %p253 = scmp.ne.s32.totalorder %s238, %s252
      %p254 = scmp.eq.s32.totalorder %s39, 0
      %p255 = por %p253, %p254
      %s257 = sadd.s32 %s256, 1
      %p260 = scmp.eq.s32.totalorder %s33, 7
      %p261 = scmp.ne.s32.totalorder %s256, %s258
      %p262 = scmp.eq.s32.totalorder %s33, 0
      %p263 = por %p261, %p262
      %p264 = scmp.ne.s32.totalorder %s256, %s258
      %p265 = scmp.eq.s32.totalorder %s38, 7
      %p266 = por %p264, %p265
      %p267 = scmp.ne.s32.totalorder %s258, %s259
      %p268 = scmp.eq.s32.totalorder %s38, 0
      %p269 = por %p267, %p268
      %p270 = scmp.ne.s32.totalorder %s258, %s259
      %p271 = scmp.eq.s32.totalorder %s39, 7
      %p272 = por %p270, %p271
      %p274 = scmp.ne.s32.totalorder %s259, %s273
      %p275 = scmp.eq.s32.totalorder %s39, 0
      %p276 = por %p274, %p275
      %s278 = sadd.s32 %s277, 1
      %p281 = scmp.eq.s32.totalorder %s33, 7
      %p282 = scmp.ne.s32.totalorder %s277, %s279
      %p283 = scmp.eq.s32.totalorder %s33, 0
      %p284 = por %p282, %p283
      %p285 = scmp.ne.s32.totalorder %s277, %s279
      %p286 = scmp.eq.s32.totalorder %s38, 7
      %p287 = por %p285, %p286
      %p288 = scmp.ne.s32.totalorder %s279, %s280
      %p289 = scmp.eq.s32.totalorder %s38, 0
      %p290 = por %p288, %p289
      %p291 = scmp.ne.s32.totalorder %s279, %s280
      %p292 = scmp.eq.s32.totalorder %s39, 7
      %p293 = por %p291, %p292
      %p295 = scmp.ne.s32.totalorder %s280, %s294
      %p296 = scmp.eq.s32.totalorder %s39, 0
      %p297 = por %p295, %p296
      %s298 = ssub.s32 %s40, %s52
      %s299 = ssub.s32 %s41, %s48
      %s300 = sor.u32 %s298, %s299
      %p301 = scmp.eq.s32.totalorder %s300, 0
      %s303 = sadd.s32 %s302, 1
      %s304 = scalar_select %p301, %s302, %s303
      %p307 = pneg %p301
      %p308 = scmp.eq.s32.totalorder %s33, 7
      %p309 = por %p307, %p308
      %p310 = scmp.ne.s32.totalorder %s302, %s305
      %p311 = scmp.eq.s32.totalorder %s33, 0
      %p312 = por %p310, %p311
      %p313 = scmp.ne.s32.totalorder %s302, %s305
      %p314 = scmp.eq.s32.totalorder %s38, 7
      %p315 = por %p313, %p314
      %p316 = scmp.ne.s32.totalorder %s305, %s306
      %p317 = scmp.eq.s32.totalorder %s38, 0
      %p318 = por %p316, %p317
      %p319 = scmp.ne.s32.totalorder %s305, %s306
      %p320 = scmp.eq.s32.totalorder %s39, 7
      %p321 = por %p319, %p320
      %p323 = scmp.ne.s32.totalorder %s306, %s322
      %p324 = scmp.eq.s32.totalorder %s39, 0
      %p325 = por %p323, %p324
      %s326 = ssub.s32 %s40, %s52
      %s327 = ssub.s32 %s41, %s48
      %s328 = sor.u32 %s326, %s327
      %p329 = scmp.eq.s32.totalorder %s328, 0
      %s331 = sadd.s32 %s330, 1
      %s332 = scalar_select %p329, %s330, %s331
      %p335 = pneg %p329
      %p336 = scmp.eq.s32.totalorder %s33, 7
      %p337 = por %p335, %p336
      %p338 = scmp.ne.s32.totalorder %s330, %s333
      %p339 = scmp.eq.s32.totalorder %s33, 0
      %p340 = por %p338, %p339
      %p341 = scmp.ne.s32.totalorder %s330, %s333
      %p342 = scmp.eq.s32.totalorder %s38, 7
      %p343 = por %p341, %p342
      %p344 = scmp.ne.s32.totalorder %s333, %s334
      %p345 = scmp.eq.s32.totalorder %s38, 0
      %p346 = por %p344, %p345
      %p347 = scmp.ne.s32.totalorder %s333, %s334
      %p348 = scmp.eq.s32.totalorder %s39, 7
      %p349 = por %p347, %p348
      %p351 = scmp.ne.s32.totalorder %s334, %s350
      %p352 = scmp.eq.s32.totalorder %s39, 0
      %p353 = por %p351, %p352
      %p354 = scmp.le.s32.totalorder 1, %s33
      %p355 = scmp.lt.s32.totalorder %s33, 9
      %p356 = pnand %p354, %p355
      %p357 = pneg %p356
      // Predicated region
      $region9: #{tpu_custom_call.1} parent=5 // pred_check
        _
      $region10: #{tpu_custom_call.1} parent=5 // pred_check_branch
        %359 = sbr.rel (%p356) target = $region12
      $region11: #{tpu_custom_call.1} parent=5 // pred_region
        %s360 = ssub.s32 %s33, 1
        // Predicated region
        $region13: #{tpu_custom_call.1} parent=11 // pred_check
          %p361 = pneg %p94
        $region14: #{tpu_custom_call.1} parent=11 // pred_check_branch
          %363 = sbr.rel (%p361) target = $region16
        $region15: #{tpu_custom_call.1} parent=11 // pred_region
          %s365 = ssub.s32 2048, 2048
          %366 = vsyncadd [#allocation6], %s365
          %s367 = sshll.u32 [#allocation5], 4
          %s368 = int_to_ptr.vmem [resolvable:$true] %s367
          %373 = dma.hbm_to_vmem [thread:$0]  %s1, 2048, %s368, [#allocation6], 64, 64, 4
        $region16: #{tpu_custom_call.1} parent=11 // pred_fallthru
          _
        // Predicated region
        $region17: #{tpu_custom_call.1} parent=11 // pred_check
          %p374 = pneg %p143
        $region18: #{tpu_custom_call.1} parent=11 // pred_check_branch
          %376 = sbr.rel (%p374) target = $region20
        $region19: #{tpu_custom_call.1} parent=11 // pred_region
          %s378 = ssub.s32 128, 128
          %379 = vsyncadd [#allocation6], %s378
          %s380 = sshll.u32 [#allocation7], 4
          %s381 = int_to_ptr.vmem [resolvable:$true] %s380
          %386 = dma.hbm_to_vmem [thread:$0]  %s3, 128, %s381, [#allocation6], 64, 64, 4
        $region20: #{tpu_custom_call.1} parent=11 // pred_fallthru
          _
        // Predicated region
        $region21: #{tpu_custom_call.1} parent=11 // pred_check
          %p387 = pneg %p164
        $region22: #{tpu_custom_call.1} parent=11 // pred_check_branch
          %389 = sbr.rel (%p387) target = $region24
        $region23: #{tpu_custom_call.1} parent=11 // pred_region
          %s391 = ssub.s32 4096, 4096
          %392 = vsyncadd [#allocation9], %s391
          %s393 = sshll.u32 [#allocation8], 4
          %s394 = int_to_ptr.vmem [resolvable:$true] %s393
          %399 = dma.hbm_to_vmem [thread:$0]  %s4, 4096, %s394, [#allocation9], 128, 128, 8
        $region24: #{tpu_custom_call.1} parent=11 // pred_fallthru
          _
        // Predicated region
        $region25: #{tpu_custom_call.1} parent=11 // pred_check
          %p400 = pneg %p185
        $region26: #{tpu_custom_call.1} parent=11 // pred_check_branch
          %402 = sbr.rel (%p400) target = $region28
        $region27: #{tpu_custom_call.1} parent=11 // pred_region
          %s404 = ssub.s32 768, 768
          %405 = vsyncadd [#allocation9], %s404
          %s406 = sshll.u32 [#allocation10], 4
          %s407 = int_to_ptr.vmem [resolvable:$true] %s406
          %412 = dma.hbm_to_vmem [thread:$0]  %s5, 768, %s407, [#allocation9], 128, 128, 8
        $region28: #{tpu_custom_call.1} parent=11 // pred_fallthru
          _
        // Predicated region
        $region29: #{tpu_custom_call.1} parent=11 // pred_check
          %p413 = pneg %p206
        $region30: #{tpu_custom_call.1} parent=11 // pred_check_branch
          %415 = sbr.rel (%p413) target = $region32
        $region31: #{tpu_custom_call.1} parent=11 // pred_region
          %s417 = ssub.s32 4096, 4096
          %418 = vsyncadd [#allocation12], %s417
          %s419 = sshll.u32 [#allocation11], 4
          %s420 = int_to_ptr.vmem [resolvable:$true] %s419
          %425 = dma.hbm_to_vmem [thread:$0]  %s6, 4096, %s420, [#allocation12], 128, 128, 8
        $region32: #{tpu_custom_call.1} parent=11 // pred_fallthru
          _
        // Predicated region
        $region33: #{tpu_custom_call.1} parent=11 // pred_check
          %p426 = pneg %p227
        $region34: #{tpu_custom_call.1} parent=11 // pred_check_branch
          %428 = sbr.rel (%p426) target = $region36
        $region35: #{tpu_custom_call.1} parent=11 // pred_region
          %s430 = ssub.s32 2048, 2048
          %431 = vsyncadd [#allocation12], %s430
          %s432 = sshll.u32 [#allocation13], 4
          %s433 = int_to_ptr.vmem [resolvable:$true] %s432
          %438 = dma.hbm_to_vmem [thread:$0]  %s7, 2048, %s433, [#allocation12], 64, 64, 4
        $region36: #{tpu_custom_call.1} parent=11 // pred_fallthru
          _
        // Predicated region
        $region37: #{tpu_custom_call.1} parent=11 // pred_check
          %p439 = pneg %p248
        $region38: #{tpu_custom_call.1} parent=11 // pred_check_branch
          %441 = sbr.rel (%p439) target = $region40
        $region39: #{tpu_custom_call.1} parent=11 // pred_region
          %s443 = ssub.s32 32, 32
          %444 = vsyncadd [#allocation15], %s443
          %s446 = sshll.u32 [#allocation14], 4
          %s447 = int_to_ptr.vmem [resolvable:$true] %s446
          %449 = dma.hbm_to_vmem [thread:$0]  %s8, 32, %s447, [#allocation15]
        $region40: #{tpu_custom_call.1} parent=11 // pred_fallthru
          _
        // Predicated region
        $region41: #{tpu_custom_call.1} parent=11 // pred_check
          %p450 = pneg %p269
        $region42: #{tpu_custom_call.1} parent=11 // pred_check_branch
          %452 = sbr.rel (%p450) target = $region44
        $region43: #{tpu_custom_call.1} parent=11 // pred_region
          %s454 = ssub.s32 32, 32
          %455 = vsyncadd [#allocation15], %s454
          %s457 = sshll.u32 [#allocation16], 4
          %s458 = int_to_ptr.vmem [resolvable:$true] %s457
          %460 = dma.hbm_to_vmem [thread:$0]  %s9, 32, %s458, [#allocation15]
        $region44: #{tpu_custom_call.1} parent=11 // pred_fallthru
          _
        // Predicated region
        $region45: #{tpu_custom_call.1} parent=11 // pred_check
          %p461 = pneg %p290
        $region46: #{tpu_custom_call.1} parent=11 // pred_check_branch
          %463 = sbr.rel (%p461) target = $region48
        $region47: #{tpu_custom_call.1} parent=11 // pred_region
          %s465 = ssub.s32 16, 16
          %466 = vsyncadd [#allocation18], %s465
          %s468 = sshll.u32 [#allocation17], 4
          %s469 = int_to_ptr.vmem [resolvable:$true] %s468
          %471 = dma.hbm_to_vmem [thread:$0]  %s10, 16, %s469, [#allocation18]
        $region48: #{tpu_custom_call.1} parent=11 // pred_fallthru
          _
      $region12: #{tpu_custom_call.1} parent=5 // pred_fallthru
        _
      %p472 = scmp.lt.s32.totalorder %s33, 8
      // Predicated region
      $region49: #{tpu_custom_call.1} parent=5 // pred_check
        %p473 = pneg %p472
      $region50: #{tpu_custom_call.1} parent=5 // pred_check_branch
        %475 = sbr.rel (%p473) target = $region52
      $region51: #{tpu_custom_call.1} parent=5 // pred_region
        // Predicated region
        $region53: #{tpu_custom_call.1} parent=51 // pred_check
          %p476 = pneg %p67
        $region54: #{tpu_custom_call.1} parent=51 // pred_check_branch
          %478 = sbr.rel (%p476) target = $region56
        $region55: #{tpu_custom_call.1} parent=51 // pred_region
          %s479 = sand.u32 %s57, 1
          %s480 = scalar_lea.sflag [#allocation3], %s479
          %s481 = sand.u32 %s57, 1
          %s482 = smul.addr %s481, 128
          %s483 = scalar_lea.vmem [#allocation2], %s482
          %s484 = smul.u32 16, %s41
          %s486 = ssub.s32 2048, 2048
          %487 = vsyncadd %s480, %s486
          %s488 = smul.addr %s484, 2
          %s489 = smul.addr %s40, 128
          %s490 = sadd.s32 %s488, %s489
          %s491 = smul.addr %s490, 64
          %s492 = scalar_lea.hbm %s0, %s491
          %s493 = sshll.u32 %s483, 4
          %s494 = int_to_ptr.vmem [resolvable:$true] %s493
          %499 = dma.hbm_to_vmem [thread:$0]  %s492, 2048, %s494, %s480, 128, 128, 8
        $region56: #{tpu_custom_call.1} parent=51 // pred_fallthru
          _
        // Predicated region
        $region57: #{tpu_custom_call.1} parent=51 // pred_check
          %p500 = pneg %p116
        $region58: #{tpu_custom_call.1} parent=51 // pred_check_branch
          %502 = sbr.rel (%p500) target = $region60
        $region59: #{tpu_custom_call.1} parent=51 // pred_region
          %s503 = smul.u32 32, %s41
          %p504 = scmp.lt.s32.totalorder %s40, 1
          %s505 = scalar_select %p504, %s40, 1
          %p506 = scmp.lt.s32.totalorder %s503, 127
          %s507 = scalar_select %p506, %s503, 127
          %s508 = smul.addr %s505, 128
          %s509 = sadd.s32 %s507, %s508
          %s510 = smul.addr %s509, 4
          %s511 = scalar_lea.vmem %s2, %s510
          %s512 = smul.u32 32, %s41
        $region60: #{tpu_custom_call.1} parent=51 // pred_fallthru
          _
      $region52: #{tpu_custom_call.1} parent=5 // pred_fallthru
        _
      %p513 = scmp.le.s32.totalorder 1, %s33
      %p514 = scmp.lt.s32.totalorder %s33, 9
      %p515 = pnand %p513, %p514
      %p516 = pneg %p515
      // Predicated region
      $region61: #{tpu_custom_call.1} parent=5 // pred_check
        _
      $region62: #{tpu_custom_call.1} parent=5 // pred_check_branch
        %518 = sbr.rel (%p515) target = $region64
      $region63: #{tpu_custom_call.1} parent=5 // pred_region
        %s519 = ssub.s32 %s33, 1
        %s520 = sand.u32 %s60, 1
        %s521 = scalar_lea.sflag [#allocation3], %s520
        %s522 = sand.u32 %s60, 1
        %s523 = smul.addr %s522, 128
        %s524 = scalar_lea.vmem [#allocation2], %s523
        // Predicated region
        $region65: #{tpu_custom_call.1} parent=63 // pred_check
          %p525 = pneg %p73
        $region66: #{tpu_custom_call.1} parent=63 // pred_check_branch
          %527 = sbr.rel (%p525) target = $region68
        $region67: #{tpu_custom_call.1} parent=63 // pred_region
          %528 = dma.done %s521, 2048
        $region68: #{tpu_custom_call.1} parent=63 // pred_fallthru
          _
        // Predicated region
        $region69: #{tpu_custom_call.1} parent=63 // pred_check
          %p529 = pneg %p94
        $region70: #{tpu_custom_call.1} parent=63 // pred_check_branch
          %531 = sbr.rel (%p529) target = $region72
        $region71: #{tpu_custom_call.1} parent=63 // pred_region
          %532 = dma.done [#allocation6], 2048
        $region72: #{tpu_custom_call.1} parent=63 // pred_fallthru
          _
        // Predicated region
        $region73: #{tpu_custom_call.1} parent=63 // pred_check
          %p533 = pneg %p143
        $region74: #{tpu_custom_call.1} parent=63 // pred_check_branch
          %535 = sbr.rel (%p533) target = $region76
        $region75: #{tpu_custom_call.1} parent=63 // pred_region
          %536 = dma.done [#allocation6], 128
        $region76: #{tpu_custom_call.1} parent=63 // pred_fallthru
          _
        // Predicated region
        $region77: #{tpu_custom_call.1} parent=63 // pred_check
          %p537 = pneg %p164
        $region78: #{tpu_custom_call.1} parent=63 // pred_check_branch
          %539 = sbr.rel (%p537) target = $region80
        $region79: #{tpu_custom_call.1} parent=63 // pred_region
          %540 = dma.done [#allocation9], 4096
        $region80: #{tpu_custom_call.1} parent=63 // pred_fallthru
          _
        // Predicated region
        $region81: #{tpu_custom_call.1} parent=63 // pred_check
          %p541 = pneg %p185
        $region82: #{tpu_custom_call.1} parent=63 // pred_check_branch
          %543 = sbr.rel (%p541) target = $region84
        $region83: #{tpu_custom_call.1} parent=63 // pred_region
          %544 = dma.done [#allocation9], 768
        $region84: #{tpu_custom_call.1} parent=63 // pred_fallthru
          _
        // Predicated region
        $region85: #{tpu_custom_call.1} parent=63 // pred_check
          %p545 = pneg %p206
        $region86: #{tpu_custom_call.1} parent=63 // pred_check_branch
          %547 = sbr.rel (%p545) target = $region88
        $region87: #{tpu_custom_call.1} parent=63 // pred_region
          %548 = dma.done [#allocation12], 4096
        $region88: #{tpu_custom_call.1} parent=63 // pred_fallthru
          _
        // Predicated region
        $region89: #{tpu_custom_call.1} parent=63 // pred_check
          %p549 = pneg %p227
        $region90: #{tpu_custom_call.1} parent=63 // pred_check_branch
          %551 = sbr.rel (%p549) target = $region92
        $region91: #{tpu_custom_call.1} parent=63 // pred_region
          %552 = dma.done [#allocation12], 2048
        $region92: #{tpu_custom_call.1} parent=63 // pred_fallthru
          _
        // Predicated region
        $region93: #{tpu_custom_call.1} parent=63 // pred_check
          %p553 = pneg %p248
        $region94: #{tpu_custom_call.1} parent=63 // pred_check_branch
          %555 = sbr.rel (%p553) target = $region96
        $region95: #{tpu_custom_call.1} parent=63 // pred_region
          %556 = dma.done [#allocation15], 32
        $region96: #{tpu_custom_call.1} parent=63 // pred_fallthru
          _
        // Predicated region
        $region97: #{tpu_custom_call.1} parent=63 // pred_check
          %p557 = pneg %p269
        $region98: #{tpu_custom_call.1} parent=63 // pred_check_branch
          %559 = sbr.rel (%p557) target = $region100
        $region99: #{tpu_custom_call.1} parent=63 // pred_region
          %560 = dma.done [#allocation15], 32
        $region100: #{tpu_custom_call.1} parent=63 // pred_fallthru
          _
        // Predicated region
        $region101: #{tpu_custom_call.1} parent=63 // pred_check
          %p561 = pneg %p290
        $region102: #{tpu_custom_call.1} parent=63 // pred_check_branch
          %563 = sbr.rel (%p561) target = $region104
        $region103: #{tpu_custom_call.1} parent=63 // pred_region
          %564 = dma.done [#allocation18], 16
        $region104: #{tpu_custom_call.1} parent=63 // pred_fallthru
          _
        %s565 = sand.u32 %s60, 1
        %s566 = scalar_lea.sflag [#allocation3], %s565
        %s567 = sand.u32 %s60, 1
        %s568 = smul.addr %s567, 128
        %s569 = scalar_lea.vmem [#allocation2], %s568
        %p570 = pneg %p73
        %p571 = pneg %p70
        %p572 = pneg %p94
        %p573 = pneg %p91
        %s574 = smul.u32 32, %s43
        %p575 = scmp.lt.s32.totalorder %s42, 1
        %s576 = scalar_select %p575, %s42, 1
        %p577 = scmp.lt.s32.totalorder %s574, 127
        %s578 = scalar_select %p577, %s574, 127
        %s579 = smul.addr %s576, 128
        %s580 = sadd.s32 %s578, %s579
        %s581 = smul.addr %s580, 4
        %s582 = scalar_lea.vmem %s2, %s581
        %p583 = pneg %p122
        %p584 = pneg %p119
        %p585 = pneg %p143
        %p586 = pneg %p140
        %p587 = pneg %p164
        %p588 = pneg %p161
        %p589 = pneg %p185
        %p590 = pneg %p182
        %p591 = pneg %p206
        %p592 = pneg %p203
        %p593 = pneg %p227
        %p594 = pneg %p224
        %p595 = pneg %p248
        %p596 = pneg %p245
        %p597 = pneg %p269
        %p598 = pneg %p266
        %p599 = pneg %p290
        %p600 = pneg %p287
        %p601 = pneg %p318
        %p602 = pneg %p315
        %s603 = sand.u32 %s305, 1
        %s604 = scalar_lea.sflag [#allocation4], %s603
        %s605 = sand.u32 %s305, 1
        %s606 = smul.addr %s605, 256
        %s607 = scalar_lea.vmem [#allocation19], %s606
        %p608 = pneg %p346
        %p609 = pneg %p343
        %s610 = sand.u32 %s333, 1
        %s611 = scalar_lea.sflag [#allocation21], %s610
        %s612 = sand.u32 %s333, 1
        %s613 = smul.addr %s612, 512
        %s614 = scalar_lea.vmem [#allocation20], %s613
        %s615 = smul.u32 16, %s43
        %s616 = smul.u32 32, %s43
        %p617 = scmp.lt.s32.totalorder %s42, 1
        %s618 = scalar_select %p617, %s42, 1
        %p619 = scmp.lt.s32.totalorder %s616, 127
        %s620 = scalar_select %p619, %s616, 127
        %s621 = smul.addr %s618, 128
        %s622 = sadd.s32 %s620, %s621
        %s623 = smul.addr %s622, 4
        %s624 = scalar_lea.vmem %s2, %s623
        %s625 = smul.u32 32, %s43
        %s626 = smul.u32 32, %s43
        %s627 = smul.u32 32, %s43
        %v629 = vld [vmem:[#allocation5] sm:$0xf]
        %v630 = vld [vmem:[#allocation5 + $0x4] sm:$0xf]
        %v631 = vld [vmem:[#allocation5 + $0x8] sm:$0xf]
        %v632 = vld [vmem:[#allocation5 + $0xc] sm:$0xf]
        %v633 = vld [vmem:[#allocation5 + $0x10] sm:$0xf]
        %v634 = vld [vmem:[#allocation5 + $0x14] sm:$0xf]
        %v635 = vld [vmem:[#allocation5 + $0x18] sm:$0xf]
        %v636 = vld [vmem:[#allocation5 + $0x1c] sm:$0xf]
        %v637 = vld [vmem:[#allocation5 + $0x20] sm:$0xf]
        %v638 = vld [vmem:[#allocation5 + $0x24] sm:$0xf]
        %v639 = vld [vmem:[#allocation5 + $0x28] sm:$0xf]
        %v640 = vld [vmem:[#allocation5 + $0x2c] sm:$0xf]
        %v641 = vld [vmem:[#allocation5 + $0x30] sm:$0xf]
        %v642 = vld [vmem:[#allocation5 + $0x34] sm:$0xf]
        %v643 = vld [vmem:[#allocation5 + $0x38] sm:$0xf]
        %v644 = vld [vmem:[#allocation5 + $0x3c] sm:$0xf]
        %v645 = vld [vmem:[#allocation5 + $0x40] sm:$0xf]
        %v646 = vld [vmem:[#allocation5 + $0x44] sm:$0xf]
        %v647 = vld [vmem:[#allocation5 + $0x48] sm:$0xf]
        %v648 = vld [vmem:[#allocation5 + $0x4c] sm:$0xf]
        %v649 = vld [vmem:[#allocation5 + $0x50] sm:$0xf]
        %v650 = vld [vmem:[#allocation5 + $0x54] sm:$0xf]
        %v651 = vld [vmem:[#allocation5 + $0x58] sm:$0xf]
        %v652 = vld [vmem:[#allocation5 + $0x5c] sm:$0xf]
        %v653 = vld [vmem:[#allocation5 + $0x60] sm:$0xf]
        %v654 = vld [vmem:[#allocation5 + $0x64] sm:$0xf]
        %v655 = vld [vmem:[#allocation5 + $0x68] sm:$0xf]
        %v656 = vld [vmem:[#allocation5 + $0x6c] sm:$0xf]
        %v657 = vld [vmem:[#allocation5 + $0x70] sm:$0xf]
        %v658 = vld [vmem:[#allocation5 + $0x74] sm:$0xf]
        %v659 = vld [vmem:[#allocation5 + $0x78] sm:$0xf]
        %v660 = vld [vmem:[#allocation5 + $0x7c] sm:$0xf]
        %v661 = vld [vmem:[%s524] sm:$0xff]
        %v662 = vld [vmem:[%s524 + $0x8] sm:$0xff]
        %v663 = vld [vmem:[%s524 + $0x10] sm:$0xff]
        %v664 = vld [vmem:[%s524 + $0x18] sm:$0xff]
        %v665 = vld [vmem:[%s524 + $0x20] sm:$0xff]
        %v666 = vld [vmem:[%s524 + $0x28] sm:$0xff]
        %v667 = vld [vmem:[%s524 + $0x30] sm:$0xff]
        %v668 = vld [vmem:[%s524 + $0x38] sm:$0xff]
        %v669 = vld [vmem:[%s524 + $0x40] sm:$0xff]
        %v670 = vld [vmem:[%s524 + $0x48] sm:$0xff]
        %v671 = vld [vmem:[%s524 + $0x50] sm:$0xff]
        %v672 = vld [vmem:[%s524 + $0x58] sm:$0xff]
        %v673 = vld [vmem:[%s524 + $0x60] sm:$0xff]
        %v674 = vld [vmem:[%s524 + $0x68] sm:$0xff]
        %v675 = vld [vmem:[%s524 + $0x70] sm:$0xff]
        %v676 = vld [vmem:[%s524 + $0x78] sm:$0xff]
        %v709 = vunpack.c.l.b16 %v629
        %v710 = vunpack.c.l.b16 %v630
        %v711 = vunpack.c.l.b16 %v631
        %v712 = vunpack.c.l.b16 %v632
        %v713 = vunpack.c.l.b16 %v633
        %v714 = vunpack.c.l.b16 %v634
        %v715 = vunpack.c.l.b16 %v635
        %v716 = vunpack.c.l.b16 %v636
        %v717 = vunpack.c.l.b16 %v637
        %v718 = vunpack.c.l.b16 %v638
        %v719 = vunpack.c.l.b16 %v639
        %v720 = vunpack.c.l.b16 %v640
        %v721 = vunpack.c.l.b16 %v641
        %v722 = vunpack.c.l.b16 %v642
        %v723 = vunpack.c.l.b16 %v643
        %v724 = vunpack.c.l.b16 %v644
        %v725 = vunpack.c.l.b16 %v645
        %v726 = vunpack.c.l.b16 %v646
        %v727 = vunpack.c.l.b16 %v647
        %v728 = vunpack.c.l.b16 %v648
        %v729 = vunpack.c.l.b16 %v649
        %v730 = vunpack.c.l.b16 %v650
        %v731 = vunpack.c.l.b16 %v651
        %v732 = vunpack.c.l.b16 %v652
        %v733 = vunpack.c.l.b16 %v653
        %v734 = vunpack.c.l.b16 %v654
        %v735 = vunpack.c.l.b16 %v655
        %v736 = vunpack.c.l.b16 %v656
        %v737 = vunpack.c.l.b16 %v657
        %v738 = vunpack.c.l.b16 %v658
        %v739 = vunpack.c.l.b16 %v659
        %v740 = vunpack.c.l.b16 %v660
        %v741 = vpack.c.b16 %v710, %v709
        %v742 = vpack.c.b16 %v712, %v711
        %v743 = vpack.c.b16 %v714, %v713
        %v744 = vpack.c.b16 %v716, %v715
        %v745 = vpack.c.b16 %v718, %v717
        %v746 = vpack.c.b16 %v720, %v719
        %v747 = vpack.c.b16 %v722, %v721
        %v748 = vpack.c.b16 %v724, %v723
        %v749 = vpack.c.b16 %v726, %v725
        %v750 = vpack.c.b16 %v728, %v727
        %v751 = vpack.c.b16 %v730, %v729
        %v752 = vpack.c.b16 %v732, %v731
        %v753 = vpack.c.b16 %v734, %v733
        %v754 = vpack.c.b16 %v736, %v735
        %v755 = vpack.c.b16 %v738, %v737
        %v756 = vpack.c.b16 %v740, %v739
        %v789 = vunpack.c.l.b16 %v661
        %v790 = vunpack.c.h.b16 %v661
        %v791 = vunpack.c.l.b16 %v662
        %v792 = vunpack.c.h.b16 %v662
        %v793 = vunpack.c.l.b16 %v663
        %v794 = vunpack.c.h.b16 %v663
        %v795 = vunpack.c.l.b16 %v664
        %v796 = vunpack.c.h.b16 %v664
        %v797 = vunpack.c.l.b16 %v665
        %v798 = vunpack.c.h.b16 %v665
        %v799 = vunpack.c.l.b16 %v666
        %v800 = vunpack.c.h.b16 %v666
        %v801 = vunpack.c.l.b16 %v667
        %v802 = vunpack.c.h.b16 %v667
        %v803 = vunpack.c.l.b16 %v668
        %v804 = vunpack.c.h.b16 %v668
        %v805 = vunpack.c.l.b16 %v669
        %v806 = vunpack.c.h.b16 %v669
        %v807 = vunpack.c.l.b16 %v670
        %v808 = vunpack.c.h.b16 %v670
        %v809 = vunpack.c.l.b16 %v671
        %v810 = vunpack.c.h.b16 %v671
        %v811 = vunpack.c.l.b16 %v672
        %v812 = vunpack.c.h.b16 %v672
        %v813 = vunpack.c.l.b16 %v673
        %v814 = vunpack.c.h.b16 %v673
        %v815 = vunpack.c.l.b16 %v674
        %v816 = vunpack.c.h.b16 %v674
        %v817 = vunpack.c.l.b16 %v675
        %v818 = vunpack.c.h.b16 %v675
        %v819 = vunpack.c.l.b16 %v676
        %v820 = vunpack.c.h.b16 %v676
        %v821 = vpack.c.b16 %v791, %v789
        %v822 = vpack.c.b16 %v792, %v790
        %v823 = vpack.c.b16 %v795, %v793
        %v824 = vpack.c.b16 %v796, %v794
        %v825 = vpack.c.b16 %v799, %v797
        %v826 = vpack.c.b16 %v800, %v798
        %v827 = vpack.c.b16 %v803, %v801
        %v828 = vpack.c.b16 %v804, %v802
        %v829 = vpack.c.b16 %v807, %v805
        %v830 = vpack.c.b16 %v808, %v806
        %v831 = vpack.c.b16 %v811, %v809
        %v832 = vpack.c.b16 %v812, %v810
        %v833 = vpack.c.b16 %v815, %v813
        %v834 = vpack.c.b16 %v816, %v814
        %v835 = vpack.c.b16 %v819, %v817
        %v836 = vpack.c.b16 %v820, %v818
        %853 = vmatprep.subr.bf16.mxu0 %v822
        %854 = vmatpush1.bf16.msra.mxu0 %v821
        %855 = vmatprep.subr.bf16.mxu0 %v824
        %856 = vmatpush1.bf16.msra.mxu0 %v823
        %857 = vmatprep.subr.bf16.mxu0 %v826
        %858 = vmatpush1.bf16.msra.mxu0 %v825
        %859 = vmatprep.subr.bf16.mxu0 %v828
        %860 = vmatpush1.bf16.msra.mxu0 %v827
        %861 = vmatprep.subr.bf16.mxu0 %v830
        %862 = vmatpush1.bf16.msra.mxu0 %v829
        %863 = vmatprep.subr.bf16.mxu0 %v832
        %864 = vmatpush1.bf16.msra.mxu0 %v831
        %865 = vmatprep.subr.bf16.mxu0 %v834
        %866 = vmatpush1.bf16.msra.mxu0 %v833
        %867 = vmatprep.subr.bf16.mxu0 %v836
        %868 = vmatpush1.bf16.msra.mxu0 %v835
        %869 = vmatprep.subr.bf16.mxu0 0
        %870 = vmatpush1.bf16.msra.mxu0 0
        %871 = vmatprep.subr.bf16.mxu0 0
        %872 = vmatpush1.bf16.msra.mxu0 0
        %873 = vmatprep.subr.bf16.mxu0 0
        %874 = vmatpush1.bf16.msra.mxu0 0
        %875 = vmatprep.subr.bf16.mxu0 0
        %876 = vmatpush1.bf16.msra.mxu0 0
        %877 = vmatprep.subr.bf16.mxu0 0
        %878 = vmatpush1.bf16.msra.mxu0 0
        %879 = vmatprep.subr.bf16.mxu0 0
        %880 = vmatpush1.bf16.msra.mxu0 0
        %881 = vmatprep.subr.bf16.mxu0 0
        %882 = vmatpush1.bf16.msra.mxu0 0
        %883 = vmatprep.subr.bf16.mxu0 0
        %884 = vmatpush1.bf16.msra.mxu0 0
        %885 = vmatprep.mubr.bf16.mxu0 0
        %886 = vmatmul.mubr.bf16.gmra.mrb[0].mxu0 %v741
        %v887 = vpop.f32.mrb[0].mxu0
        %v888 = vadd.f32 0.0, %v887
        %v889 = vpop.f32.mrb[0].mxu0
        %v890 = vadd.f32 0.0, %v889
        %v891 = vpop.f32.mrb[0].mxu0
        %v892 = vadd.f32 0.0, %v891
        %v893 = vpop.f32.mrb[0].mxu0
        %v894 = vadd.f32 0.0, %v893
        %895 = vmatprep.mubr.bf16.mxu0 0
        %896 = vmatmul.mubr.bf16.gmra.mrb[0].mxu0 %v742
        %v897 = vpop.f32.mrb[0].mxu0
        %v898 = vadd.f32 0.0, %v897
        %v899 = vpop.f32.mrb[0].mxu0
        %v900 = vadd.f32 0.0, %v899
        %v901 = vpop.f32.mrb[0].mxu0
        %v902 = vadd.f32 0.0, %v901
        %v903 = vpop.f32.mrb[0].mxu0
        %v904 = vadd.f32 0.0, %v903
        %905 = vmatprep.mubr.bf16.mxu0 0
        %906 = vmatmul.mubr.bf16.gmra.mrb[0].mxu0 %v743
        %v907 = vpop.f32.mrb[0].mxu0
        %v908 = vadd.f32 0.0, %v907
        %v909 = vpop.f32.mrb[0].mxu0
        %v910 = vadd.f32 0.0, %v909
        %v911 = vpop.f32.mrb[0].mxu0
        %v912 = vadd.f32 0.0, %v911
        %v913 = vpop.f32.mrb[0].mxu0
        %v914 = vadd.f32 0.0, %v913
        %915 = vmatprep.mubr.bf16.mxu0 0
        %916 = vmatmul.mubr.bf16.gmra.mrb[0].mxu0 %v744
        %v917 = vpop.f32.mrb[0].mxu0
        %v918 = vadd.f32 0.0, %v917
        %v919 = vpop.f32.mrb[0].mxu0
        %v920 = vadd.f32 0.0, %v919
        %v921 = vpop.f32.mrb[0].mxu0
        %v922 = vadd.f32 0.0, %v921
        %v923 = vpop.f32.mrb[0].mxu0
        %v924 = vadd.f32 0.0, %v923
        %925 = vmatprep.mubr.bf16.mxu0 0
        %926 = vmatmul.mubr.bf16.gmra.mrb[0].mxu0 %v745
        %v927 = vpop.f32.mrb[0].mxu0
        %v928 = vadd.f32 0.0, %v927
        %v929 = vpop.f32.mrb[0].mxu0
        %v930 = vadd.f32 0.0, %v929
        %v931 = vpop.f32.mrb[0].mxu0
        %v932 = vadd.f32 0.0, %v931
        %v933 = vpop.f32.mrb[0].mxu0
        %v934 = vadd.f32 0.0, %v933
        %935 = vmatprep.mubr.bf16.mxu0 0
        %936 = vmatmul.mubr.bf16.gmra.mrb[0].mxu0 %v746
        %v937 = vpop.f32.mrb[0].mxu0
        %v938 = vadd.f32 0.0, %v937
        %v939 = vpop.f32.mrb[0].mxu0
        %v940 = vadd.f32 0.0, %v939
        %v941 = vpop.f32.mrb[0].mxu0
        %v942 = vadd.f32 0.0, %v941
        %v943 = vpop.f32.mrb[0].mxu0
        %v944 = vadd.f32 0.0, %v943
        %945 = vmatprep.mubr.bf16.mxu0 0
        %946 = vmatmul.mubr.bf16.gmra.mrb[0].mxu0 %v747
        %v947 = vpop.f32.mrb[0].mxu0
        %v948 = vadd.f32 0.0, %v947
        %v949 = vpop.f32.mrb[0].mxu0
        %v950 = vadd.f32 0.0, %v949
        %v951 = vpop.f32.mrb[0].mxu0
        %v952 = vadd.f32 0.0, %v951
        %v953 = vpop.f32.mrb[0].mxu0
        %v954 = vadd.f32 0.0, %v953
        %955 = vmatprep.mubr.bf16.mxu0 0
        %956 = vmatmul.mubr.bf16.gmra.mrb[0].mxu0 %v748
        %v957 = vpop.f32.mrb[0].mxu0
        %v958 = vadd.f32 0.0, %v957
        %v959 = vpop.f32.mrb[0].mxu0
        %v960 = vadd.f32 0.0, %v959
        %v961 = vpop.f32.mrb[0].mxu0
        %v962 = vadd.f32 0.0, %v961
        %v963 = vpop.f32.mrb[0].mxu0
        %v964 = vadd.f32 0.0, %v963
        %965 = vmatprep.mubr.bf16.mxu0 0
        %966 = vmatmul.mubr.bf16.gmra.mrb[0].mxu0 %v749
        %v967 = vpop.f32.mrb[0].mxu0
        %v968 = vadd.f32 0.0, %v967
        %v969 = vpop.f32.mrb[0].mxu0
        %v970 = vadd.f32 0.0, %v969
        %v971 = vpop.f32.mrb[0].mxu0
        %v972 = vadd.f32 0.0, %v971
        %v973 = vpop.f32.mrb[0].mxu0
        %v974 = vadd.f32 0.0, %v973
        %975 = vmatprep.mubr.bf16.mxu0 0
        %976 = vmatmul.mubr.bf16.gmra.mrb[0].mxu0 %v750
        %v977 = vpop.f32.mrb[0].mxu0
        %v978 = vadd.f32 0.0, %v977
        %v979 = vpop.f32.mrb[0].mxu0
        %v980 = vadd.f32 0.0, %v979
        %v981 = vpop.f32.mrb[0].mxu0
        %v982 = vadd.f32 0.0, %v981
        %v983 = vpop.f32.mrb[0].mxu0
        %v984 = vadd.f32 0.0, %v983
        %985 = vmatprep.mubr.bf16.mxu0 0
        %986 = vmatmul.mubr.bf16.gmra.mrb[0].mxu0 %v751
        %v987 = vpop.f32.mrb[0].mxu0
        %v988 = vadd.f32 0.0, %v987
        %v989 = vpop.f32.mrb[0].mxu0
        %v990 = vadd.f32 0.0, %v989
        %v991 = vpop.f32.mrb[0].mxu0
        %v992 = vadd.f32 0.0, %v991
        %v993 = vpop.f32.mrb[0].mxu0
        %v994 = vadd.f32 0.0, %v993
        %995 = vmatprep.mubr.bf16.mxu0 0
        %996 = vmatmul.mubr.bf16.gmra.mrb[0].mxu0 %v752
        %v997 = vpop.f32.mrb[0].mxu0
        %v998 = vadd.f32 0.0, %v997
        %v999 = vpop.f32.mrb[0].mxu0
        %v1000 = vadd.f32 0.0, %v999
        %v1001 = vpop.f32.mrb[0].mxu0
        %v1002 = vadd.f32 0.0, %v1001
        %v1003 = vpop.f32.mrb[0].mxu0
        %v1004 = vadd.f32 0.0, %v1003
        %1005 = vmatprep.mubr.bf16.mxu0 0
        %1006 = vmatmul.mubr.bf16.gmra.mrb[0].mxu0 %v753
        %v1007 = vpop.f32.mrb[0].mxu0
        %v1008 = vadd.f32 0.0, %v1007
        %v1009 = vpop.f32.mrb[0].mxu0
        %v1010 = vadd.f32 0.0, %v1009
        %v1011 = vpop.f32.mrb[0].mxu0
        %v1012 = vadd.f32 0.0, %v1011
        %v1013 = vpop.f32.mrb[0].mxu0
        %v1014 = vadd.f32 0.0, %v1013
        %1015 = vmatprep.mubr.bf16.mxu0 0
        %1016 = vmatmul.mubr.bf16.gmra.mrb[0].mxu0 %v754
        %v1017 = vpop.f32.mrb[0].mxu0
        %v1018 = vadd.f32 0.0, %v1017
        %v1019 = vpop.f32.mrb[0].mxu0
        %v1020 = vadd.f32 0.0, %v1019
        %v1021 = vpop.f32.mrb[0].mxu0
        %v1022 = vadd.f32 0.0, %v1021
        %v1023 = vpop.f32.mrb[0].mxu0
        %v1024 = vadd.f32 0.0, %v1023
        %1025 = vmatprep.mubr.bf16.mxu0 0
        %1026 = vmatmul.mubr.bf16.gmra.mrb[0].mxu0 %v755
        %v1027 = vpop.f32.mrb[0].mxu0
        %v1028 = vadd.f32 0.0, %v1027
        %v1029 = vpop.f32.mrb[0].mxu0
        %v1030 = vadd.f32 0.0, %v1029
        %v1031 = vpop.f32.mrb[0].mxu0
        %v1032 = vadd.f32 0.0, %v1031
        %v1033 = vpop.f32.mrb[0].mxu0
        %v1034 = vadd.f32 0.0, %v1033
        %1035 = vmatprep.mubr.bf16.mxu0 0
        %1036 = vmatmul.mubr.bf16.gmra.mrb[0].mxu0 %v756
        %v1037 = vpop.f32.mrb[0].mxu0
        %v1038 = vadd.f32 0.0, %v1037
        %v1039 = vpop.f32.mrb[0].mxu0
        %v1040 = vadd.f32 0.0, %v1039
        %v1041 = vpop.f32.mrb[0].mxu0
        %v1042 = vadd.f32 0.0, %v1041
        %v1043 = vpop.f32.mrb[0].mxu0
        %v1044 = vadd.f32 0.0, %v1043
        %1045 = vdwg.mxu0
        %v1046 = vld [vmem:[%s624] sm:$0xf]
        %v1047 = vld [vmem:[%s624 + $0x4] sm:$0xf]
        %v1048 = vld [vmem:[%s624 + $0x8] sm:$0xf]
        %v1049 = vld [vmem:[%s624 + $0xc] sm:$0xf]
        %v1050 = vld [vmem:[%s624 + $0x10] sm:$0xf]
        %v1051 = vld [vmem:[%s624 + $0x14] sm:$0xf]
        %v1052 = vld [vmem:[%s624 + $0x18] sm:$0xf]
        %v1053 = vld [vmem:[%s624 + $0x1c] sm:$0xf]
        %v1054 = vld [vmem:[%s624 + $0x20] sm:$0xf]
        %v1055 = vld [vmem:[%s624 + $0x24] sm:$0xf]
        %v1056 = vld [vmem:[%s624 + $0x28] sm:$0xf]
        %v1057 = vld [vmem:[%s624 + $0x2c] sm:$0xf]
        %v1058 = vld [vmem:[%s624 + $0x30] sm:$0xf]
        %v1059 = vld [vmem:[%s624 + $0x34] sm:$0xf]
        %v1060 = vld [vmem:[%s624 + $0x38] sm:$0xf]
        %v1061 = vld [vmem:[%s624 + $0x3c] sm:$0xf]
        %v1062 = vld [vmem:[%s624 + $0x40] sm:$0xf]
        %v1063 = vld [vmem:[%s624 + $0x44] sm:$0xf]
        %v1064 = vld [vmem:[%s624 + $0x48] sm:$0xf]
        %v1065 = vld [vmem:[%s624 + $0x4c] sm:$0xf]
        %v1066 = vld [vmem:[%s624 + $0x50] sm:$0xf]
        %v1067 = vld [vmem:[%s624 + $0x54] sm:$0xf]
        %v1068 = vld [vmem:[%s624 + $0x58] sm:$0xf]
        %v1069 = vld [vmem:[%s624 + $0x5c] sm:$0xf]
        %v1070 = vld [vmem:[%s624 + $0x60] sm:$0xf]
        %v1071 = vld [vmem:[%s624 + $0x64] sm:$0xf]
        %v1072 = vld [vmem:[%s624 + $0x68] sm:$0xf]
        %v1073 = vld [vmem:[%s624 + $0x6c] sm:$0xf]
        %v1074 = vld [vmem:[%s624 + $0x70] sm:$0xf]
        %v1075 = vld [vmem:[%s624 + $0x74] sm:$0xf]
        %v1076 = vld [vmem:[%s624 + $0x78] sm:$0xf]
        %v1077 = vld [vmem:[%s624 + $0x7c] sm:$0xf]
        %v1078 = vld [vmem:[#allocation7] sm:$0xf]
        %v1079 = vld [vmem:[#allocation7 + $0x4] sm:$0xf]
        %v1112 = vunpack.c.l.b16 %v1046
        %v1113 = vunpack.c.l.b16 %v1047
        %v1114 = vunpack.c.l.b16 %v1048
        %v1115 = vunpack.c.l.b16 %v1049
        %v1116 = vunpack.c.l.b16 %v1050
        %v1117 = vunpack.c.l.b16 %v1051
        %v1118 = vunpack.c.l.b16 %v1052
        %v1119 = vunpack.c.l.b16 %v1053
        %v1120 = vunpack.c.l.b16 %v1054
        %v1121 = vunpack.c.l.b16 %v1055
        %v1122 = vunpack.c.l.b16 %v1056
        %v1123 = vunpack.c.l.b16 %v1057
        %v1124 = vunpack.c.l.b16 %v1058
        %v1125 = vunpack.c.l.b16 %v1059
        %v1126 = vunpack.c.l.b16 %v1060
        %v1127 = vunpack.c.l.b16 %v1061
        %v1128 = vunpack.c.l.b16 %v1062
        %v1129 = vunpack.c.l.b16 %v1063
        %v1130 = vunpack.c.l.b16 %v1064
        %v1131 = vunpack.c.l.b16 %v1065
        %v1132 = vunpack.c.l.b16 %v1066
        %v1133 = vunpack.c.l.b16 %v1067
        %v1134 = vunpack.c.l.b16 %v1068
        %v1135 = vunpack.c.l.b16 %v1069
        %v1136 = vunpack.c.l.b16 %v1070
        %v1137 = vunpack.c.l.b16 %v1071
        %v1138 = vunpack.c.l.b16 %v1072
        %v1139 = vunpack.c.l.b16 %v1073
        %v1140 = vunpack.c.l.b16 %v1074
        %v1141 = vunpack.c.l.b16 %v1075
        %v1142 = vunpack.c.l.b16 %v1076
        %v1143 = vunpack.c.l.b16 %v1077
        %v1144 = vpack.c.b16 %v1113, %v1112
        %v1145 = vpack.c.b16 %v1115, %v1114
        %v1146 = vpack.c.b16 %v1117, %v1116
        %v1147 = vpack.c.b16 %v1119, %v1118
        %v1148 = vpack.c.b16 %v1121, %v1120
        %v1149 = vpack.c.b16 %v1123, %v1122
        %v1150 = vpack.c.b16 %v1125, %v1124
        %v1151 = vpack.c.b16 %v1127, %v1126
        %v1152 = vpack.c.b16 %v1129, %v1128
        %v1153 = vpack.c.b16 %v1131, %v1130
        %v1154 = vpack.c.b16 %v1133, %v1132
        %v1155 = vpack.c.b16 %v1135, %v1134
        %v1156 = vpack.c.b16 %v1137, %v1136
        %v1157 = vpack.c.b16 %v1139, %v1138
        %v1158 = vpack.c.b16 %v1141, %v1140
        %v1159 = vpack.c.b16 %v1143, %v1142
        %v1162 = vunpack.c.l.b16 %v1078
        %v1163 = vunpack.c.l.b16 %v1079
        %v1164 = vpack.c.b16 %v1163, %v1162
        %vm1166 = vcmask 130048
        %v1168 = vsel %vm1166, %v1144, 0
        %v1171 = vsel %vm1166, %v1145, 0
        %v1174 = vsel %vm1166, %v1146, 0
        %v1177 = vsel %vm1166, %v1147, 0
        %v1180 = vsel %vm1166, %v1148, 0
        %v1183 = vsel %vm1166, %v1149, 0
        %v1186 = vsel %vm1166, %v1150, 0
        %v1189 = vsel %vm1166, %v1151, 0
        %v1192 = vsel %vm1166, %v1152, 0
        %v1195 = vsel %vm1166, %v1153, 0
        %v1198 = vsel %vm1166, %v1154, 0
        %v1201 = vsel %vm1166, %v1155, 0
        %v1204 = vsel %vm1166, %v1156, 0
        %v1207 = vsel %vm1166, %v1157, 0
        %v1210 = vsel %vm1166, %v1158, 0
        %v1213 = vsel %vm1166, %v1159, 0
        %1215 = vmatprep.subr.bf16.mxu0 0
        %1216 = vmatpush1.bf16.msra.mxu0 %v1164
        %1217 = vmatprep.subr.bf16.mxu0 0
        %1218 = vmatpush1.bf16.msra.mxu0 0
        %1219 = vmatprep.subr.bf16.mxu0 0
        %1220 = vmatpush1.bf16.msra.mxu0 0
        %1221 = vmatprep.subr.bf16.mxu0 0
        %1222 = vmatpush1.bf16.msra.mxu0 0
        %1223 = vmatprep.subr.bf16.mxu0 0
        %1224 = vmatpush1.bf16.msra.mxu0 0
        %1225 = vmatprep.subr.bf16.mxu0 0
        %1226 = vmatpush1.bf16.msra.mxu0 0
        %1227 = vmatprep.subr.bf16.mxu0 0
        %1228 = vmatpush1.bf16.msra.mxu0 0
        %1229 = vmatprep.subr.bf16.mxu0 0
        %1230 = vmatpush1.bf16.msra.mxu0 0
        %1231 = vmatprep.subr.bf16.mxu0 0
        %1232 = vmatpush1.bf16.msra.mxu0 0
        %1233 = vmatprep.subr.bf16.mxu0 0
        %1234 = vmatpush1.bf16.msra.mxu0 0
        %1235 = vmatprep.subr.bf16.mxu0 0
        %1236 = vmatpush1.bf16.msra.mxu0 0
        %1237 = vmatprep.subr.bf16.mxu0 0
        %1238 = vmatpush1.bf16.msra.mxu0 0
        %1239 = vmatprep.subr.bf16.mxu0 0
        %1240 = vmatpush1.bf16.msra.mxu0 0
        %1241 = vmatprep.subr.bf16.mxu0 0
        %1242 = vmatpush1.bf16.msra.mxu0 0
        %1243 = vmatprep.subr.bf16.mxu0 0
        %1244 = vmatpush1.bf16.msra.mxu0 0
        %1245 = vmatprep.subr.bf16.mxu0 0
        %1246 = vmatpush1.bf16.msra.mxu0 0
        %1247 = vmatprep.mubr.bf16.mxu0 0
        %1248 = vmatmul.mubr.bf16.gmra.mrb[0].mxu0 %v1168
        %v1249 = vpop.f32.mrb[0].mxu0
        %v1250 = vadd.f32 0.0, %v1249
        %v1251 = vpop.f32.mrb[0].mxu0
        %v1252 = vpop.f32.mrb[0].mxu0
        %v1253 = vadd.f32 0.0, %v1252
        %v1254 = vpop.f32.mrb[0].mxu0
        %1255 = vmatprep.mubr.bf16.mxu0 0
        %1256 = vmatmul.mubr.bf16.gmra.mrb[0].mxu0 %v1171
        %v1257 = vpop.f32.mrb[0].mxu0
        %v1258 = vadd.f32 0.0, %v1257
        %v1259 = vpop.f32.mrb[0].mxu0
        %v1260 = vpop.f32.mrb[0].mxu0
        %v1261 = vadd.f32 0.0, %v1260
        %v1262 = vpop.f32.mrb[0].mxu0
        %1263 = vmatprep.mubr.bf16.mxu0 0
        %1264 = vmatmul.mubr.bf16.gmra.mrb[0].mxu0 %v1174
        %v1265 = vpop.f32.mrb[0].mxu0
        %v1266 = vadd.f32 0.0, %v1265
        %v1267 = vpop.f32.mrb[0].mxu0
        %v1268 = vpop.f32.mrb[0].mxu0
        %v1269 = vadd.f32 0.0, %v1268
        %v1270 = vpop.f32.mrb[0].mxu0
        %1271 = vmatprep.mubr.bf16.mxu0 0
        %1272 = vmatmul.mubr.bf16.gmra.mrb[0].mxu0 %v1177
        %v1273 = vpop.f32.mrb[0].mxu0
        %v1274 = vadd.f32 0.0, %v1273
        %v1275 = vpop.f32.mrb[0].mxu0
        %v1276 = vpop.f32.mrb[0].mxu0
        %v1277 = vadd.f32 0.0, %v1276
        %v1278 = vpop.f32.mrb[0].mxu0
        %1279 = vmatprep.mubr.bf16.mxu0 0
        %1280 = vmatmul.mubr.bf16.gmra.mrb[0].mxu0 %v1180
        %v1281 = vpop.f32.mrb[0].mxu0
        %v1282 = vadd.f32 0.0, %v1281
        %v1283 = vpop.f32.mrb[0].mxu0
        %v1284 = vpop.f32.mrb[0].mxu0
        %v1285 = vadd.f32 0.0, %v1284
        %v1286 = vpop.f32.mrb[0].mxu0
        %1287 = vmatprep.mubr.bf16.mxu0 0
        %1288 = vmatmul.mubr.bf16.gmra.mrb[0].mxu0 %v1183
        %v1289 = vpop.f32.mrb[0].mxu0
        %v1290 = vadd.f32 0.0, %v1289
        %v1291 = vpop.f32.mrb[0].mxu0
        %v1292 = vpop.f32.mrb[0].mxu0
        %v1293 = vadd.f32 0.0, %v1292
        %v1294 = vpop.f32.mrb[0].mxu0
        %1295 = vmatprep.mubr.bf16.mxu0 0
        %1296 = vmatmul.mubr.bf16.gmra.mrb[0].mxu0 %v1186
        %v1297 = vpop.f32.mrb[0].mxu0
        %v1298 = vadd.f32 0.0, %v1297
        %v1299 = vpop.f32.mrb[0].mxu0
        %v1300 = vpop.f32.mrb[0].mxu0
        %v1301 = vadd.f32 0.0, %v1300
        %v1302 = vpop.f32.mrb[0].mxu0
        %1303 = vmatprep.mubr.bf16.mxu0 0
        %1304 = vmatmul.mubr.bf16.gmra.mrb[0].mxu0 %v1189
        %v1305 = vpop.f32.mrb[0].mxu0
        %v1306 = vadd.f32 0.0, %v1305
        %v1307 = vpop.f32.mrb[0].mxu0
        %v1308 = vpop.f32.mrb[0].mxu0
        %v1309 = vadd.f32 0.0, %v1308
        %v1310 = vpop.f32.mrb[0].mxu0
        %1311 = vmatprep.mubr.bf16.mxu0 0
        %1312 = vmatmul.mubr.bf16.gmra.mrb[0].mxu0 %v1192
        %v1313 = vpop.f32.mrb[0].mxu0
        %v1314 = vadd.f32 0.0, %v1313
        %v1315 = vpop.f32.mrb[0].mxu0
        %v1316 = vpop.f32.mrb[0].mxu0
        %v1317 = vadd.f32 0.0, %v1316
        %v1318 = vpop.f32.mrb[0].mxu0
        %1319 = vmatprep.mubr.bf16.mxu0 0
        %1320 = vmatmul.mubr.bf16.gmra.mrb[0].mxu0 %v1195
        %v1321 = vpop.f32.mrb[0].mxu0
        %v1322 = vadd.f32 0.0, %v1321
        %v1323 = vpop.f32.mrb[0].mxu0
        %v1324 = vpop.f32.mrb[0].mxu0
        %v1325 = vadd.f32 0.0, %v1324
        %v1326 = vpop.f32.mrb[0].mxu0
        %1327 = vmatprep.mubr.bf16.mxu0 0
        %1328 = vmatmul.mubr.bf16.gmra.mrb[0].mxu0 %v1198
        %v1329 = vpop.f32.mrb[0].mxu0
        %v1330 = vadd.f32 0.0, %v1329
        %v1331 = vpop.f32.mrb[0].mxu0
        %v1332 = vpop.f32.mrb[0].mxu0
        %v1333 = vadd.f32 0.0, %v1332
        %v1334 = vpop.f32.mrb[0].mxu0
        %1335 = vmatprep.mubr.bf16.mxu0 0
        %1336 = vmatmul.mubr.bf16.gmra.mrb[0].mxu0 %v1201
        %v1337 = vpop.f32.mrb[0].mxu0
        %v1338 = vadd.f32 0.0, %v1337
        %v1339 = vpop.f32.mrb[0].mxu0
        %v1340 = vpop.f32.mrb[0].mxu0
        %v1341 = vadd.f32 0.0, %v1340
        %v1342 = vpop.f32.mrb[0].mxu0
        %1343 = vmatprep.mubr.bf16.mxu0 0
        %1344 = vmatmul.mubr.bf16.gmra.mrb[0].mxu0 %v1204
        %v1345 = vpop.f32.mrb[0].mxu0
        %v1346 = vadd.f32 0.0, %v1345
        %v1347 = vpop.f32.mrb[0].mxu0
        %v1348 = vpop.f32.mrb[0].mxu0
        %v1349 = vadd.f32 0.0, %v1348
        %v1350 = vpop.f32.mrb[0].mxu0
        %1351 = vmatprep.mubr.bf16.mxu0 0
        %1352 = vmatmul.mubr.bf16.gmra.mrb[0].mxu0 %v1207
        %v1353 = vpop.f32.mrb[0].mxu0
        %v1354 = vadd.f32 0.0, %v1353
        %v1355 = vpop.f32.mrb[0].mxu0
        %v1356 = vpop.f32.mrb[0].mxu0
        %v1357 = vadd.f32 0.0, %v1356
        %v1358 = vpop.f32.mrb[0].mxu0
        %1359 = vmatprep.mubr.bf16.mxu0 0
        %1360 = vmatmul.mubr.bf16.gmra.mrb[0].mxu0 %v1210
        %v1361 = vpop.f32.mrb[0].mxu0
        %v1362 = vadd.f32 0.0, %v1361
        %v1363 = vpop.f32.mrb[0].mxu0
        %v1364 = vpop.f32.mrb[0].mxu0
        %v1365 = vadd.f32 0.0, %v1364
        %v1366 = vpop.f32.mrb[0].mxu0
        %1367 = vmatprep.mubr.bf16.mxu0 0
        %1368 = vmatmul.mubr.bf16.gmra.mrb[0].mxu0 %v1213
        %v1369 = vpop.f32.mrb[0].mxu0
        %v1370 = vadd.f32 0.0, %v1369
        %v1371 = vpop.f32.mrb[0].mxu0
        %v1372 = vpop.f32.mrb[0].mxu0
        %v1373 = vadd.f32 0.0, %v1372
        %v1374 = vpop.f32.mrb[0].mxu0
        %1375 = vdwg.mxu0
        %v1376 = vpack.c.bf16 %v892, %v888
        %v1377 = vpack.c.bf16 %v894, %v890
        %v1378 = vpack.c.bf16 %v902, %v898
        %v1379 = vpack.c.bf16 %v904, %v900
        %v1380 = vpack.c.bf16 %v912, %v908
        %v1381 = vpack.c.bf16 %v914, %v910
        %v1382 = vpack.c.bf16 %v922, %v918
        %v1383 = vpack.c.bf16 %v924, %v920
        %v1384 = vpack.c.bf16 %v932, %v928
        %v1385 = vpack.c.bf16 %v934, %v930
        %v1386 = vpack.c.bf16 %v942, %v938
        %v1387 = vpack.c.bf16 %v944, %v940
        %v1388 = vpack.c.bf16 %v952, %v948
        %v1389 = vpack.c.bf16 %v954, %v950
        %v1390 = vpack.c.bf16 %v962, %v958
        %v1391 = vpack.c.bf16 %v964, %v960
        %v1392 = vpack.c.bf16 %v972, %v968
        %v1393 = vpack.c.bf16 %v974, %v970
        %v1394 = vpack.c.bf16 %v982, %v978
        %v1395 = vpack.c.bf16 %v984, %v980
        %v1396 = vpack.c.bf16 %v992, %v988
        %v1397 = vpack.c.bf16 %v994, %v990
        %v1398 = vpack.c.bf16 %v1002, %v998
        %v1399 = vpack.c.bf16 %v1004, %v1000
        %v1400 = vpack.c.bf16 %v1012, %v1008
        %v1401 = vpack.c.bf16 %v1014, %v1010
        %v1402 = vpack.c.bf16 %v1022, %v1018
        %v1403 = vpack.c.bf16 %v1024, %v1020
        %v1404 = vpack.c.bf16 %v1032, %v1028
        %v1405 = vpack.c.bf16 %v1034, %v1030
        %v1406 = vpack.c.bf16 %v1042, %v1038
        %v1407 = vpack.c.bf16 %v1044, %v1040
        %v1408 = vld [vmem:[#allocation8] sm:$0xff]
        %v1409 = vld [vmem:[#allocation8 + $0x8] sm:$0xff]
        %v1410 = vld [vmem:[#allocation8 + $0x10] sm:$0xff]
        %v1411 = vld [vmem:[#allocation8 + $0x18] sm:$0xff]
        %v1412 = vld [vmem:[#allocation8 + $0x20] sm:$0xff]
        %v1413 = vld [vmem:[#allocation8 + $0x28] sm:$0xff]
        %v1414 = vld [vmem:[#allocation8 + $0x30] sm:$0xff]
        %v1415 = vld [vmem:[#allocation8 + $0x38] sm:$0xff]
        %v1416 = vld [vmem:[#allocation8 + $0x40] sm:$0xff]
        %v1417 = vld [vmem:[#allocation8 + $0x48] sm:$0xff]
        %v1418 = vld [vmem:[#allocation8 + $0x50] sm:$0xff]
        %v1419 = vld [vmem:[#allocation8 + $0x58] sm:$0xff]
        %v1420 = vld [vmem:[#allocation8 + $0x60] sm:$0xff]
        %v1421 = vld [vmem:[#allocation8 + $0x68] sm:$0xff]
        %v1422 = vld [vmem:[#allocation8 + $0x70] sm:$0xff]
        %v1423 = vld [vmem:[#allocation8 + $0x78] sm:$0xff]
        %v1424 = vld [vmem:[#allocation8 + $0x80] sm:$0xff]
        %v1425 = vld [vmem:[#allocation8 + $0x88] sm:$0xff]
        %v1426 = vld [vmem:[#allocation8 + $0x90] sm:$0xff]
        %v1427 = vld [vmem:[#allocation8 + $0x98] sm:$0xff]
        %v1428 = vld [vmem:[#allocation8 + $0xa0] sm:$0xff]
        %v1429 = vld [vmem:[#allocation8 + $0xa8] sm:$0xff]
        %v1430 = vld [vmem:[#allocation8 + $0xb0] sm:$0xff]
        %v1431 = vld [vmem:[#allocation8 + $0xb8] sm:$0xff]
        %v1432 = vld [vmem:[#allocation8 + $0xc0] sm:$0xff]
        %v1433 = vld [vmem:[#allocation8 + $0xc8] sm:$0xff]
        %v1434 = vld [vmem:[#allocation8 + $0xd0] sm:$0xff]
        %v1435 = vld [vmem:[#allocation8 + $0xd8] sm:$0xff]
        %v1436 = vld [vmem:[#allocation8 + $0xe0] sm:$0xff]
        %v1437 = vld [vmem:[#allocation8 + $0xe8] sm:$0xff]
        %v1438 = vld [vmem:[#allocation8 + $0xf0] sm:$0xff]
        %v1439 = vld [vmem:[#allocation8 + $0xf8] sm:$0xff]
        %v1440 = vpack.c.bf16 %v1253, %v1250
        %v1441 = vpack.c.bf16 %v1261, %v1258
        %v1442 = vpack.c.bf16 %v1269, %v1266
        %v1443 = vpack.c.bf16 %v1277, %v1274
        %v1444 = vpack.c.bf16 %v1285, %v1282
        %v1445 = vpack.c.bf16 %v1293, %v1290
        %v1446 = vpack.c.bf16 %v1301, %v1298
        %v1447 = vpack.c.bf16 %v1309, %v1306
        %v1448 = vpack.c.bf16 %v1317, %v1314
        %v1449 = vpack.c.bf16 %v1325, %v1322
        %v1450 = vpack.c.bf16 %v1333, %v1330
        %v1451 = vpack.c.bf16 %v1341, %v1338
        %v1452 = vpack.c.bf16 %v1349, %v1346
        %v1453 = vpack.c.bf16 %v1357, %v1354
        %v1454 = vpack.c.bf16 %v1365, %v1362
        %v1455 = vpack.c.bf16 %v1373, %v1370
        %v1456 = vld [vmem:[#allocation10] sm:$0xff]
        %v1457 = vld [vmem:[#allocation10 + $0x8] sm:$0xff]
        %v1458 = vld [vmem:[#allocation10 + $0x10] sm:$0xff]
        %v1459 = vld [vmem:[#allocation10 + $0x18] sm:$0xff]
        %v1460 = vld [vmem:[#allocation10 + $0x20] sm:$0xff]
        %v1461 = vld [vmem:[#allocation10 + $0x28] sm:$0xff]
        %v1468 = vunpack.c.l.b16 %v1456
        %v1469 = vunpack.c.h.b16 %v1456
        %v1470 = vunpack.c.l.b16 %v1457
        %v1471 = vunpack.c.h.b16 %v1457
        %v1472 = vunpack.c.l.b16 %v1458
        %v1473 = vunpack.c.h.b16 %v1458
        %v1474 = vunpack.c.l.b16 %v1459
        %v1475 = vunpack.c.h.b16 %v1459
        %v1476 = vunpack.c.l.b16 %v1460
        %v1477 = vunpack.c.h.b16 %v1460
        %v1478 = vunpack.c.l.b16 %v1461
        %v1479 = vunpack.c.h.b16 %v1461
        %v1480 = vpack.c.b16 %v1470, %v1468
        %v1481 = vpack.c.b16 %v1471, %v1469
        %v1482 = vpack.c.b16 %v1474, %v1472
        %v1483 = vpack.c.b16 %v1475, %v1473
        %v1484 = vpack.c.b16 %v1478, %v1476
        %v1485 = vpack.c.b16 %v1479, %v1477
        %vm1492 = vcmask 392192
        %v1494 = vsel %vm1492, %v1440, 0
        %v1497 = vsel %vm1492, %v1441, 0
        %v1500 = vsel %vm1492, %v1442, 0
        %v1503 = vsel %vm1492, %v1443, 0
        %v1506 = vsel %vm1492, %v1444, 0
        %v1509 = vsel %vm1492, %v1445, 0
        %v1512 = vsel %vm1492, %v1446, 0
        %v1515 = vsel %vm1492, %v1447, 0
        %v1518 = vsel %vm1492, %v1448, 0
        %v1521 = vsel %vm1492, %v1449, 0
        %v1524 = vsel %vm1492, %v1450, 0
        %v1527 = vsel %vm1492, %v1451, 0
        %v1530 = vsel %vm1492, %v1452, 0
        %v1533 = vsel %vm1492, %v1453, 0
        %v1536 = vsel %vm1492, %v1454, 0
        %v1539 = vsel %vm1492, %v1455, 0
        %1541 = vmatprep.subr.bf16.mxu0 %v1481
        %1542 = vmatpush1.bf16.msra.mxu0 %v1480
        %1543 = vmatprep.subr.bf16.mxu0 %v1483
        %1544 = vmatpush1.bf16.msra.mxu0 %v1482
        %1545 = vmatprep.subr.bf16.mxu0 %v1485
        %1546 = vmatpush1.bf16.msra.mxu0 %v1484
        %1547 = vmatprep.subr.bf16.mxu0 0
        %1548 = vmatpush1.bf16.msra.mxu0 0
        %1549 = vmatprep.subr.bf16.mxu0 0
        %1550 = vmatpush1.bf16.msra.mxu0 0
        %1551 = vmatprep.subr.bf16.mxu0 0
        %1552 = vmatpush1.bf16.msra.mxu0 0
        %1553 = vmatprep.subr.bf16.mxu0 0
        %1554 = vmatpush1.bf16.msra.mxu0 0
        %1555 = vmatprep.subr.bf16.mxu0 0
        %1556 = vmatpush1.bf16.msra.mxu0 0
        %1557 = vmatprep.subr.bf16.mxu0 0
        %1558 = vmatpush1.bf16.msra.mxu0 0
        %1559 = vmatprep.subr.bf16.mxu0 0
        %1560 = vmatpush1.bf16.msra.mxu0 0
        %1561 = vmatprep.subr.bf16.mxu0 0
        %1562 = vmatpush1.bf16.msra.mxu0 0
        %1563 = vmatprep.subr.bf16.mxu0 0
        %1564 = vmatpush1.bf16.msra.mxu0 0
        %1565 = vmatprep.subr.bf16.mxu0 0
        %1566 = vmatpush1.bf16.msra.mxu0 0
        %1567 = vmatprep.subr.bf16.mxu0 0
        %1568 = vmatpush1.bf16.msra.mxu0 0
        %1569 = vmatprep.subr.bf16.mxu0 0
        %1570 = vmatpush1.bf16.msra.mxu0 0
        %1571 = vmatprep.subr.bf16.mxu0 0
        %1572 = vmatpush1.bf16.msra.mxu0 0
        %1573 = vmatprep.mubr.bf16.mxu0 0
        %1574 = vmatmul.mubr.bf16.gmra.mrb[0].mxu0 %v1494
        %v1575 = vpop.f32.mrb[0].mxu0
        %v1576 = vadd.f32 0.0, %v1575
        %v1577 = vpop.f32.mrb[0].mxu0
        %v1578 = vadd.f32 0.0, %v1577
        %v1579 = vpop.f32.mrb[0].mxu0
        %v1580 = vadd.f32 0.0, %v1579
        %v1581 = vpop.f32.mrb[0].mxu0
        %v1582 = vadd.f32 0.0, %v1581
        %1583 = vmatprep.mubr.bf16.mxu0 0
        %1584 = vmatmul.mubr.bf16.gmra.mrb[0].mxu0 %v1497
        %v1585 = vpop.f32.mrb[0].mxu0
        %v1586 = vadd.f32 0.0, %v1585
        %v1587 = vpop.f32.mrb[0].mxu0
        %v1588 = vadd.f32 0.0, %v1587
        %v1589 = vpop.f32.mrb[0].mxu0
        %v1590 = vadd.f32 0.0, %v1589
        %v1591 = vpop.f32.mrb[0].mxu0
        %v1592 = vadd.f32 0.0, %v1591
        %1593 = vmatprep.mubr.bf16.mxu0 0
        %1594 = vmatmul.mubr.bf16.gmra.mrb[0].mxu0 %v1500
        %v1595 = vpop.f32.mrb[0].mxu0
        %v1596 = vadd.f32 0.0, %v1595
        %v1597 = vpop.f32.mrb[0].mxu0
        %v1598 = vadd.f32 0.0, %v1597
        %v1599 = vpop.f32.mrb[0].mxu0
        %v1600 = vadd.f32 0.0, %v1599
        %v1601 = vpop.f32.mrb[0].mxu0
        %v1602 = vadd.f32 0.0, %v1601
        %1603 = vmatprep.mubr.bf16.mxu0 0
        %1604 = vmatmul.mubr.bf16.gmra.mrb[0].mxu0 %v1503
        %v1605 = vpop.f32.mrb[0].mxu0
        %v1606 = vadd.f32 0.0, %v1605
        %v1607 = vpop.f32.mrb[0].mxu0
        %v1608 = vadd.f32 0.0, %v1607
        %v1609 = vpop.f32.mrb[0].mxu0
        %v1610 = vadd.f32 0.0, %v1609
        %v1611 = vpop.f32.mrb[0].mxu0
        %v1612 = vadd.f32 0.0, %v1611
        %1613 = vmatprep.mubr.bf16.mxu0 0
        %1614 = vmatmul.mubr.bf16.gmra.mrb[0].mxu0 %v1506
        %v1615 = vpop.f32.mrb[0].mxu0
        %v1616 = vadd.f32 0.0, %v1615
        %v1617 = vpop.f32.mrb[0].mxu0
        %v1618 = vadd.f32 0.0, %v1617
        %v1619 = vpop.f32.mrb[0].mxu0
        %v1620 = vadd.f32 0.0, %v1619
        %v1621 = vpop.f32.mrb[0].mxu0
        %v1622 = vadd.f32 0.0, %v1621
        %1623 = vmatprep.mubr.bf16.mxu0 0
        %1624 = vmatmul.mubr.bf16.gmra.mrb[0].mxu0 %v1509
        %v1625 = vpop.f32.mrb[0].mxu0
        %v1626 = vadd.f32 0.0, %v1625
        %v1627 = vpop.f32.mrb[0].mxu0
        %v1628 = vadd.f32 0.0, %v1627
        %v1629 = vpop.f32.mrb[0].mxu0
        %v1630 = vadd.f32 0.0, %v1629
        %v1631 = vpop.f32.mrb[0].mxu0
        %v1632 = vadd.f32 0.0, %v1631
        %1633 = vmatprep.mubr.bf16.mxu0 0
        %1634 = vmatmul.mubr.bf16.gmra.mrb[0].mxu0 %v1512
        %v1635 = vpop.f32.mrb[0].mxu0
        %v1636 = vadd.f32 0.0, %v1635
        %v1637 = vpop.f32.mrb[0].mxu0
        %v1638 = vadd.f32 0.0, %v1637
        %v1639 = vpop.f32.mrb[0].mxu0
        %v1640 = vadd.f32 0.0, %v1639
        %v1641 = vpop.f32.mrb[0].mxu0
        %v1642 = vadd.f32 0.0, %v1641
        %1643 = vmatprep.mubr.bf16.mxu0 0
        %1644 = vmatmul.mubr.bf16.gmra.mrb[0].mxu0 %v1515
        %v1645 = vpop.f32.mrb[0].mxu0
        %v1646 = vadd.f32 0.0, %v1645
        %v1647 = vpop.f32.mrb[0].mxu0
        %v1648 = vadd.f32 0.0, %v1647
        %v1649 = vpop.f32.mrb[0].mxu0
        %v1650 = vadd.f32 0.0, %v1649
        %v1651 = vpop.f32.mrb[0].mxu0
        %v1652 = vadd.f32 0.0, %v1651
        %1653 = vmatprep.mubr.bf16.mxu0 0
        %1654 = vmatmul.mubr.bf16.gmra.mrb[0].mxu0 %v1518
        %v1655 = vpop.f32.mrb[0].mxu0
        %v1656 = vadd.f32 0.0, %v1655
        %v1657 = vpop.f32.mrb[0].mxu0
        %v1658 = vadd.f32 0.0, %v1657
        %v1659 = vpop.f32.mrb[0].mxu0
        %v1660 = vadd.f32 0.0, %v1659
        %v1661 = vpop.f32.mrb[0].mxu0
        %v1662 = vadd.f32 0.0, %v1661
        %1663 = vmatprep.mubr.bf16.mxu0 0
        %1664 = vmatmul.mubr.bf16.gmra.mrb[0].mxu0 %v1521
        %v1665 = vpop.f32.mrb[0].mxu0
        %v1666 = vadd.f32 0.0, %v1665
        %v1667 = vpop.f32.mrb[0].mxu0
        %v1668 = vadd.f32 0.0, %v1667
        %v1669 = vpop.f32.mrb[0].mxu0
        %v1670 = vadd.f32 0.0, %v1669
        %v1671 = vpop.f32.mrb[0].mxu0
        %v1672 = vadd.f32 0.0, %v1671
        %1673 = vmatprep.mubr.bf16.mxu0 0
        %1674 = vmatmul.mubr.bf16.gmra.mrb[0].mxu0 %v1524
        %v1675 = vpop.f32.mrb[0].mxu0
        %v1676 = vadd.f32 0.0, %v1675
        %v1677 = vpop.f32.mrb[0].mxu0
        %v1678 = vadd.f32 0.0, %v1677
        %v1679 = vpop.f32.mrb[0].mxu0
        %v1680 = vadd.f32 0.0, %v1679
        %v1681 = vpop.f32.mrb[0].mxu0
        %v1682 = vadd.f32 0.0, %v1681
        %1683 = vmatprep.mubr.bf16.mxu0 0
        %1684 = vmatmul.mubr.bf16.gmra.mrb[0].mxu0 %v1527
        %v1685 = vpop.f32.mrb[0].mxu0
        %v1686 = vadd.f32 0.0, %v1685
        %v1687 = vpop.f32.mrb[0].mxu0
        %v1688 = vadd.f32 0.0, %v1687
        %v1689 = vpop.f32.mrb[0].mxu0
        %v1690 = vadd.f32 0.0, %v1689
        %v1691 = vpop.f32.mrb[0].mxu0
        %v1692 = vadd.f32 0.0, %v1691
        %1693 = vmatprep.mubr.bf16.mxu0 0
        %1694 = vmatmul.mubr.bf16.gmra.mrb[0].mxu0 %v1530
        %v1695 = vpop.f32.mrb[0].mxu0
        %v1696 = vadd.f32 0.0, %v1695
        %v1697 = vpop.f32.mrb[0].mxu0
        %v1698 = vadd.f32 0.0, %v1697
        %v1699 = vpop.f32.mrb[0].mxu0
        %v1700 = vadd.f32 0.0, %v1699
        %v1701 = vpop.f32.mrb[0].mxu0
        %v1702 = vadd.f32 0.0, %v1701
        %1703 = vmatprep.mubr.bf16.mxu0 0
        %1704 = vmatmul.mubr.bf16.gmra.mrb[0].mxu0 %v1533
        %v1705 = vpop.f32.mrb[0].mxu0
        %v1706 = vadd.f32 0.0, %v1705
        %v1707 = vpop.f32.mrb[0].mxu0
        %v1708 = vadd.f32 0.0, %v1707
        %v1709 = vpop.f32.mrb[0].mxu0
        %v1710 = vadd.f32 0.0, %v1709
        %v1711 = vpop.f32.mrb[0].mxu0
        %v1712 = vadd.f32 0.0, %v1711
        %1713 = vmatprep.mubr.bf16.mxu0 0
        %1714 = vmatmul.mubr.bf16.gmra.mrb[0].mxu0 %v1536
        %v1715 = vpop.f32.mrb[0].mxu0
        %v1716 = vadd.f32 0.0, %v1715
        %v1717 = vpop.f32.mrb[0].mxu0
        %v1718 = vadd.f32 0.0, %v1717
        %v1719 = vpop.f32.mrb[0].mxu0
        %v1720 = vadd.f32 0.0, %v1719
        %v1721 = vpop.f32.mrb[0].mxu0
        %v1722 = vadd.f32 0.0, %v1721
        %1723 = vmatprep.mubr.bf16.mxu0 0
        %1724 = vmatmul.mubr.bf16.gmra.mrb[0].mxu0 %v1539
        %v1725 = vpop.f32.mrb[0].mxu0
        %v1726 = vadd.f32 0.0, %v1725
        %v1727 = vpop.f32.mrb[0].mxu0
        %v1728 = vadd.f32 0.0, %v1727
        %v1729 = vpop.f32.mrb[0].mxu0
        %v1730 = vadd.f32 0.0, %v1729
        %v1731 = vpop.f32.mrb[0].mxu0
        %v1732 = vadd.f32 0.0, %v1731
        %1733 = vdwg.mxu0
        %v1766 = vunpack.c.l.b16 %v1408
        %v1767 = vunpack.c.h.b16 %v1408
        %v1768 = vunpack.c.l.b16 %v1409
        %v1769 = vunpack.c.h.b16 %v1409
        %v1770 = vunpack.c.l.b16 %v1410
        %v1771 = vunpack.c.h.b16 %v1410
        %v1772 = vunpack.c.l.b16 %v1411
        %v1773 = vunpack.c.h.b16 %v1411
        %v1774 = vunpack.c.l.b16 %v1412
        %v1775 = vunpack.c.h.b16 %v1412
        %v1776 = vunpack.c.l.b16 %v1413
        %v1777 = vunpack.c.h.b16 %v1413
        %v1778 = vunpack.c.l.b16 %v1414
        %v1779 = vunpack.c.h.b16 %v1414
        %v1780 = vunpack.c.l.b16 %v1415
        %v1781 = vunpack.c.h.b16 %v1415
        %v1782 = vunpack.c.l.b16 %v1416
        %v1783 = vunpack.c.h.b16 %v1416
        %v1784 = vunpack.c.l.b16 %v1417
        %v1785 = vunpack.c.h.b16 %v1417
        %v1786 = vunpack.c.l.b16 %v1418
        %v1787 = vunpack.c.h.b16 %v1418
        %v1788 = vunpack.c.l.b16 %v1419
        %v1789 = vunpack.c.h.b16 %v1419
        %v1790 = vunpack.c.l.b16 %v1420
        %v1791 = vunpack.c.h.b16 %v1420
        %v1792 = vunpack.c.l.b16 %v1421
        %v1793 = vunpack.c.h.b16 %v1421
        %v1794 = vunpack.c.l.b16 %v1422
        %v1795 = vunpack.c.h.b16 %v1422
        %v1796 = vunpack.c.l.b16 %v1423
        %v1797 = vunpack.c.h.b16 %v1423
        %v1798 = vunpack.c.l.b16 %v1424
        %v1799 = vunpack.c.h.b16 %v1424
        %v1800 = vunpack.c.l.b16 %v1425
        %v1801 = vunpack.c.h.b16 %v1425
        %v1802 = vunpack.c.l.b16 %v1426
        %v1803 = vunpack.c.h.b16 %v1426
        %v1804 = vunpack.c.l.b16 %v1427
        %v1805 = vunpack.c.h.b16 %v1427
        %v1806 = vunpack.c.l.b16 %v1428
        %v1807 = vunpack.c.h.b16 %v1428
        %v1808 = vunpack.c.l.b16 %v1429
        %v1809 = vunpack.c.h.b16 %v1429
        %v1810 = vunpack.c.l.b16 %v1430
        %v1811 = vunpack.c.h.b16 %v1430
        %v1812 = vunpack.c.l.b16 %v1431
        %v1813 = vunpack.c.h.b16 %v1431
        %v1814 = vunpack.c.l.b16 %v1432
        %v1815 = vunpack.c.h.b16 %v1432
        %v1816 = vunpack.c.l.b16 %v1433
        %v1817 = vunpack.c.h.b16 %v1433
        %v1818 = vunpack.c.l.b16 %v1434
        %v1819 = vunpack.c.h.b16 %v1434
        %v1820 = vunpack.c.l.b16 %v1435
        %v1821 = vunpack.c.h.b16 %v1435
        %v1822 = vunpack.c.l.b16 %v1436
        %v1823 = vunpack.c.h.b16 %v1436
        %v1824 = vunpack.c.l.b16 %v1437
        %v1825 = vunpack.c.h.b16 %v1437
        %v1826 = vunpack.c.l.b16 %v1438
        %v1827 = vunpack.c.h.b16 %v1438
        %v1828 = vunpack.c.l.b16 %v1439
        %v1829 = vunpack.c.h.b16 %v1439
        %v1830 = vpack.c.b16 %v1768, %v1766
        %v1831 = vpack.c.b16 %v1769, %v1767
        %v1832 = vpack.c.b16 %v1772, %v1770
        %v1833 = vpack.c.b16 %v1773, %v1771
        %v1834 = vpack.c.b16 %v1776, %v1774
        %v1835 = vpack.c.b16 %v1777, %v1775
        %v1836 = vpack.c.b16 %v1780, %v1778
        %v1837 = vpack.c.b16 %v1781, %v1779
        %v1838 = vpack.c.b16 %v1784, %v1782
        %v1839 = vpack.c.b16 %v1785, %v1783
        %v1840 = vpack.c.b16 %v1788, %v1786
        %v1841 = vpack.c.b16 %v1789, %v1787
        %v1842 = vpack.c.b16 %v1792, %v1790
        %v1843 = vpack.c.b16 %v1793, %v1791
        %v1844 = vpack.c.b16 %v1796, %v1794
        %v1845 = vpack.c.b16 %v1797, %v1795
        %v1846 = vpack.c.b16 %v1800, %v1798
        %v1847 = vpack.c.b16 %v1801, %v1799
        %v1848 = vpack.c.b16 %v1804, %v1802
        %v1849 = vpack.c.b16 %v1805, %v1803
        %v1850 = vpack.c.b16 %v1808, %v1806
        %v1851 = vpack.c.b16 %v1809, %v1807
        %v1852 = vpack.c.b16 %v1812, %v1810
        %v1853 = vpack.c.b16 %v1813, %v1811
        %v1854 = vpack.c.b16 %v1816, %v1814
        %v1855 = vpack.c.b16 %v1817, %v1815
        %v1856 = vpack.c.b16 %v1820, %v1818
        %v1857 = vpack.c.b16 %v1821, %v1819
        %v1858 = vpack.c.b16 %v1824, %v1822
        %v1859 = vpack.c.b16 %v1825, %v1823
        %v1860 = vpack.c.b16 %v1828, %v1826
        %v1861 = vpack.c.b16 %v1829, %v1827
        %1894 = vmatprep.subr.bf16.mxu0 %v1831
        %1895 = vmatpush1.bf16.msra.mxu0 %v1830
        %1896 = vmatprep.subr.bf16.mxu0 %v1833
        %1897 = vmatpush1.bf16.msra.mxu0 %v1832
        %1898 = vmatprep.subr.bf16.mxu0 %v1835
        %1899 = vmatpush1.bf16.msra.mxu0 %v1834
        %1900 = vmatprep.subr.bf16.mxu0 %v1837
        %1901 = vmatpush1.bf16.msra.mxu0 %v1836
        %1902 = vmatprep.subr.bf16.mxu0 %v1839
        %1903 = vmatpush1.bf16.msra.mxu0 %v1838
        %1904 = vmatprep.subr.bf16.mxu0 %v1841
        %1905 = vmatpush1.bf16.msra.mxu0 %v1840
        %1906 = vmatprep.subr.bf16.mxu0 %v1843
        %1907 = vmatpush1.bf16.msra.mxu0 %v1842
        %1908 = vmatprep.subr.bf16.mxu0 %v1845
        %1909 = vmatpush1.bf16.msra.mxu0 %v1844
        %1910 = vmatprep.subr.bf16.mxu0 %v1847
        %1911 = vmatpush1.bf16.msra.mxu0 %v1846
        %1912 = vmatprep.subr.bf16.mxu0 %v1849
        %1913 = vmatpush1.bf16.msra.mxu0 %v1848
        %1914 = vmatprep.subr.bf16.mxu0 %v1851
        %1915 = vmatpush1.bf16.msra.mxu0 %v1850
        %1916 = vmatprep.subr.bf16.mxu0 %v1853
        %1917 = vmatpush1.bf16.msra.mxu0 %v1852
        %1918 = vmatprep.subr.bf16.mxu0 %v1855
        %1919 = vmatpush1.bf16.msra.mxu0 %v1854
        %1920 = vmatprep.subr.bf16.mxu0 %v1857
        %1921 = vmatpush1.bf16.msra.mxu0 %v1856
        %1922 = vmatprep.subr.bf16.mxu0 %v1859
        %1923 = vmatpush1.bf16.msra.mxu0 %v1858
        %1924 = vmatprep.subr.bf16.mxu0 %v1861
        %1925 = vmatpush1.bf16.msra.mxu0 %v1860
        %1926 = vmatprep.mubr.bf16.mxu0 %v1377
        %1927 = vmatmul.mubr.bf16.gmra.mrb[0].mxu0 %v1376
        %v1928 = vpop.f32.mrb[0].mxu0
        %v1929 = vadd.f32 %v1576, %v1928
        %v1930 = vpop.f32.mrb[0].mxu0
        %v1931 = vadd.f32 %v1578, %v1930
        %v1932 = vpop.f32.mrb[0].mxu0
        %v1933 = vadd.f32 %v1580, %v1932
        %v1934 = vpop.f32.mrb[0].mxu0
        %v1935 = vadd.f32 %v1582, %v1934
        %1936 = vmatprep.mubr.bf16.mxu0 %v1379
        %1937 = vmatmul.mubr.bf16.gmra.mrb[0].mxu0 %v1378
        %v1938 = vpop.f32.mrb[0].mxu0
        %v1939 = vadd.f32 %v1586, %v1938
        %v1940 = vpop.f32.mrb[0].mxu0
        %v1941 = vadd.f32 %v1588, %v1940
        %v1942 = vpop.f32.mrb[0].mxu0
        %v1943 = vadd.f32 %v1590, %v1942
        %v1944 = vpop.f32.mrb[0].mxu0
        %v1945 = vadd.f32 %v1592, %v1944
        %1946 = vmatprep.mubr.bf16.mxu0 %v1381
        %1947 = vmatmul.mubr.bf16.gmra.mrb[0].mxu0 %v1380
        %v1948 = vpop.f32.mrb[0].mxu0
        %v1949 = vadd.f32 %v1596, %v1948
        %v1950 = vpop.f32.mrb[0].mxu0
        %v1951 = vadd.f32 %v1598, %v1950
        %v1952 = vpop.f32.mrb[0].mxu0
        %v1953 = vadd.f32 %v1600, %v1952
        %v1954 = vpop.f32.mrb[0].mxu0
        %v1955 = vadd.f32 %v1602, %v1954
        %1956 = vmatprep.mubr.bf16.mxu0 %v1383
        %1957 = vmatmul.mubr.bf16.gmra.mrb[0].mxu0 %v1382
        %v1958 = vpop.f32.mrb[0].mxu0
        %v1959 = vadd.f32 %v1606, %v1958
        %v1960 = vpop.f32.mrb[0].mxu0
        %v1961 = vadd.f32 %v1608, %v1960
        %v1962 = vpop.f32.mrb[0].mxu0
        %v1963 = vadd.f32 %v1610, %v1962
        %v1964 = vpop.f32.mrb[0].mxu0
        %v1965 = vadd.f32 %v1612, %v1964
        %1966 = vmatprep.mubr.bf16.mxu0 %v1385
        %1967 = vmatmul.mubr.bf16.gmra.mrb[0].mxu0 %v1384
        %v1968 = vpop.f32.mrb[0].mxu0
        %v1969 = vadd.f32 %v1616, %v1968
        %v1970 = vpop.f32.mrb[0].mxu0
        %v1971 = vadd.f32 %v1618, %v1970
        %v1972 = vpop.f32.mrb[0].mxu0
        %v1973 = vadd.f32 %v1620, %v1972
        %v1974 = vpop.f32.mrb[0].mxu0
        %v1975 = vadd.f32 %v1622, %v1974
        %1976 = vmatprep.mubr.bf16.mxu0 %v1387
        %1977 = vmatmul.mubr.bf16.gmra.mrb[0].mxu0 %v1386
        %v1978 = vpop.f32.mrb[0].mxu0
        %v1979 = vadd.f32 %v1626, %v1978
        %v1980 = vpop.f32.mrb[0].mxu0
        %v1981 = vadd.f32 %v1628, %v1980
        %v1982 = vpop.f32.mrb[0].mxu0
        %v1983 = vadd.f32 %v1630, %v1982
        %v1984 = vpop.f32.mrb[0].mxu0
        %v1985 = vadd.f32 %v1632, %v1984
        %1986 = vmatprep.mubr.bf16.mxu0 %v1389
        %1987 = vmatmul.mubr.bf16.gmra.mrb[0].mxu0 %v1388
        %v1988 = vpop.f32.mrb[0].mxu0
        %v1989 = vadd.f32 %v1636, %v1988
        %v1990 = vpop.f32.mrb[0].mxu0
        %v1991 = vadd.f32 %v1638, %v1990
        %v1992 = vpop.f32.mrb[0].mxu0
        %v1993 = vadd.f32 %v1640, %v1992
        %v1994 = vpop.f32.mrb[0].mxu0
        %v1995 = vadd.f32 %v1642, %v1994
        %1996 = vmatprep.mubr.bf16.mxu0 %v1391
        %1997 = vmatmul.mubr.bf16.gmra.mrb[0].mxu0 %v1390
        %v1998 = vpop.f32.mrb[0].mxu0
        %v1999 = vadd.f32 %v1646, %v1998
        %v2000 = vpop.f32.mrb[0].mxu0
        %v2001 = vadd.f32 %v1648, %v2000
        %v2002 = vpop.f32.mrb[0].mxu0
        %v2003 = vadd.f32 %v1650, %v2002
        %v2004 = vpop.f32.mrb[0].mxu0
        %v2005 = vadd.f32 %v1652, %v2004
        %2006 = vmatprep.mubr.bf16.mxu0 %v1393
        %2007 = vmatmul.mubr.bf16.gmra.mrb[0].mxu0 %v1392
        %v2008 = vpop.f32.mrb[0].mxu0
        %v2009 = vadd.f32 %v1656, %v2008
        %v2010 = vpop.f32.mrb[0].mxu0
        %v2011 = vadd.f32 %v1658, %v2010
        %v2012 = vpop.f32.mrb[0].mxu0
        %v2013 = vadd.f32 %v1660, %v2012
        %v2014 = vpop.f32.mrb[0].mxu0
        %v2015 = vadd.f32 %v1662, %v2014
        %2016 = vmatprep.mubr.bf16.mxu0 %v1395
        %2017 = vmatmul.mubr.bf16.gmra.mrb[0].mxu0 %v1394
        %v2018 = vpop.f32.mrb[0].mxu0
        %v2019 = vadd.f32 %v1666, %v2018
        %v2020 = vpop.f32.mrb[0].mxu0
        %v2021 = vadd.f32 %v1668, %v2020
        %v2022 = vpop.f32.mrb[0].mxu0
        %v2023 = vadd.f32 %v1670, %v2022
        %v2024 = vpop.f32.mrb[0].mxu0
        %v2025 = vadd.f32 %v1672, %v2024
        %2026 = vmatprep.mubr.bf16.mxu0 %v1397
        %2027 = vmatmul.mubr.bf16.gmra.mrb[0].mxu0 %v1396
        %v2028 = vpop.f32.mrb[0].mxu0
        %v2029 = vadd.f32 %v1676, %v2028
        %v2030 = vpop.f32.mrb[0].mxu0
        %v2031 = vadd.f32 %v1678, %v2030
        %v2032 = vpop.f32.mrb[0].mxu0
        %v2033 = vadd.f32 %v1680, %v2032
        %v2034 = vpop.f32.mrb[0].mxu0
        %v2035 = vadd.f32 %v1682, %v2034
        %2036 = vmatprep.mubr.bf16.mxu0 %v1399
        %2037 = vmatmul.mubr.bf16.gmra.mrb[0].mxu0 %v1398
        %v2038 = vpop.f32.mrb[0].mxu0
        %v2039 = vadd.f32 %v1686, %v2038
        %v2040 = vpop.f32.mrb[0].mxu0
        %v2041 = vadd.f32 %v1688, %v2040
        %v2042 = vpop.f32.mrb[0].mxu0
        %v2043 = vadd.f32 %v1690, %v2042
        %v2044 = vpop.f32.mrb[0].mxu0
        %v2045 = vadd.f32 %v1692, %v2044
        %2046 = vmatprep.mubr.bf16.mxu0 %v1401
        %2047 = vmatmul.mubr.bf16.gmra.mrb[0].mxu0 %v1400
        %v2048 = vpop.f32.mrb[0].mxu0
        %v2049 = vadd.f32 %v1696, %v2048
        %v2050 = vpop.f32.mrb[0].mxu0
        %v2051 = vadd.f32 %v1698, %v2050
        %v2052 = vpop.f32.mrb[0].mxu0
        %v2053 = vadd.f32 %v1700, %v2052
        %v2054 = vpop.f32.mrb[0].mxu0
        %v2055 = vadd.f32 %v1702, %v2054
        %2056 = vmatprep.mubr.bf16.mxu0 %v1403
        %2057 = vmatmul.mubr.bf16.gmra.mrb[0].mxu0 %v1402
        %v2058 = vpop.f32.mrb[0].mxu0
        %v2059 = vadd.f32 %v1706, %v2058
        %v2060 = vpop.f32.mrb[0].mxu0
        %v2061 = vadd.f32 %v1708, %v2060
        %v2062 = vpop.f32.mrb[0].mxu0
        %v2063 = vadd.f32 %v1710, %v2062
        %v2064 = vpop.f32.mrb[0].mxu0
        %v2065 = vadd.f32 %v1712, %v2064
        %2066 = vmatprep.mubr.bf16.mxu0 %v1405
        %2067 = vmatmul.mubr.bf16.gmra.mrb[0].mxu0 %v1404
        %v2068 = vpop.f32.mrb[0].mxu0
        %v2069 = vadd.f32 %v1716, %v2068
        %v2070 = vpop.f32.mrb[0].mxu0
        %v2071 = vadd.f32 %v1718, %v2070
        %v2072 = vpop.f32.mrb[0].mxu0
        %v2073 = vadd.f32 %v1720, %v2072
        %v2074 = vpop.f32.mrb[0].mxu0
        %v2075 = vadd.f32 %v1722, %v2074
        %2076 = vmatprep.mubr.bf16.mxu0 %v1407
        %2077 = vmatmul.mubr.bf16.gmra.mrb[0].mxu0 %v1406
        %v2078 = vpop.f32.mrb[0].mxu0
        %v2079 = vadd.f32 %v1726, %v2078
        %v2080 = vpop.f32.mrb[0].mxu0
        %v2081 = vadd.f32 %v1728, %v2080
        %v2082 = vpop.f32.mrb[0].mxu0
        %v2083 = vadd.f32 %v1730, %v2082
        %v2084 = vpop.f32.mrb[0].mxu0
        %v2085 = vadd.f32 %v1732, %v2084
        %2086 = vdwg.mxu0
        %v2087 = vld [vmem:[#allocation14] sm:$0x3]
        %v2089 = vlaneseq
        %v2090 = vshrl.u32 %v2089, 7
        %v2091 = vsub.s32 0, %v2090
        %v2092 = vrot.slane %v2087, %v2091
        %v2093 = vlaneseq
        %v2094 = vshrl.u32 %v2093, 7
        %v2095 = vsub.s32 1, %v2094
        %v2096 = vrot.slane %v2087, %v2095
        %v2099 = vadd.f32 %v1929, %v2092
        %v2100 = vadd.f32 %v1931, %v2096
        %v2101 = vadd.f32 %v1933, %v2092
        %v2102 = vadd.f32 %v1935, %v2096
        %v2103 = vadd.f32 %v1939, %v2092
        %v2104 = vadd.f32 %v1941, %v2096
        %v2105 = vadd.f32 %v1943, %v2092
        %v2106 = vadd.f32 %v1945, %v2096
        %v2107 = vadd.f32 %v1949, %v2092
        %v2108 = vadd.f32 %v1951, %v2096
        %v2109 = vadd.f32 %v1953, %v2092
        %v2110 = vadd.f32 %v1955, %v2096
        %v2111 = vadd.f32 %v1959, %v2092
        %v2112 = vadd.f32 %v1961, %v2096
        %v2113 = vadd.f32 %v1963, %v2092
        %v2114 = vadd.f32 %v1965, %v2096
        %v2115 = vadd.f32 %v1969, %v2092
        %v2116 = vadd.f32 %v1971, %v2096
        %v2117 = vadd.f32 %v1973, %v2092
        %v2118 = vadd.f32 %v1975, %v2096
        %v2119 = vadd.f32 %v1979, %v2092
        %v2120 = vadd.f32 %v1981, %v2096
        %v2121 = vadd.f32 %v1983, %v2092
        %v2122 = vadd.f32 %v1985, %v2096
        %v2123 = vadd.f32 %v1989, %v2092
        %v2124 = vadd.f32 %v1991, %v2096
        %v2125 = vadd.f32 %v1993, %v2092
        %v2126 = vadd.f32 %v1995, %v2096
        %v2127 = vadd.f32 %v1999, %v2092
        %v2128 = vadd.f32 %v2001, %v2096
        %v2129 = vadd.f32 %v2003, %v2092
        %v2130 = vadd.f32 %v2005, %v2096
        %v2131 = vadd.f32 %v2009, %v2092
        %v2132 = vadd.f32 %v2011, %v2096
        %v2133 = vadd.f32 %v2013, %v2092
        %v2134 = vadd.f32 %v2015, %v2096
        %v2135 = vadd.f32 %v2019, %v2092
        %v2136 = vadd.f32 %v2021, %v2096
        %v2137 = vadd.f32 %v2023, %v2092
        %v2138 = vadd.f32 %v2025, %v2096
        %v2139 = vadd.f32 %v2029, %v2092
        %v2140 = vadd.f32 %v2031, %v2096
        %v2141 = vadd.f32 %v2033, %v2092
        %v2142 = vadd.f32 %v2035, %v2096
        %v2143 = vadd.f32 %v2039, %v2092
        %v2144 = vadd.f32 %v2041, %v2096
        %v2145 = vadd.f32 %v2043, %v2092
        %v2146 = vadd.f32 %v2045, %v2096
        %v2147 = vadd.f32 %v2049, %v2092
        %v2148 = vadd.f32 %v2051, %v2096
        %v2149 = vadd.f32 %v2053, %v2092
        %v2150 = vadd.f32 %v2055, %v2096
        %v2151 = vadd.f32 %v2059, %v2092
        %v2152 = vadd.f32 %v2061, %v2096
        %v2153 = vadd.f32 %v2063, %v2092
        %v2154 = vadd.f32 %v2065, %v2096
        %v2155 = vadd.f32 %v2069, %v2092
        %v2156 = vadd.f32 %v2071, %v2096
        %v2157 = vadd.f32 %v2073, %v2092
        %v2158 = vadd.f32 %v2075, %v2096
        %v2159 = vadd.f32 %v2079, %v2092
        %v2160 = vadd.f32 %v2081, %v2096
        %v2161 = vadd.f32 %v2083, %v2092
        %v2162 = vadd.f32 %v2085, %v2096
        %v2163 = vpack.c.bf16 %v2101, %v2099
        %v2164 = vpack.c.bf16 %v2102, %v2100
        %v2165 = vpack.c.bf16 %v2105, %v2103
        %v2166 = vpack.c.bf16 %v2106, %v2104
        %v2167 = vpack.c.bf16 %v2109, %v2107
        %v2168 = vpack.c.bf16 %v2110, %v2108
        %v2169 = vpack.c.bf16 %v2113, %v2111
        %v2170 = vpack.c.bf16 %v2114, %v2112
        %v2171 = vpack.c.bf16 %v2117, %v2115
        %v2172 = vpack.c.bf16 %v2118, %v2116
        %v2173 = vpack.c.bf16 %v2121, %v2119
        %v2174 = vpack.c.bf16 %v2122, %v2120
        %v2175 = vpack.c.bf16 %v2125, %v2123
        %v2176 = vpack.c.bf16 %v2126, %v2124
        %v2177 = vpack.c.bf16 %v2129, %v2127
        %v2178 = vpack.c.bf16 %v2130, %v2128
        %v2179 = vpack.c.bf16 %v2133, %v2131
        %v2180 = vpack.c.bf16 %v2134, %v2132
        %v2181 = vpack.c.bf16 %v2137, %v2135
        %v2182 = vpack.c.bf16 %v2138, %v2136
        %v2183 = vpack.c.bf16 %v2141, %v2139
        %v2184 = vpack.c.bf16 %v2142, %v2140
        %v2185 = vpack.c.bf16 %v2145, %v2143
        %v2186 = vpack.c.bf16 %v2146, %v2144
        %v2187 = vpack.c.bf16 %v2149, %v2147
        %v2188 = vpack.c.bf16 %v2150, %v2148
        %v2189 = vpack.c.bf16 %v2153, %v2151
        %v2190 = vpack.c.bf16 %v2154, %v2152
        %v2191 = vpack.c.bf16 %v2157, %v2155
        %v2192 = vpack.c.bf16 %v2158, %v2156
        %v2193 = vpack.c.bf16 %v2161, %v2159
        %v2194 = vpack.c.bf16 %v2162, %v2160
        %v2195 = vld [vmem:[#allocation11] sm:$0xff]
        %v2196 = vld [vmem:[#allocation11 + $0x8] sm:$0xff]
        %v2197 = vld [vmem:[#allocation11 + $0x10] sm:$0xff]
        %v2198 = vld [vmem:[#allocation11 + $0x18] sm:$0xff]
        %v2199 = vld [vmem:[#allocation11 + $0x20] sm:$0xff]
        %v2200 = vld [vmem:[#allocation11 + $0x28] sm:$0xff]
        %v2201 = vld [vmem:[#allocation11 + $0x30] sm:$0xff]
        %v2202 = vld [vmem:[#allocation11 + $0x38] sm:$0xff]
        %v2203 = vld [vmem:[#allocation11 + $0x40] sm:$0xff]
        %v2204 = vld [vmem:[#allocation11 + $0x48] sm:$0xff]
        %v2205 = vld [vmem:[#allocation11 + $0x50] sm:$0xff]
        %v2206 = vld [vmem:[#allocation11 + $0x58] sm:$0xff]
        %v2207 = vld [vmem:[#allocation11 + $0x60] sm:$0xff]
        %v2208 = vld [vmem:[#allocation11 + $0x68] sm:$0xff]
        %v2209 = vld [vmem:[#allocation11 + $0x70] sm:$0xff]
        %v2210 = vld [vmem:[#allocation11 + $0x78] sm:$0xff]
        %v2211 = vld [vmem:[#allocation11 + $0x80] sm:$0xff]
        %v2212 = vld [vmem:[#allocation11 + $0x88] sm:$0xff]
        %v2213 = vld [vmem:[#allocation11 + $0x90] sm:$0xff]
        %v2214 = vld [vmem:[#allocation11 + $0x98] sm:$0xff]
        %v2215 = vld [vmem:[#allocation11 + $0xa0] sm:$0xff]
        %v2216 = vld [vmem:[#allocation11 + $0xa8] sm:$0xff]
        %v2217 = vld [vmem:[#allocation11 + $0xb0] sm:$0xff]
        %v2218 = vld [vmem:[#allocation11 + $0xb8] sm:$0xff]
        %v2219 = vld [vmem:[#allocation11 + $0xc0] sm:$0xff]
        %v2220 = vld [vmem:[#allocation11 + $0xc8] sm:$0xff]
        %v2221 = vld [vmem:[#allocation11 + $0xd0] sm:$0xff]
        %v2222 = vld [vmem:[#allocation11 + $0xd8] sm:$0xff]
        %v2223 = vld [vmem:[#allocation11 + $0xe0] sm:$0xff]
        %v2224 = vld [vmem:[#allocation11 + $0xe8] sm:$0xff]
        %v2225 = vld [vmem:[#allocation11 + $0xf0] sm:$0xff]
        %v2226 = vld [vmem:[#allocation11 + $0xf8] sm:$0xff]
        %v2227 = vld [vmem:[#allocation16] sm:$0x3]
        %v2229 = vlaneseq
        %v2230 = vshrl.u32 %v2229, 7
        %v2231 = vsub.s32 0, %v2230
        %v2232 = vrot.slane %v2227, %v2231
        %v2233 = vlaneseq
        %v2234 = vshrl.u32 %v2233, 7
        %v2235 = vsub.s32 1, %v2234
        %v2236 = vrot.slane %v2227, %v2235
        %v2271 = vunpack.c.l.b16 %v2195
        %v2272 = vunpack.c.h.b16 %v2195
        %v2273 = vunpack.c.l.b16 %v2196
        %v2274 = vunpack.c.h.b16 %v2196
        %v2275 = vunpack.c.l.b16 %v2197
        %v2276 = vunpack.c.h.b16 %v2197
        %v2277 = vunpack.c.l.b16 %v2198
        %v2278 = vunpack.c.h.b16 %v2198
        %v2279 = vunpack.c.l.b16 %v2199
        %v2280 = vunpack.c.h.b16 %v2199
        %v2281 = vunpack.c.l.b16 %v2200
        %v2282 = vunpack.c.h.b16 %v2200
        %v2283 = vunpack.c.l.b16 %v2201
        %v2284 = vunpack.c.h.b16 %v2201
        %v2285 = vunpack.c.l.b16 %v2202
        %v2286 = vunpack.c.h.b16 %v2202
        %v2287 = vunpack.c.l.b16 %v2203
        %v2288 = vunpack.c.h.b16 %v2203
        %v2289 = vunpack.c.l.b16 %v2204
        %v2290 = vunpack.c.h.b16 %v2204
        %v2291 = vunpack.c.l.b16 %v2205
        %v2292 = vunpack.c.h.b16 %v2205
        %v2293 = vunpack.c.l.b16 %v2206
        %v2294 = vunpack.c.h.b16 %v2206
        %v2295 = vunpack.c.l.b16 %v2207
        %v2296 = vunpack.c.h.b16 %v2207
        %v2297 = vunpack.c.l.b16 %v2208
        %v2298 = vunpack.c.h.b16 %v2208
        %v2299 = vunpack.c.l.b16 %v2209
        %v2300 = vunpack.c.h.b16 %v2209
        %v2301 = vunpack.c.l.b16 %v2210
        %v2302 = vunpack.c.h.b16 %v2210
        %v2303 = vunpack.c.l.b16 %v2211
        %v2304 = vunpack.c.h.b16 %v2211
        %v2305 = vunpack.c.l.b16 %v2212
        %v2306 = vunpack.c.h.b16 %v2212
        %v2307 = vunpack.c.l.b16 %v2213
        %v2308 = vunpack.c.h.b16 %v2213
        %v2309 = vunpack.c.l.b16 %v2214
        %v2310 = vunpack.c.h.b16 %v2214
        %v2311 = vunpack.c.l.b16 %v2215
        %v2312 = vunpack.c.h.b16 %v2215
        %v2313 = vunpack.c.l.b16 %v2216
        %v2314 = vunpack.c.h.b16 %v2216
        %v2315 = vunpack.c.l.b16 %v2217
        %v2316 = vunpack.c.h.b16 %v2217
        %v2317 = vunpack.c.l.b16 %v2218
        %v2318 = vunpack.c.h.b16 %v2218
        %v2319 = vunpack.c.l.b16 %v2219
        %v2320 = vunpack.c.h.b16 %v2219
        %v2321 = vunpack.c.l.b16 %v2220
        %v2322 = vunpack.c.h.b16 %v2220
        %v2323 = vunpack.c.l.b16 %v2221
        %v2324 = vunpack.c.h.b16 %v2221
        %v2325 = vunpack.c.l.b16 %v2222
        %v2326 = vunpack.c.h.b16 %v2222
        %v2327 = vunpack.c.l.b16 %v2223
        %v2328 = vunpack.c.h.b16 %v2223
        %v2329 = vunpack.c.l.b16 %v2224
        %v2330 = vunpack.c.h.b16 %v2224
        %v2331 = vunpack.c.l.b16 %v2225
        %v2332 = vunpack.c.h.b16 %v2225
        %v2333 = vunpack.c.l.b16 %v2226
        %v2334 = vunpack.c.h.b16 %v2226
        %v2335 = vpack.c.b16 %v2273, %v2271
        %v2336 = vpack.c.b16 %v2274, %v2272
        %v2337 = vpack.c.b16 %v2277, %v2275
        %v2338 = vpack.c.b16 %v2278, %v2276
        %v2339 = vpack.c.b16 %v2281, %v2279
        %v2340 = vpack.c.b16 %v2282, %v2280
        %v2341 = vpack.c.b16 %v2285, %v2283
        %v2342 = vpack.c.b16 %v2286, %v2284
        %v2343 = vpack.c.b16 %v2289, %v2287
        %v2344 = vpack.c.b16 %v2290, %v2288
        %v2345 = vpack.c.b16 %v2293, %v2291
        %v2346 = vpack.c.b16 %v2294, %v2292
        %v2347 = vpack.c.b16 %v2297, %v2295
        %v2348 = vpack.c.b16 %v2298, %v2296
        %v2349 = vpack.c.b16 %v2301, %v2299
        %v2350 = vpack.c.b16 %v2302, %v2300
        %v2351 = vpack.c.b16 %v2305, %v2303
        %v2352 = vpack.c.b16 %v2306, %v2304
        %v2353 = vpack.c.b16 %v2309, %v2307
        %v2354 = vpack.c.b16 %v2310, %v2308
        %v2355 = vpack.c.b16 %v2313, %v2311
        %v2356 = vpack.c.b16 %v2314, %v2312
        %v2357 = vpack.c.b16 %v2317, %v2315
        %v2358 = vpack.c.b16 %v2318, %v2316
        %v2359 = vpack.c.b16 %v2321, %v2319
        %v2360 = vpack.c.b16 %v2322, %v2320
        %v2361 = vpack.c.b16 %v2325, %v2323
        %v2362 = vpack.c.b16 %v2326, %v2324
        %v2363 = vpack.c.b16 %v2329, %v2327
        %v2364 = vpack.c.b16 %v2330, %v2328
        %v2365 = vpack.c.b16 %v2333, %v2331
        %v2366 = vpack.c.b16 %v2334, %v2332
        %2399 = vmatprep.subr.bf16.mxu0 %v2336
        %2400 = vmatpush1.bf16.msra.mxu0 %v2335
        %2401 = vmatprep.subr.bf16.mxu0 %v2338
        %2402 = vmatpush1.bf16.msra.mxu0 %v2337
        %2403 = vmatprep.subr.bf16.mxu0 %v2340
        %2404 = vmatpush1.bf16.msra.mxu0 %v2339
        %2405 = vmatprep.subr.bf16.mxu0 %v2342
        %2406 = vmatpush1.bf16.msra.mxu0 %v2341
        %2407 = vmatprep.subr.bf16.mxu0 %v2344
        %2408 = vmatpush1.bf16.msra.mxu0 %v2343
        %2409 = vmatprep.subr.bf16.mxu0 %v2346
        %2410 = vmatpush1.bf16.msra.mxu0 %v2345
        %2411 = vmatprep.subr.bf16.mxu0 %v2348
        %2412 = vmatpush1.bf16.msra.mxu0 %v2347
        %2413 = vmatprep.subr.bf16.mxu0 %v2350
        %2414 = vmatpush1.bf16.msra.mxu0 %v2349
        %2415 = vmatprep.subr.bf16.mxu0 %v2352
        %2416 = vmatpush1.bf16.msra.mxu0 %v2351
        %2417 = vmatprep.subr.bf16.mxu0 %v2354
        %2418 = vmatpush1.bf16.msra.mxu0 %v2353
        %2419 = vmatprep.subr.bf16.mxu0 %v2356
        %2420 = vmatpush1.bf16.msra.mxu0 %v2355
        %2421 = vmatprep.subr.bf16.mxu0 %v2358
        %2422 = vmatpush1.bf16.msra.mxu0 %v2357
        %2423 = vmatprep.subr.bf16.mxu0 %v2360
        %2424 = vmatpush1.bf16.msra.mxu0 %v2359
        %2425 = vmatprep.subr.bf16.mxu0 %v2362
        %2426 = vmatpush1.bf16.msra.mxu0 %v2361
        %2427 = vmatprep.subr.bf16.mxu0 %v2364
        %2428 = vmatpush1.bf16.msra.mxu0 %v2363
        %2429 = vmatprep.subr.bf16.mxu0 %v2366
        %2430 = vmatpush1.bf16.msra.mxu0 %v2365
        %2431 = vmatprep.mubr.bf16.mxu0 %v2164
        %2432 = vmatmul.mubr.bf16.gmra.mrb[0].mxu0 %v2163
        %v2433 = vpop.f32.mrb[0].mxu0
        %v2434 = vadd.f32 %v2232, %v2433
        %v2435 = vpop.f32.mrb[0].mxu0
        %v2436 = vadd.f32 %v2236, %v2435
        %v2437 = vpop.f32.mrb[0].mxu0
        %v2438 = vadd.f32 %v2232, %v2437
        %v2439 = vpop.f32.mrb[0].mxu0
        %v2440 = vadd.f32 %v2236, %v2439
        %2441 = vmatprep.mubr.bf16.mxu0 %v2166
        %2442 = vmatmul.mubr.bf16.gmra.mrb[0].mxu0 %v2165
        %v2443 = vpop.f32.mrb[0].mxu0
        %v2444 = vadd.f32 %v2232, %v2443
        %v2445 = vpop.f32.mrb[0].mxu0
        %v2446 = vadd.f32 %v2236, %v2445
        %v2447 = vpop.f32.mrb[0].mxu0
        %v2448 = vadd.f32 %v2232, %v2447
        %v2449 = vpop.f32.mrb[0].mxu0
        %v2450 = vadd.f32 %v2236, %v2449
        %2451 = vmatprep.mubr.bf16.mxu0 %v2168
        %2452 = vmatmul.mubr.bf16.gmra.mrb[0].mxu0 %v2167
        %v2453 = vpop.f32.mrb[0].mxu0
        %v2454 = vadd.f32 %v2232, %v2453
        %v2455 = vpop.f32.mrb[0].mxu0
        %v2456 = vadd.f32 %v2236, %v2455
        %v2457 = vpop.f32.mrb[0].mxu0
        %v2458 = vadd.f32 %v2232, %v2457
        %v2459 = vpop.f32.mrb[0].mxu0
        %v2460 = vadd.f32 %v2236, %v2459
        %2461 = vmatprep.mubr.bf16.mxu0 %v2170
        %2462 = vmatmul.mubr.bf16.gmra.mrb[0].mxu0 %v2169
        %v2463 = vpop.f32.mrb[0].mxu0
        %v2464 = vadd.f32 %v2232, %v2463
        %v2465 = vpop.f32.mrb[0].mxu0
        %v2466 = vadd.f32 %v2236, %v2465
        %v2467 = vpop.f32.mrb[0].mxu0
        %v2468 = vadd.f32 %v2232, %v2467
        %v2469 = vpop.f32.mrb[0].mxu0
        %v2470 = vadd.f32 %v2236, %v2469
        %2471 = vmatprep.mubr.bf16.mxu0 %v2172
        %2472 = vmatmul.mubr.bf16.gmra.mrb[0].mxu0 %v2171
        %v2473 = vpop.f32.mrb[0].mxu0
        %v2474 = vadd.f32 %v2232, %v2473
        %v2475 = vpop.f32.mrb[0].mxu0
        %v2476 = vadd.f32 %v2236, %v2475
        %v2477 = vpop.f32.mrb[0].mxu0
        %v2478 = vadd.f32 %v2232, %v2477
        %v2479 = vpop.f32.mrb[0].mxu0
        %v2480 = vadd.f32 %v2236, %v2479
        %2481 = vmatprep.mubr.bf16.mxu0 %v2174
        %2482 = vmatmul.mubr.bf16.gmra.mrb[0].mxu0 %v2173
        %v2483 = vpop.f32.mrb[0].mxu0
        %v2484 = vadd.f32 %v2232, %v2483
        %v2485 = vpop.f32.mrb[0].mxu0
        %v2486 = vadd.f32 %v2236, %v2485
        %v2487 = vpop.f32.mrb[0].mxu0
        %v2488 = vadd.f32 %v2232, %v2487
        %v2489 = vpop.f32.mrb[0].mxu0
        %v2490 = vadd.f32 %v2236, %v2489
        %2491 = vmatprep.mubr.bf16.mxu0 %v2176
        %2492 = vmatmul.mubr.bf16.gmra.mrb[0].mxu0 %v2175
        %v2493 = vpop.f32.mrb[0].mxu0
        %v2494 = vadd.f32 %v2232, %v2493
        %v2495 = vpop.f32.mrb[0].mxu0
        %v2496 = vadd.f32 %v2236, %v2495
        %v2497 = vpop.f32.mrb[0].mxu0
        %v2498 = vadd.f32 %v2232, %v2497
        %v2499 = vpop.f32.mrb[0].mxu0
        %v2500 = vadd.f32 %v2236, %v2499
        %2501 = vmatprep.mubr.bf16.mxu0 %v2178
        %2502 = vmatmul.mubr.bf16.gmra.mrb[0].mxu0 %v2177
        %v2503 = vpop.f32.mrb[0].mxu0
        %v2504 = vadd.f32 %v2232, %v2503
        %v2505 = vpop.f32.mrb[0].mxu0
        %v2506 = vadd.f32 %v2236, %v2505
        %v2507 = vpop.f32.mrb[0].mxu0
        %v2508 = vadd.f32 %v2232, %v2507
        %v2509 = vpop.f32.mrb[0].mxu0
        %v2510 = vadd.f32 %v2236, %v2509
        %2511 = vmatprep.mubr.bf16.mxu0 %v2180
        %2512 = vmatmul.mubr.bf16.gmra.mrb[0].mxu0 %v2179
        %v2513 = vpop.f32.mrb[0].mxu0
        %v2514 = vadd.f32 %v2232, %v2513
        %v2515 = vpop.f32.mrb[0].mxu0
        %v2516 = vadd.f32 %v2236, %v2515
        %v2517 = vpop.f32.mrb[0].mxu0
        %v2518 = vadd.f32 %v2232, %v2517
        %v2519 = vpop.f32.mrb[0].mxu0
        %v2520 = vadd.f32 %v2236, %v2519
        %2521 = vmatprep.mubr.bf16.mxu0 %v2182
        %2522 = vmatmul.mubr.bf16.gmra.mrb[0].mxu0 %v2181
        %v2523 = vpop.f32.mrb[0].mxu0
        %v2524 = vadd.f32 %v2232, %v2523
        %v2525 = vpop.f32.mrb[0].mxu0
        %v2526 = vadd.f32 %v2236, %v2525
        %v2527 = vpop.f32.mrb[0].mxu0
        %v2528 = vadd.f32 %v2232, %v2527
        %v2529 = vpop.f32.mrb[0].mxu0
        %v2530 = vadd.f32 %v2236, %v2529
        %2531 = vmatprep.mubr.bf16.mxu0 %v2184
        %2532 = vmatmul.mubr.bf16.gmra.mrb[0].mxu0 %v2183
        %v2533 = vpop.f32.mrb[0].mxu0
        %v2534 = vadd.f32 %v2232, %v2533
        %v2535 = vpop.f32.mrb[0].mxu0
        %v2536 = vadd.f32 %v2236, %v2535
        %v2537 = vpop.f32.mrb[0].mxu0
        %v2538 = vadd.f32 %v2232, %v2537
        %v2539 = vpop.f32.mrb[0].mxu0
        %v2540 = vadd.f32 %v2236, %v2539
        %2541 = vmatprep.mubr.bf16.mxu0 %v2186
        %2542 = vmatmul.mubr.bf16.gmra.mrb[0].mxu0 %v2185
        %v2543 = vpop.f32.mrb[0].mxu0
        %v2544 = vadd.f32 %v2232, %v2543
        %v2545 = vpop.f32.mrb[0].mxu0
        %v2546 = vadd.f32 %v2236, %v2545
        %v2547 = vpop.f32.mrb[0].mxu0
        %v2548 = vadd.f32 %v2232, %v2547
        %v2549 = vpop.f32.mrb[0].mxu0
        %v2550 = vadd.f32 %v2236, %v2549
        %2551 = vmatprep.mubr.bf16.mxu0 %v2188
        %2552 = vmatmul.mubr.bf16.gmra.mrb[0].mxu0 %v2187
        %v2553 = vpop.f32.mrb[0].mxu0
        %v2554 = vadd.f32 %v2232, %v2553
        %v2555 = vpop.f32.mrb[0].mxu0
        %v2556 = vadd.f32 %v2236, %v2555
        %v2557 = vpop.f32.mrb[0].mxu0
        %v2558 = vadd.f32 %v2232, %v2557
        %v2559 = vpop.f32.mrb[0].mxu0
        %v2560 = vadd.f32 %v2236, %v2559
        %2561 = vmatprep.mubr.bf16.mxu0 %v2190
        %2562 = vmatmul.mubr.bf16.gmra.mrb[0].mxu0 %v2189
        %v2563 = vpop.f32.mrb[0].mxu0
        %v2564 = vadd.f32 %v2232, %v2563
        %v2565 = vpop.f32.mrb[0].mxu0
        %v2566 = vadd.f32 %v2236, %v2565
        %v2567 = vpop.f32.mrb[0].mxu0
        %v2568 = vadd.f32 %v2232, %v2567
        %v2569 = vpop.f32.mrb[0].mxu0
        %v2570 = vadd.f32 %v2236, %v2569
        %2571 = vmatprep.mubr.bf16.mxu0 %v2192
        %2572 = vmatmul.mubr.bf16.gmra.mrb[0].mxu0 %v2191
        %v2573 = vpop.f32.mrb[0].mxu0
        %v2574 = vadd.f32 %v2232, %v2573
        %v2575 = vpop.f32.mrb[0].mxu0
        %v2576 = vadd.f32 %v2236, %v2575
        %v2577 = vpop.f32.mrb[0].mxu0
        %v2578 = vadd.f32 %v2232, %v2577
        %v2579 = vpop.f32.mrb[0].mxu0
        %v2580 = vadd.f32 %v2236, %v2579
        %2581 = vmatprep.mubr.bf16.mxu0 %v2194
        %2582 = vmatmul.mubr.bf16.gmra.mrb[0].mxu0 %v2193
        %v2583 = vpop.f32.mrb[0].mxu0
        %v2584 = vadd.f32 %v2232, %v2583
        %v2585 = vpop.f32.mrb[0].mxu0
        %v2586 = vadd.f32 %v2236, %v2585
        %v2587 = vpop.f32.mrb[0].mxu0
        %v2588 = vadd.f32 %v2232, %v2587
        %v2589 = vpop.f32.mrb[0].mxu0
        %v2590 = vadd.f32 %v2236, %v2589
        %2591 = vdwg.mxu0
        %v2592 = vld [vmem:[#allocation13] sm:$0xf]
        %v2593 = vld [vmem:[#allocation13 + $0x4] sm:$0xf]
        %v2594 = vld [vmem:[#allocation13 + $0x8] sm:$0xf]
        %v2595 = vld [vmem:[#allocation13 + $0xc] sm:$0xf]
        %v2596 = vld [vmem:[#allocation13 + $0x10] sm:$0xf]
        %v2597 = vld [vmem:[#allocation13 + $0x14] sm:$0xf]
        %v2598 = vld [vmem:[#allocation13 + $0x18] sm:$0xf]
        %v2599 = vld [vmem:[#allocation13 + $0x1c] sm:$0xf]
        %v2600 = vld [vmem:[#allocation13 + $0x20] sm:$0xf]
        %v2601 = vld [vmem:[#allocation13 + $0x24] sm:$0xf]
        %v2602 = vld [vmem:[#allocation13 + $0x28] sm:$0xf]
        %v2603 = vld [vmem:[#allocation13 + $0x2c] sm:$0xf]
        %v2604 = vld [vmem:[#allocation13 + $0x30] sm:$0xf]
        %v2605 = vld [vmem:[#allocation13 + $0x34] sm:$0xf]
        %v2606 = vld [vmem:[#allocation13 + $0x38] sm:$0xf]
        %v2607 = vld [vmem:[#allocation13 + $0x3c] sm:$0xf]
        %v2608 = vld [vmem:[#allocation13 + $0x40] sm:$0xf]
        %v2609 = vld [vmem:[#allocation13 + $0x44] sm:$0xf]
        %v2610 = vld [vmem:[#allocation13 + $0x48] sm:$0xf]
        %v2611 = vld [vmem:[#allocation13 + $0x4c] sm:$0xf]
        %v2612 = vld [vmem:[#allocation13 + $0x50] sm:$0xf]
        %v2613 = vld [vmem:[#allocation13 + $0x54] sm:$0xf]
        %v2614 = vld [vmem:[#allocation13 + $0x58] sm:$0xf]
        %v2615 = vld [vmem:[#allocation13 + $0x5c] sm:$0xf]
        %v2616 = vld [vmem:[#allocation13 + $0x60] sm:$0xf]
        %v2617 = vld [vmem:[#allocation13 + $0x64] sm:$0xf]
        %v2618 = vld [vmem:[#allocation13 + $0x68] sm:$0xf]
        %v2619 = vld [vmem:[#allocation13 + $0x6c] sm:$0xf]
        %v2620 = vld [vmem:[#allocation13 + $0x70] sm:$0xf]
        %v2621 = vld [vmem:[#allocation13 + $0x74] sm:$0xf]
        %v2622 = vld [vmem:[#allocation13 + $0x78] sm:$0xf]
        %v2623 = vld [vmem:[#allocation13 + $0x7c] sm:$0xf]
        %v2624 = vld [vmem:[#allocation17] sm:$0x1]
        %v2626 = vlaneseq
        %v2627 = vshrl.u32 %v2626, 7
        %v2628 = vsub.s32 0, %v2627
        %v2629 = vrot.slane %v2624, %v2628
        %v2663 = vunpack.c.l.b16 %v2592
        %v2664 = vunpack.c.l.b16 %v2593
        %v2665 = vunpack.c.l.b16 %v2594
        %v2666 = vunpack.c.l.b16 %v2595
        %v2667 = vunpack.c.l.b16 %v2596
        %v2668 = vunpack.c.l.b16 %v2597
        %v2669 = vunpack.c.l.b16 %v2598
        %v2670 = vunpack.c.l.b16 %v2599
        %v2671 = vunpack.c.l.b16 %v2600
        %v2672 = vunpack.c.l.b16 %v2601
        %v2673 = vunpack.c.l.b16 %v2602
        %v2674 = vunpack.c.l.b16 %v2603
        %v2675 = vunpack.c.l.b16 %v2604
        %v2676 = vunpack.c.l.b16 %v2605
        %v2677 = vunpack.c.l.b16 %v2606
        %v2678 = vunpack.c.l.b16 %v2607
        %v2679 = vunpack.c.l.b16 %v2608
        %v2680 = vunpack.c.l.b16 %v2609
        %v2681 = vunpack.c.l.b16 %v2610
        %v2682 = vunpack.c.l.b16 %v2611
        %v2683 = vunpack.c.l.b16 %v2612
        %v2684 = vunpack.c.l.b16 %v2613
        %v2685 = vunpack.c.l.b16 %v2614
        %v2686 = vunpack.c.l.b16 %v2615
        %v2687 = vunpack.c.l.b16 %v2616
        %v2688 = vunpack.c.l.b16 %v2617
        %v2689 = vunpack.c.l.b16 %v2618
        %v2690 = vunpack.c.l.b16 %v2619
        %v2691 = vunpack.c.l.b16 %v2620
        %v2692 = vunpack.c.l.b16 %v2621
        %v2693 = vunpack.c.l.b16 %v2622
        %v2694 = vunpack.c.l.b16 %v2623
        %v2695 = vpack.c.b16 %v2664, %v2663
        %v2696 = vpack.c.b16 %v2666, %v2665
        %v2697 = vpack.c.b16 %v2668, %v2667
        %v2698 = vpack.c.b16 %v2670, %v2669
        %v2699 = vpack.c.b16 %v2672, %v2671
        %v2700 = vpack.c.b16 %v2674, %v2673
        %v2701 = vpack.c.b16 %v2676, %v2675
        %v2702 = vpack.c.b16 %v2678, %v2677
        %v2703 = vpack.c.b16 %v2680, %v2679
        %v2704 = vpack.c.b16 %v2682, %v2681
        %v2705 = vpack.c.b16 %v2684, %v2683
        %v2706 = vpack.c.b16 %v2686, %v2685
        %v2707 = vpack.c.b16 %v2688, %v2687
        %v2708 = vpack.c.b16 %v2690, %v2689
        %v2709 = vpack.c.b16 %v2692, %v2691
        %v2710 = vpack.c.b16 %v2694, %v2693
        %2727 = vmatprep.subr.bf16.mxu0 0
        %2728 = vmatpush1.bf16.msra.mxu0 %v2695
        %2729 = vmatprep.subr.bf16.mxu0 0
        %2730 = vmatpush1.bf16.msra.mxu0 %v2696
        %2731 = vmatprep.subr.bf16.mxu0 0
        %2732 = vmatpush1.bf16.msra.mxu0 %v2697
        %2733 = vmatprep.subr.bf16.mxu0 0
        %2734 = vmatpush1.bf16.msra.mxu0 %v2698
        %2735 = vmatprep.subr.bf16.mxu0 0
        %2736 = vmatpush1.bf16.msra.mxu0 %v2699
        %2737 = vmatprep.subr.bf16.mxu0 0
        %2738 = vmatpush1.bf16.msra.mxu0 %v2700
        %2739 = vmatprep.subr.bf16.mxu0 0
        %2740 = vmatpush1.bf16.msra.mxu0 %v2701
        %2741 = vmatprep.subr.bf16.mxu0 0
        %2742 = vmatpush1.bf16.msra.mxu0 %v2702
        %2743 = vmatprep.subr.bf16.mxu0 0
        %2744 = vmatpush1.bf16.msra.mxu0 %v2703
        %2745 = vmatprep.subr.bf16.mxu0 0
        %2746 = vmatpush1.bf16.msra.mxu0 %v2704
        %2747 = vmatprep.subr.bf16.mxu0 0
        %2748 = vmatpush1.bf16.msra.mxu0 %v2705
        %2749 = vmatprep.subr.bf16.mxu0 0
        %2750 = vmatpush1.bf16.msra.mxu0 %v2706
        %2751 = vmatprep.subr.bf16.mxu0 0
        %2752 = vmatpush1.bf16.msra.mxu0 %v2707
        %2753 = vmatprep.subr.bf16.mxu0 0
        %2754 = vmatpush1.bf16.msra.mxu0 %v2708
        %2755 = vmatprep.subr.bf16.mxu0 0
        %2756 = vmatpush1.bf16.msra.mxu0 %v2709
        %2757 = vmatprep.subr.bf16.mxu0 0
        %2758 = vmatpush1.bf16.msra.mxu0 %v2710
        %2759 = vmatprep.mubr.bf16.mxu0 %v2164
        %2760 = vmatmul.mubr.bf16.gmra.mrb[0].mxu0 %v2163
        %v2761 = vpop.f32.mrb[0].mxu0
        %v2762 = vadd.f32 %v2629, %v2761
        %v2763 = vpop.f32.mrb[0].mxu0
        %v2764 = vpop.f32.mrb[0].mxu0
        %v2765 = vadd.f32 %v2629, %v2764
        %v2766 = vpop.f32.mrb[0].mxu0
        %2767 = vmatprep.mubr.bf16.mxu0 %v2166
        %2768 = vmatmul.mubr.bf16.gmra.mrb[0].mxu0 %v2165
        %v2769 = vpop.f32.mrb[0].mxu0
        %v2770 = vadd.f32 %v2629, %v2769
        %v2771 = vpop.f32.mrb[0].mxu0
        %v2772 = vpop.f32.mrb[0].mxu0
        %v2773 = vadd.f32 %v2629, %v2772
        %v2774 = vpop.f32.mrb[0].mxu0
        %2775 = vmatprep.mubr.bf16.mxu0 %v2168
        %2776 = vmatmul.mubr.bf16.gmra.mrb[0].mxu0 %v2167
        %v2777 = vpop.f32.mrb[0].mxu0
        %v2778 = vadd.f32 %v2629, %v2777
        %v2779 = vpop.f32.mrb[0].mxu0
        %v2780 = vpop.f32.mrb[0].mxu0
        %v2781 = vadd.f32 %v2629, %v2780
        %v2782 = vpop.f32.mrb[0].mxu0
        %2783 = vmatprep.mubr.bf16.mxu0 %v2170
        %2784 = vmatmul.mubr.bf16.gmra.mrb[0].mxu0 %v2169
        %v2785 = vpop.f32.mrb[0].mxu0
        %v2786 = vadd.f32 %v2629, %v2785
        %v2787 = vpop.f32.mrb[0].mxu0
        %v2788 = vpop.f32.mrb[0].mxu0
        %v2789 = vadd.f32 %v2629, %v2788
        %v2790 = vpop.f32.mrb[0].mxu0
        %2791 = vmatprep.mubr.bf16.mxu0 %v2172
        %2792 = vmatmul.mubr.bf16.gmra.mrb[0].mxu0 %v2171
        %v2793 = vpop.f32.mrb[0].mxu0
        %v2794 = vadd.f32 %v2629, %v2793
        %v2795 = vpop.f32.mrb[0].mxu0
        %v2796 = vpop.f32.mrb[0].mxu0
        %v2797 = vadd.f32 %v2629, %v2796
        %v2798 = vpop.f32.mrb[0].mxu0
        %2799 = vmatprep.mubr.bf16.mxu0 %v2174
        %2800 = vmatmul.mubr.bf16.gmra.mrb[0].mxu0 %v2173
        %v2801 = vpop.f32.mrb[0].mxu0
        %v2802 = vadd.f32 %v2629, %v2801
        %v2803 = vpop.f32.mrb[0].mxu0
        %v2804 = vpop.f32.mrb[0].mxu0
        %v2805 = vadd.f32 %v2629, %v2804
        %v2806 = vpop.f32.mrb[0].mxu0
        %2807 = vmatprep.mubr.bf16.mxu0 %v2176
        %2808 = vmatmul.mubr.bf16.gmra.mrb[0].mxu0 %v2175
        %v2809 = vpop.f32.mrb[0].mxu0
        %v2810 = vadd.f32 %v2629, %v2809
        %v2811 = vpop.f32.mrb[0].mxu0
        %v2812 = vpop.f32.mrb[0].mxu0
        %v2813 = vadd.f32 %v2629, %v2812
        %v2814 = vpop.f32.mrb[0].mxu0
        %2815 = vmatprep.mubr.bf16.mxu0 %v2178
        %2816 = vmatmul.mubr.bf16.gmra.mrb[0].mxu0 %v2177
        %v2817 = vpop.f32.mrb[0].mxu0
        %v2818 = vadd.f32 %v2629, %v2817
        %v2819 = vpop.f32.mrb[0].mxu0
        %v2820 = vpop.f32.mrb[0].mxu0
        %v2821 = vadd.f32 %v2629, %v2820
        %v2822 = vpop.f32.mrb[0].mxu0
        %2823 = vmatprep.mubr.bf16.mxu0 %v2180
        %2824 = vmatmul.mubr.bf16.gmra.mrb[0].mxu0 %v2179
        %v2825 = vpop.f32.mrb[0].mxu0
        %v2826 = vadd.f32 %v2629, %v2825
        %v2827 = vpop.f32.mrb[0].mxu0
        %v2828 = vpop.f32.mrb[0].mxu0
        %v2829 = vadd.f32 %v2629, %v2828
        %v2830 = vpop.f32.mrb[0].mxu0
        %2831 = vmatprep.mubr.bf16.mxu0 %v2182
        %2832 = vmatmul.mubr.bf16.gmra.mrb[0].mxu0 %v2181
        %v2833 = vpop.f32.mrb[0].mxu0
        %v2834 = vadd.f32 %v2629, %v2833
        %v2835 = vpop.f32.mrb[0].mxu0
        %v2836 = vpop.f32.mrb[0].mxu0
        %v2837 = vadd.f32 %v2629, %v2836
        %v2838 = vpop.f32.mrb[0].mxu0
        %2839 = vmatprep.mubr.bf16.mxu0 %v2184
        %2840 = vmatmul.mubr.bf16.gmra.mrb[0].mxu0 %v2183
        %v2841 = vpop.f32.mrb[0].mxu0
        %v2842 = vadd.f32 %v2629, %v2841
        %v2843 = vpop.f32.mrb[0].mxu0
        %v2844 = vpop.f32.mrb[0].mxu0
        %v2845 = vadd.f32 %v2629, %v2844
        %v2846 = vpop.f32.mrb[0].mxu0
        %2847 = vmatprep.mubr.bf16.mxu0 %v2186
        %2848 = vmatmul.mubr.bf16.gmra.mrb[0].mxu0 %v2185
        %v2849 = vpop.f32.mrb[0].mxu0
        %v2850 = vadd.f32 %v2629, %v2849
        %v2851 = vpop.f32.mrb[0].mxu0
        %v2852 = vpop.f32.mrb[0].mxu0
        %v2853 = vadd.f32 %v2629, %v2852
        %v2854 = vpop.f32.mrb[0].mxu0
        %2855 = vmatprep.mubr.bf16.mxu0 %v2188
        %2856 = vmatmul.mubr.bf16.gmra.mrb[0].mxu0 %v2187
        %v2857 = vpop.f32.mrb[0].mxu0
        %v2858 = vadd.f32 %v2629, %v2857
        %v2859 = vpop.f32.mrb[0].mxu0
        %v2860 = vpop.f32.mrb[0].mxu0
        %v2861 = vadd.f32 %v2629, %v2860
        %v2862 = vpop.f32.mrb[0].mxu0
        %2863 = vmatprep.mubr.bf16.mxu0 %v2190
        %2864 = vmatmul.mubr.bf16.gmra.mrb[0].mxu0 %v2189
        %v2865 = vpop.f32.mrb[0].mxu0
        %v2866 = vadd.f32 %v2629, %v2865
        %v2867 = vpop.f32.mrb[0].mxu0
        %v2868 = vpop.f32.mrb[0].mxu0
        %v2869 = vadd.f32 %v2629, %v2868
        %v2870 = vpop.f32.mrb[0].mxu0
        %2871 = vmatprep.mubr.bf16.mxu0 %v2192
        %2872 = vmatmul.mubr.bf16.gmra.mrb[0].mxu0 %v2191
        %v2873 = vpop.f32.mrb[0].mxu0
        %v2874 = vadd.f32 %v2629, %v2873
        %v2875 = vpop.f32.mrb[0].mxu0
        %v2876 = vpop.f32.mrb[0].mxu0
        %v2877 = vadd.f32 %v2629, %v2876
        %v2878 = vpop.f32.mrb[0].mxu0
        %2879 = vmatprep.mubr.bf16.mxu0 %v2194
        %2880 = vmatmul.mubr.bf16.gmra.mrb[0].mxu0 %v2193
        %v2881 = vpop.f32.mrb[0].mxu0
        %v2882 = vadd.f32 %v2629, %v2881
        %v2883 = vpop.f32.mrb[0].mxu0
        %v2884 = vpop.f32.mrb[0].mxu0
        %v2885 = vadd.f32 %v2629, %v2884
        %v2886 = vpop.f32.mrb[0].mxu0
        %2887 = vdwg.mxu0
        %2888 = vst [vmem:[%s614] sm:$0xff] %v2434
        %2889 = vst [vmem:[%s614 + $0x8] sm:$0xff] %v2436
        %2890 = vst [vmem:[%s614 + $0x10] sm:$0xff] %v2438
        %2891 = vst [vmem:[%s614 + $0x18] sm:$0xff] %v2440
        %2892 = vst [vmem:[%s614 + $0x20] sm:$0xff] %v2444
        %2893 = vst [vmem:[%s614 + $0x28] sm:$0xff] %v2446
        %2894 = vst [vmem:[%s614 + $0x30] sm:$0xff] %v2448
        %2895 = vst [vmem:[%s614 + $0x38] sm:$0xff] %v2450
        %2896 = vst [vmem:[%s614 + $0x40] sm:$0xff] %v2454
        %2897 = vst [vmem:[%s614 + $0x48] sm:$0xff] %v2456
        %2898 = vst [vmem:[%s614 + $0x50] sm:$0xff] %v2458
        %2899 = vst [vmem:[%s614 + $0x58] sm:$0xff] %v2460
        %2900 = vst [vmem:[%s614 + $0x60] sm:$0xff] %v2464
        %2901 = vst [vmem:[%s614 + $0x68] sm:$0xff] %v2466
        %2902 = vst [vmem:[%s614 + $0x70] sm:$0xff] %v2468
        %2903 = vst [vmem:[%s614 + $0x78] sm:$0xff] %v2470
        %2904 = vst [vmem:[%s614 + $0x80] sm:$0xff] %v2474
        %2905 = vst [vmem:[%s614 + $0x88] sm:$0xff] %v2476
        %2906 = vst [vmem:[%s614 + $0x90] sm:$0xff] %v2478
        %2907 = vst [vmem:[%s614 + $0x98] sm:$0xff] %v2480
        %2908 = vst [vmem:[%s614 + $0xa0] sm:$0xff] %v2484
        %2909 = vst [vmem:[%s614 + $0xa8] sm:$0xff] %v2486
        %2910 = vst [vmem:[%s614 + $0xb0] sm:$0xff] %v2488
        %2911 = vst [vmem:[%s614 + $0xb8] sm:$0xff] %v2490
        %2912 = vst [vmem:[%s614 + $0xc0] sm:$0xff] %v2494
        %2913 = vst [vmem:[%s614 + $0xc8] sm:$0xff] %v2496
        %2914 = vst [vmem:[%s614 + $0xd0] sm:$0xff] %v2498
        %2915 = vst [vmem:[%s614 + $0xd8] sm:$0xff] %v2500
        %2916 = vst [vmem:[%s614 + $0xe0] sm:$0xff] %v2504
        %2917 = vst [vmem:[%s614 + $0xe8] sm:$0xff] %v2506
        %2918 = vst [vmem:[%s614 + $0xf0] sm:$0xff] %v2508
        %2919 = vst [vmem:[%s614 + $0xf8] sm:$0xff] %v2510
        %2920 = vst [vmem:[%s614 + $0x100] sm:$0xff] %v2514
        %2921 = vst [vmem:[%s614 + $0x108] sm:$0xff] %v2516
        %2922 = vst [vmem:[%s614 + $0x110] sm:$0xff] %v2518
        %2923 = vst [vmem:[%s614 + $0x118] sm:$0xff] %v2520
        %2924 = vst [vmem:[%s614 + $0x120] sm:$0xff] %v2524
        %2925 = vst [vmem:[%s614 + $0x128] sm:$0xff] %v2526
        %2926 = vst [vmem:[%s614 + $0x130] sm:$0xff] %v2528
        %2927 = vst [vmem:[%s614 + $0x138] sm:$0xff] %v2530
        %2928 = vst [vmem:[%s614 + $0x140] sm:$0xff] %v2534
        %2929 = vst [vmem:[%s614 + $0x148] sm:$0xff] %v2536
        %2930 = vst [vmem:[%s614 + $0x150] sm:$0xff] %v2538
        %2931 = vst [vmem:[%s614 + $0x158] sm:$0xff] %v2540
        %2932 = vst [vmem:[%s614 + $0x160] sm:$0xff] %v2544
        %2933 = vst [vmem:[%s614 + $0x168] sm:$0xff] %v2546
        %2934 = vst [vmem:[%s614 + $0x170] sm:$0xff] %v2548
        %2935 = vst [vmem:[%s614 + $0x178] sm:$0xff] %v2550
        %2936 = vst [vmem:[%s614 + $0x180] sm:$0xff] %v2554
        %2937 = vst [vmem:[%s614 + $0x188] sm:$0xff] %v2556
        %2938 = vst [vmem:[%s614 + $0x190] sm:$0xff] %v2558
        %2939 = vst [vmem:[%s614 + $0x198] sm:$0xff] %v2560
        %2940 = vst [vmem:[%s614 + $0x1a0] sm:$0xff] %v2564
        %2941 = vst [vmem:[%s614 + $0x1a8] sm:$0xff] %v2566
        %2942 = vst [vmem:[%s614 + $0x1b0] sm:$0xff] %v2568
        %2943 = vst [vmem:[%s614 + $0x1b8] sm:$0xff] %v2570
        %2944 = vst [vmem:[%s614 + $0x1c0] sm:$0xff] %v2574
        %2945 = vst [vmem:[%s614 + $0x1c8] sm:$0xff] %v2576
        %2946 = vst [vmem:[%s614 + $0x1d0] sm:$0xff] %v2578
        %2947 = vst [vmem:[%s614 + $0x1d8] sm:$0xff] %v2580
        %2948 = vst [vmem:[%s614 + $0x1e0] sm:$0xff] %v2584
        %2949 = vst [vmem:[%s614 + $0x1e8] sm:$0xff] %v2586
        %2950 = vst [vmem:[%s614 + $0x1f0] sm:$0xff] %v2588
        %2951 = vst [vmem:[%s614 + $0x1f8] sm:$0xff] %v2590
        %2952 = vst [vmem:[%s607] sm:$0xff] %v2762
        %2953 = vst [vmem:[%s607 + $0x8] sm:$0xff] %v2765
        %2954 = vst [vmem:[%s607 + $0x10] sm:$0xff] %v2770
        %2955 = vst [vmem:[%s607 + $0x18] sm:$0xff] %v2773
        %2956 = vst [vmem:[%s607 + $0x20] sm:$0xff] %v2778
        %2957 = vst [vmem:[%s607 + $0x28] sm:$0xff] %v2781
        %2958 = vst [vmem:[%s607 + $0x30] sm:$0xff] %v2786
        %2959 = vst [vmem:[%s607 + $0x38] sm:$0xff] %v2789
        %2960 = vst [vmem:[%s607 + $0x40] sm:$0xff] %v2794
        %2961 = vst [vmem:[%s607 + $0x48] sm:$0xff] %v2797
        %2962 = vst [vmem:[%s607 + $0x50] sm:$0xff] %v2802
        %2963 = vst [vmem:[%s607 + $0x58] sm:$0xff] %v2805
        %2964 = vst [vmem:[%s607 + $0x60] sm:$0xff] %v2810
        %2965 = vst [vmem:[%s607 + $0x68] sm:$0xff] %v2813
        %2966 = vst [vmem:[%s607 + $0x70] sm:$0xff] %v2818
        %2967 = vst [vmem:[%s607 + $0x78] sm:$0xff] %v2821
        %2968 = vst [vmem:[%s607 + $0x80] sm:$0xff] %v2826
        %2969 = vst [vmem:[%s607 + $0x88] sm:$0xff] %v2829
        %2970 = vst [vmem:[%s607 + $0x90] sm:$0xff] %v2834
        %2971 = vst [vmem:[%s607 + $0x98] sm:$0xff] %v2837
        %2972 = vst [vmem:[%s607 + $0xa0] sm:$0xff] %v2842
        %2973 = vst [vmem:[%s607 + $0xa8] sm:$0xff] %v2845
        %2974 = vst [vmem:[%s607 + $0xb0] sm:$0xff] %v2850
        %2975 = vst [vmem:[%s607 + $0xb8] sm:$0xff] %v2853
        %2976 = vst [vmem:[%s607 + $0xc0] sm:$0xff] %v2858
        %2977 = vst [vmem:[%s607 + $0xc8] sm:$0xff] %v2861
        %2978 = vst [vmem:[%s607 + $0xd0] sm:$0xff] %v2866
        %2979 = vst [vmem:[%s607 + $0xd8] sm:$0xff] %v2869
        %2980 = vst [vmem:[%s607 + $0xe0] sm:$0xff] %v2874
        %2981 = vst [vmem:[%s607 + $0xe8] sm:$0xff] %v2877
        %2982 = vst [vmem:[%s607 + $0xf0] sm:$0xff] %v2882
        %2983 = vst [vmem:[%s607 + $0xf8] sm:$0xff] %v2885
        %s2984 = sand.u32 %s305, 1
        %s2985 = scalar_lea.sflag [#allocation4], %s2984
        %s2986 = sand.u32 %s305, 1
        %s2987 = smul.addr %s2986, 256
        %s2988 = scalar_lea.vmem [#allocation19], %s2987
        %s2989 = sand.u32 %s333, 1
        %s2990 = scalar_lea.sflag [#allocation21], %s2989
        %s2991 = sand.u32 %s333, 1
        %s2992 = smul.addr %s2991, 512
        %s2993 = scalar_lea.vmem [#allocation20], %s2992
        // Predicated region
        $region105: #{tpu_custom_call.1} parent=63 // pred_check
          %p2994 = pneg %p315
        $region106: #{tpu_custom_call.1} parent=63 // pred_check_branch
          %2996 = sbr.rel (%p2994) target = $region108
        $region107: #{tpu_custom_call.1} parent=63 // pred_region
          %s2997 = smul.u32 32, %s43
          %s2999 = ssub.s32 4096, 4096
          %3000 = vsyncadd %s2985, %s2999
          %s3001 = smul.addr %s42, 128
          %s3002 = sadd.s32 %s2997, %s3001
          %s3003 = smul.addr %s3002, 128
          %s3004 = scalar_lea.hbm %s11, %s3003
          %s3005 = sshll.u32 %s2988, 4
          %s3006 = int_to_ptr.vmem [resolvable:$true] %s3005
          %3011 = dma.vmem_to_hbm [thread:$0]  %s3006, 4096, %s3004, %s2985, 128, 128, 8
        $region108: #{tpu_custom_call.1} parent=63 // pred_fallthru
          _
        // Predicated region
        $region109: #{tpu_custom_call.1} parent=63 // pred_check
          %p3012 = pneg %p343
        $region110: #{tpu_custom_call.1} parent=63 // pred_check_branch
          %3014 = sbr.rel (%p3012) target = $region112
        $region111: #{tpu_custom_call.1} parent=63 // pred_region
          %s3015 = smul.u32 32, %s43
          %s3017 = ssub.s32 8192, 8192
          %3018 = vsyncadd %s2990, %s3017
          %s3019 = smul.addr %s3015, 2
          %s3020 = smul.addr %s42, 256
          %s3021 = sadd.s32 %s3019, %s3020
          %s3022 = smul.addr %s3021, 128
          %s3023 = scalar_lea.hbm %s12, %s3022
          %s3024 = sshll.u32 %s2993, 4
          %s3025 = int_to_ptr.vmem [resolvable:$true] %s3024
          %3030 = dma.vmem_to_hbm [thread:$0]  %s3025, 8192, %s3023, %s2990, 256, 256, 16
        $region112: #{tpu_custom_call.1} parent=63 // pred_fallthru
          _
      $region64: #{tpu_custom_call.1} parent=5 // pred_fallthru
        _
      %p3031 = scmp.le.s32.totalorder 2, %s33
      // Predicated region
      $region113: #{tpu_custom_call.1} parent=5 // pred_check
        %p3032 = pneg %p3031
      $region114: #{tpu_custom_call.1} parent=5 // pred_check_branch
        %3034 = sbr.rel (%p3032) target = $region116
      $region115: #{tpu_custom_call.1} parent=5 // pred_region
        %s3035 = ssub.s32 %s33, 2
        // Predicated region
        $region117: #{tpu_custom_call.1} parent=115 // pred_check
          %p3036 = pneg %p321
        $region118: #{tpu_custom_call.1} parent=115 // pred_check_branch
          %3038 = sbr.rel (%p3036) target = $region120
        $region119: #{tpu_custom_call.1} parent=115 // pred_region
          %s3039 = sand.u32 %s306, 1
          %s3040 = scalar_lea.sflag [#allocation4], %s3039
          %s3041 = sand.u32 %s306, 1
          %s3042 = smul.addr %s3041, 256
          %s3043 = scalar_lea.vmem [#allocation19], %s3042
          %3044 = dma.done %s3040, 4096
        $region120: #{tpu_custom_call.1} parent=115 // pred_fallthru
          _
        // Predicated region
        $region121: #{tpu_custom_call.1} parent=115 // pred_check
          %p3045 = pneg %p349
        $region122: #{tpu_custom_call.1} parent=115 // pred_check_branch
          %3047 = sbr.rel (%p3045) target = $region124
        $region123: #{tpu_custom_call.1} parent=115 // pred_region
          %s3048 = sand.u32 %s334, 1
          %s3049 = scalar_lea.sflag [#allocation21], %s3048
          %s3050 = sand.u32 %s334, 1
          %s3051 = smul.addr %s3050, 512
          %s3052 = scalar_lea.vmem [#allocation20], %s3051
          %3053 = dma.done %s3049, 8192
        $region124: #{tpu_custom_call.1} parent=115 // pred_fallthru
          _
      $region116: #{tpu_custom_call.1} parent=5 // pred_fallthru
        _
    $region6: #{tpu_custom_call.1} parent=1 // loop_footer
      %s37 = sadd.s32 1, %s33
    $region7: #{tpu_custom_call.1} parent=1 // loop_footer_branch
      %32 = sbr.rel target = $region3
    $region8: #{tpu_custom_call.1} parent=1 // loop_exit
      _
    %3054 = vsyncpa [#allocation3], 1
    %s3055 = scalar_lea.sflag [#allocation3], 1
    %3056 = vsyncpa %s3055, 1
    %3057 = vsyncpa [#allocation6], 1
    %3058 = vsyncpa [#allocation9], 1
    %3059 = vsyncpa [#allocation12], 1
    %3060 = vsyncpa [#allocation15], 1
    %3061 = vsyncpa [#allocation18], 1
    %3062 = vsyncpa [#allocation4], 1
    %s3063 = scalar_lea.sflag [#allocation4], 1
    %3064 = vsyncpa %s3063, 1
    %3065 = vsyncpa [#allocation21], 1
    %s3066 = scalar_lea.sflag [#allocation21], 1
    %3067 = vsyncpa %s3066, 1

</llo_original>
